<compile_context>
chip_gen: v7x
topology: tpu7x:2x2x1
jax: 0.10.0
libtpu: 0.0.40
codegen_flags: <defaults>
</compile_context>

<pallas_src>
import functools
import math

import jax
import jax.numpy as jnp
from jax import lax
from jax.experimental import pallas as pl
from jax.experimental.pallas import tpu as pltpu

LN_EPS = 1e-5        # Python float -> inlined literal inside kernels
NEG_BIAS = -1e9      # Python float -> inlined literal inside kernels


def _round_up(x, m):
    return ((x + m - 1) // m) * m


def _clamp_vmem(est_bytes):
    """Scoped-VMEM request: 2x margin on the block-footprint estimate,
    floor 8 MiB, cap 64 MiB (safe for v7x's 64 MiB physical VMEM)."""
    return int(min(max(2 * est_bytes + (2 << 20), 8 << 20), 64 << 20))


def _layer_norm(y, g, b):
    mean = jnp.mean(y, axis=-1, keepdims=True)
    var = jnp.mean(jnp.square(y - mean), axis=-1, keepdims=True)
    return (y - mean) * lax.rsqrt(var + LN_EPS) * g + b


# ----------------------- unified fused attention block -------------------------
# Handles encoder self-attn (ctx == q_in, causal=False), decoder self-attn
# (ctx == q_in, causal=True) and decoder cross-attn (ctx == encoder_out).

def _attn_block_kernel(q_in_ref, ctx_ref, mask_ref,
                       wq_ref, bq_ref, wkv_ref, bkv_ref, wo_ref, bo_ref,
                       g_ref, beta_ref, o_ref, *, num_heads, causal, q_tile):
    x = q_in_ref[...]                                  # (tq, D) f32 residual rows
    ctx = ctx_ref[...]                                 # (Tk, D) f32 key/value source
    tq, D = x.shape
    Tk = ctx.shape[0]
    H = num_heads
    Dh = D // H

    # Q projection (1/sqrt(Dh) already folded into wq/bq at parameter-prep time).
    q = (jnp.dot(x.astype(jnp.bfloat16), wq_ref[...],
                 preferred_element_type=jnp.float32) + bq_ref[...]
         ).astype(jnp.bfloat16)                        # (tq, D)
    # K/V projection; cast to bf16 once, immediately (halves live K/V bytes).
    kv = (jnp.dot(ctx.astype(jnp.bfloat16), wkv_ref[...],
                  preferred_element_type=jnp.float32) + bkv_ref[...]
          ).astype(jnp.bfloat16)                       # (Tk, 2D)

    qh = q.reshape(tq, H, Dh)
    kh = kv[:, :D].reshape(Tk, H, Dh)
    vh = kv[:, D:].reshape(Tk, H, Dh)

    # Head-batched QK^T: (H, tq, Tk) f32 scores in one batched contraction.
    s = jnp.einsum("qhd,khd->hqk", qh, kh, preferred_element_type=jnp.float32)

    # Additive mask bias built in-kernel (no dense HBM bias tensor).
    pad = mask_ref[...] != 0                           # (1, Tk) bool
    if causal:
        row0 = pl.program_id(1) * q_tile               # global row offset of this q tile
        qi = row0 + lax.broadcasted_iota(jnp.int32, (tq, Tk), 0)
        kj = lax.broadcasted_iota(jnp.int32, (tq, Tk), 1)
        bias = jnp.where(jnp.logical_or(pad, kj > qi), NEG_BIAS, 0.0)   # (tq, Tk)
        s = s + bias[None, :, :]
    else:
        bias = jnp.where(pad, NEG_BIAS, 0.0)           # keep (1, Tk); broadcast in the add
        s = s + bias[None, :, :]

    # Softmax over keys (exact normalization).
    s = s - jnp.max(s, axis=-1, keepdims=True)
    p = jnp.exp(s)
    p = p / jnp.sum(p, axis=-1, keepdims=True)

    # PV, batched over heads, then concat heads and ONE full-depth out-projection.
    o = jnp.einsum("hqk,khd->qhd", p.astype(jnp.bfloat16), vh,
                   preferred_element_type=jnp.float32).reshape(tq, D)
    y = x + jnp.dot(o.astype(jnp.bfloat16), wo_ref[...],
                    preferred_element_type=jnp.float32) + bo_ref[...]

    o_ref[...] = _layer_norm(y, g_ref[...], beta_ref[...]).astype(o_ref.dtype)


def _attn_vmem_bytes(tq, tk, d, h):
    io = 2 * (tq * d + tk * d + tk + tq * d) * 4                 # double-buffered act blocks
    w = 2 * (4 * d * d) * 2 + 2 * (6 * d) * 4                    # weights (bf16) + biases/LN (f32)
    tmp = (tq * d + 2 * tk * d) * 2 + h * tq * tk * 6 + tq * tk * 4 + 2 * tq * d * 4
    return io + w + tmp


def attn_block(q_in, ctx, mask3, p, ln_g, ln_b, *, num_heads, causal, tq_target=256):
    """q_in:(B,T,D) f32, ctx:(B,Tk,D) f32, mask3:(B,1,Tk) int32 -> (B,T,D) f32."""
    B, T, D = q_in.shape
    Tk = ctx.shape[1]
    # Row-tile the query dim; K/V stay full per step (note: K/V projection is
    # recomputed per q-tile — cheap vs. fitting VMEM at long sequences).
    tq = tq_target if T % tq_target == 0 else T
    kernel = functools.partial(_attn_block_kernel, num_heads=num_heads,
                               causal=causal, q_tile=tq)
    wspec = lambda shape: pl.BlockSpec(shape, lambda b, i: (0, 0))  # grid-invariant weights
    vmem = _clamp_vmem(_attn_vmem_bytes(tq, Tk, D, num_heads))
    return pl.pallas_call(
        kernel,
        out_shape=jax.ShapeDtypeStruct((B, T, D), jnp.float32),
        grid=(B, T // tq),
        in_specs=[
            pl.BlockSpec((None, tq, D), lambda b, i: (b, i, 0)),   # query rows
            pl.BlockSpec((None, Tk, D), lambda b, i: (b, 0, 0)),   # full key/value context
            pl.BlockSpec((None, 1, Tk), lambda b, i: (b, 0, 0)),   # pad mask
            wspec((D, D)), wspec((1, D)),                           # wq, bq
            wspec((D, 2 * D)), wspec((1, 2 * D)),                   # wkv, bkv
            wspec((D, D)), wspec((1, D)),                           # wo, bo
            wspec((1, D)), wspec((1, D)),                           # LN gamma, beta
        ],
        out_specs=pl.BlockSpec((None, tq, D), lambda b, i: (b, i, 0)),
        compiler_params=pltpu.CompilerParams(
            dimension_semantics=("parallel", "parallel"),
            vmem_limit_bytes=vmem),
    )(q_in, ctx, mask3, p["wq"], p["bq"], p["wkv"], p["bkv"],
      p["wo"], p["bo"], ln_g, ln_b)


# ------------------------------- fused FFN block -------------------------------

def _ffn_block_kernel(x_ref, w1_ref, b1_ref, w2_ref, b2_ref, g_ref, beta_ref, o_ref):
    """Fused: fc1 + ReLU + fc2 + residual + LayerNorm."""
    x = x_ref[...]                                     # (tm, D) f32
    h = jnp.maximum(jnp.dot(x.astype(jnp.bfloat16), w1_ref[...],
                            preferred_element_type=jnp.float32) + b1_ref[...], 0.0)
    y = jnp.dot(h.astype(jnp.bfloat16), w2_ref[...],
                preferred_element_type=jnp.float32) + b2_ref[...] + x
    o_ref[...] = _layer_norm(y, g_ref[...], beta_ref[...]).astype(o_ref.dtype)


def ffn_block(x, p, *, tm_target=256):
    B, T, D = x.shape
    F = p["fc1_w"].shape[1]
    M = B * T
    x2d = x.reshape(M, D)
    # cdiv grid with a padded edge tile (no fall-back to one giant tile).
    tm = min(tm_target, _round_up(M, 8))
    Mp = _round_up(M, tm)
    if Mp != M:
        x2d = jnp.pad(x2d, ((0, Mp - M), (0, 0)))
    wspec = lambda shape: pl.BlockSpec(shape, lambda i: (0, 0))
    vmem = _clamp_vmem(2 * 2 * tm * D * 4                    # x in + out, double-buffered
                       + 2 * (2 * D * F) * 2                  # fc weights (bf16) x2 buffers
                       + 2 * (F + 3 * D) * 4                  # biases / LN params
                       + tm * F * 6 + tm * D * 8)             # h / y temporaries
    out = pl.pallas_call(
        _ffn_block_kernel,
        out_shape=jax.ShapeDtypeStruct((Mp, D), jnp.float32),
        grid=(Mp // tm,),
        in_specs=[
            pl.BlockSpec((tm, D), lambda i: (i, 0)),
            wspec((D, F)), wspec((1, F)),
            wspec((F, D)), wspec((1, D)),
            wspec((1, D)), wspec((1, D)),
        ],
        out_specs=pl.BlockSpec((tm, D), lambda i: (i, 0)),
        compiler_params=pltpu.CompilerParams(
            dimension_semantics=("parallel",), vmem_limit_bytes=vmem),
    )(x2d, p["fc1_w"], p["fc1_b"], p["fc2_w"], p["fc2_b"],
      p["final_ln_g"], p["final_ln_b"])
    return out[:M].reshape(B, T, D)


# --------------------------- output layer (logits) ----------------------------

def _logits_kernel(x_ref, wt_ref, o_ref):
    # feature @ embed.T, with the embedding pre-transposed to native (K, N) layout.
    o_ref[...] = jnp.dot(x_ref[...].astype(jnp.bfloat16), wt_ref[...],
                         preferred_element_type=jnp.float32).astype(o_ref.dtype)


def output_logits(x2d, embed_t, *, tm_target=256, tn_target=1024):
    """x2d:(M,D) f32, embed_t:(D,V) bf16 -> (M,V) f32 (shared-embedding output layer)."""
    M, D = x2d.shape
    V = embed_t.shape[1]
    tm = min(tm_target, _round_up(M, 8))
    tn = min(tn_target, _round_up(V, 128))              # lane-dense output tiles
    Mp, Vp = _round_up(M, tm), _round_up(V, tn)
    if Mp != M:
        x2d = jnp.pad(x2d, ((0, Mp - M), (0, 0)))
    if Vp != V:
        embed_t = jnp.pad(embed_t, ((0, 0), (0, Vp - V)))
    vmem = _clamp_vmem(2 * (tm * D * 4 + D * tn * 2 + tm * tn * 4) + tm * tn * 4 + tm * D * 2)
    out = pl.pallas_call(
        _logits_kernel,
        out_shape=jax.ShapeDtypeStruct((Mp, Vp), jnp.float32),
        grid=(Mp // tm, Vp // tn),
        in_specs=[
            pl.BlockSpec((tm, D), lambda i, j: (i, 0)),
            pl.BlockSpec((D, tn), lambda i, j: (0, j)),
        ],
        out_specs=pl.BlockSpec((tm, tn), lambda i, j: (i, j)),
        compiler_params=pltpu.CompilerParams(
            dimension_semantics=("parallel", "parallel"), vmem_limit_bytes=vmem),
    )(x2d, embed_t)
    return out[:M, :V]


# --------------------------------- forward ------------------------------------

def transformer_adapter2_forward(params, ASR_output, asr_output, prev_encoder,
                                 *, pad, num_heads):
    """Returns (feature, logits) exactly like TransformerAdapter2.forward (eval mode)."""
    B, S, D = ASR_output.shape
    T = prev_encoder.shape[1]
    embed_scale = math.sqrt(D)

    enc_pad_mask = asr_output == pad                                    # (B, S)
    # asr_length = asr_output.ne(pad).sum(-1): plain jnp reduction; the fairseq encoder
    # re-derives its mask from the tokens, so this value is unused (XLA DCEs it).
    _asr_length = jnp.sum(jnp.logical_not(enc_pad_mask), axis=-1)
    enc_mask3 = enc_pad_mask.astype(jnp.int32)[:, None, :]              # (B, 1, S)

    # ------------------------------ encoder --------------------------------
    x = embed_scale * ASR_output + params["enc_pos"][None, :S, :]
    x = x * (1.0 - enc_pad_mask[..., None].astype(x.dtype))
    for lp in params["enc_layers"]:
        x = attn_block(x, x, enc_mask3, lp["self_attn"],
                       lp["self_attn_ln_g"], lp["self_attn_ln_b"],
                       num_heads=num_heads, causal=False)
        x = ffn_block(x, lp)
    encoder_out = x                                                     # (B, S, D)

    # ------------------------------ decoder --------------------------------
    dec_pad_mask = prev_encoder == pad                                  # (B, T)
    dec_mask3 = dec_pad_mask.astype(jnp.int32)[:, None, :]
    # TODO(synk): token-embedding gather stays in plain JAX (no Pallas gather here).
    y = (embed_scale * params["dec_embed"][prev_encoder]
         + params["dec_pos"][None, :T, :])
    for lp in params["dec_layers"]:
        y = attn_block(y, y, dec_mask3, lp["self_attn"],
                       lp["self_attn_ln_g"], lp["self_attn_ln_b"],
                       num_heads=num_heads, causal=True)
        y = attn_block(y, encoder_out, enc_mask3, lp["enc_attn"],
                       lp["enc_attn_ln_g"], lp["enc_attn_ln_b"],
                       num_heads=num_heads, causal=False)
        y = ffn_block(y, lp)
    feature = y                                                         # (B, T, D)

    logits = output_logits(feature.reshape(B * T, D),
                           params["dec_embed_t"]).reshape(B, T, -1)
    return feature, logits


# ---------------------------- parameter init -----------------------------------

def init_params(key, D, FFN, V, max_pos, num_layers, num_heads, pad):
    keys = iter(jax.random.split(key, 512))
    WDT = jnp.bfloat16                      # MXU-side weight storage (f32 accumulation)
    scale = (D // num_heads) ** -0.5

    def normal(shape):
        return 0.02 * jax.random.normal(next(keys), shape, dtype=jnp.float32)

    def attn_params():
        # 1/sqrt(Dh) query scale folded into the Q projection at parameter-prep time
        # (bq is zero, so its fold is a no-op).
        return {"wq": (normal((D, D)) * scale).astype(WDT),
                "bq": jnp.zeros((1, D), jnp.float32),
                "wkv": normal((D, 2 * D)).astype(WDT),
                "bkv": jnp.zeros((1, 2 * D), jnp.float32),
                "wo": normal((D, D)).astype(WDT),
                "bo": jnp.zeros((1, D), jnp.float32)}

    def layer_params(cross):
        p = {
            "self_attn": attn_params(),
            "self_attn_ln_g": jnp.ones((1, D), jnp.float32),
            "self_attn_ln_b": jnp.zeros((1, D), jnp.float32),
            "fc1_w": normal((D, FFN)).astype(WDT), "fc1_b": jnp.zeros((1, FFN), jnp.float32),
            "fc2_w": normal((FFN, D)).astype(WDT), "fc2_b": jnp.zeros((1, D), jnp.float32),
            "final_ln_g": jnp.ones((1, D), jnp.float32),
            "final_ln_b": jnp.zeros((1, D), jnp.float32),
        }
        if cross:
            p["enc_attn"] = attn_params()
            p["enc_attn_ln_g"] = jnp.ones((1, D), jnp.float32)
            p["enc_attn_ln_b"] = jnp.zeros((1, D), jnp.float32)
        return p

    dec_embed = normal((V, D)).at[pad].set(0.0)              # pad row zeroed
    return {
        "enc_pos": normal((max_pos, D)),
        "dec_pos": normal((max_pos, D)),
        "dec_embed": dec_embed,                              # f32 (V,D): token gather
        "dec_embed_t": dec_embed.T.astype(WDT),              # bf16 (D,V): output layer, native (K,N)
        "enc_layers": [layer_params(cross=False) for _ in range(num_layers)],
        "dec_layers": [layer_params(cross=True) for _ in range(num_layers)],
    }


# ----------------------------------- main ---------------------------------------

if __name__ == "__main__":
    B, S, T = 2, 8, 8
    D, H, FFN_DIM, V = 32, 4, 64, 40
    PAD = 1
    NUM_LAYERS = 1  # TransformerAdapter2(encoder, decoder, pad, layers=1)

    key = jax.random.PRNGKey(0)
    pkey, ekey, tkey1, tkey2 = jax.random.split(key, 4)
    params = init_params(pkey, D, FFN_DIM, V, max_pos=max(S, T),
                         num_layers=NUM_LAYERS, num_heads=H, pad=PAD)

    # ASR_output: upstream ASR encoder states used as token_embeddings (B, S, D).
    ASR_output = jax.random.normal(ekey, (B, S, D), dtype=jnp.float32)
    # asr_output: source token ids with trailing padding (B, S).
    pos = jnp.arange(S)
    lens_src = jnp.array([8, 5], dtype=jnp.int32)
    rand_src = jax.random.randint(tkey1, (B, S), 4, V)
    asr_output = jnp.where(pos[None, :] < lens_src[:, None], rand_src, PAD).astype(jnp.int32)
    # prev_encoder: previous decoder tokens, starts with EOS=2, trailing pad.
    lens_tgt = jnp.array([8, 6], dtype=jnp.int32)
    rand_tgt = jax.random.randint(tkey2, (B, T), 4, V)
    prev_encoder = jnp.where(pos[None, :T] < lens_tgt[:, None], rand_tgt, PAD)
    prev_encoder = prev_encoder.at[:, 0].set(2).astype(jnp.int32)

    fwd = jax.jit(functools.partial(transformer_adapter2_forward, pad=PAD, num_heads=H))
    feature, logits = fwd(params, ASR_output, asr_output, prev_encoder)
    jax.block_until_ready((feature, logits))

    assert feature.shape == (B, T, D)
    assert logits.shape == (B, T, V)
    assert bool(jnp.isfinite(feature).all()) and bool(jnp.isfinite(logits).all())
    print("KERNEL_OK")
</pallas_src>

<mosaic_0001>
module attributes {stable_mosaic.version = 11 : i64} {
  func.func @_attn_block_kernel(%arg0: i32, %arg1: i32, %arg2: memref<1x8x32xf32, #tpu.memory_space<vmem>>, %arg3: memref<1x8x32xf32, #tpu.memory_space<vmem>>, %arg4: memref<1x1x8xi32, #tpu.memory_space<vmem>>, %arg5: memref<32x32xbf16, #tpu.memory_space<vmem>>, %arg6: memref<1x32xf32, #tpu.memory_space<vmem>>, %arg7: memref<32x64xbf16, #tpu.memory_space<vmem>>, %arg8: memref<1x64xf32, #tpu.memory_space<vmem>>, %arg9: memref<32x32xbf16, #tpu.memory_space<vmem>>, %arg10: memref<1x32xf32, #tpu.memory_space<vmem>>, %arg11: memref<1x32xf32, #tpu.memory_space<vmem>>, %arg12: memref<1x32xf32, #tpu.memory_space<vmem>>, %arg13: memref<1x8x32xf32, #tpu.memory_space<vmem>>) attributes {dimension_semantics = [#tpu.dimension_semantics<parallel>, #tpu.dimension_semantics<parallel>], iteration_bounds = array<i64: 2, 1>, scalar_prefetch = 0 : i64, scratch_operands = 0 : i64, tpu.core_type = #tpu.core_type<tc>, window_params = [{transform_indices = @transform_0, window_bounds = array<i64: 1, 8, 32>}, {transform_indices = @transform_1, window_bounds = array<i64: 1, 8, 32>}, {transform_indices = @transform_2, window_bounds = array<i64: 1, 1, 8>}, {pipeline_mode = #tpu.pipeline_mode<synchronous>, transform_indices = @transform_3, window_bounds = array<i64: 32, 32>}, {pipeline_mode = #tpu.pipeline_mode<synchronous>, transform_indices = @transform_4, window_bounds = array<i64: 1, 32>}, {pipeline_mode = #tpu.pipeline_mode<synchronous>, transform_indices = @transform_5, window_bounds = array<i64: 32, 64>}, {pipeline_mode = #tpu.pipeline_mode<synchronous>, transform_indices = @transform_6, window_bounds = array<i64: 1, 64>}, {pipeline_mode = #tpu.pipeline_mode<synchronous>, transform_indices = @transform_7, window_bounds = array<i64: 32, 32>}, {pipeline_mode = #tpu.pipeline_mode<synchronous>, transform_indices = @transform_8, window_bounds = array<i64: 1, 32>}, {pipeline_mode = #tpu.pipeline_mode<synchronous>, transform_indices = @transform_9, window_bounds = array<i64: 1, 32>}, {pipeline_mode = #tpu.pipeline_mode<synchronous>, transform_indices = @transform_10, window_bounds = array<i64: 1, 32>}, {transform_indices = @transform_11, window_bounds = array<i64: 1, 8, 32>}]} {
    %c0 = arith.constant 0 : index
    %c0_0 = arith.constant 0 : index
    %c0_1 = arith.constant 0 : index
    %0 = vector.load %arg2[%c0, %c0_0, %c0_1] : memref<1x8x32xf32, #tpu.memory_space<vmem>>, vector<1x8x32xf32>
    %1 = vector.shape_cast %0 : vector<1x8x32xf32> to vector<8x32xf32>
    %c0_2 = arith.constant 0 : index
    %c0_3 = arith.constant 0 : index
    %c0_4 = arith.constant 0 : index
    %2 = vector.load %arg3[%c0_2, %c0_3, %c0_4] : memref<1x8x32xf32, #tpu.memory_space<vmem>>, vector<1x8x32xf32>
    %3 = vector.shape_cast %2 : vector<1x8x32xf32> to vector<8x32xf32>
    %4 = arith.truncf %1 : vector<8x32xf32> to vector<8x32xbf16>
    %c0_5 = arith.constant 0 : index
    %c0_6 = arith.constant 0 : index
    %5 = vector.load %arg5[%c0_5, %c0_6] : memref<32x32xbf16, #tpu.memory_space<vmem>>, vector<32x32xbf16>
    %cst = arith.constant dense<0.000000e+00> : vector<8x32xf32>
    %6 = tpu.matmul %4, %5, %cst {dimension_numbers = #tpu.dot_dimension_numbers<[1], [0], [0], [1], [0, 0, 1, 1], [], []>} : vector<8x32xbf16>, vector<32x32xbf16>, vector<8x32xf32> -> vector<8x32xf32>
    %c0_7 = arith.constant 0 : index
    %c0_8 = arith.constant 0 : index
    %7 = vector.load %arg6[%c0_7, %c0_8] : memref<1x32xf32, #tpu.memory_space<vmem>>, vector<1x32xf32>
    %8 = vector.broadcast %7 : vector<1x32xf32> to vector<8x32xf32>
    %9 = arith.addf %6, %8 : vector<8x32xf32>
    %10 = arith.truncf %9 : vector<8x32xf32> to vector<8x32xbf16>
    %11 = arith.truncf %3 : vector<8x32xf32> to vector<8x32xbf16>
    %c0_9 = arith.constant 0 : index
    %c0_10 = arith.constant 0 : index
    %12 = vector.load %arg7[%c0_9, %c0_10] : memref<32x64xbf16, #tpu.memory_space<vmem>>, vector<32x64xbf16>
    %cst_11 = arith.constant dense<0.000000e+00> : vector<8x64xf32>
    %13 = tpu.matmul %11, %12, %cst_11 {dimension_numbers = #tpu.dot_dimension_numbers<[1], [0], [0], [1], [0, 0, 1, 1], [], []>} : vector<8x32xbf16>, vector<32x64xbf16>, vector<8x64xf32> -> vector<8x64xf32>
    %c0_12 = arith.constant 0 : index
    %c0_13 = arith.constant 0 : index
    %14 = vector.load %arg8[%c0_12, %c0_13] : memref<1x64xf32, #tpu.memory_space<vmem>>, vector<1x64xf32>
    %15 = vector.broadcast %14 : vector<1x64xf32> to vector<8x64xf32>
    %16 = arith.addf %13, %15 : vector<8x64xf32>
    %17 = arith.truncf %16 : vector<8x64xf32> to vector<8x64xbf16>
    %18 = vector.shape_cast %10 : vector<8x32xbf16> to vector<8x4x8xbf16>
    %19 = vector.extract_strided_slice %17 {offsets = [0, 0], sizes = [8, 32], strides = [1, 1]} : vector<8x64xbf16> to vector<8x32xbf16>
    %20 = vector.shape_cast %19 : vector<8x32xbf16> to vector<8x4x8xbf16>
    %21 = vector.extract_strided_slice %17 {offsets = [0, 32], sizes = [8, 32], strides = [1, 1]} : vector<8x64xbf16> to vector<8x32xbf16>
    %22 = vector.shape_cast %21 : vector<8x32xbf16> to vector<8x4x8xbf16>
    "tpu.trace_start"() <{level = 10 : i32, message = "qhd,khd->hqk"}> : () -> ()
    %cst_14 = arith.constant dense<0.000000e+00> : vector<4x8x8xf32>
    %23 = tpu.matmul %18, %20, %cst_14 {dimension_numbers = #tpu.dot_dimension_numbers<[2], [2], [0], [0], [0, 1, 0, 0, 1, 0], [1], [1]>} : vector<8x4x8xbf16>, vector<8x4x8xbf16>, vector<4x8x8xf32> -> vector<4x8x8xf32>
    "tpu.trace_stop"() : () -> ()
    %c0_15 = arith.constant 0 : index
    %c0_16 = arith.constant 0 : index
    %c0_17 = arith.constant 0 : index
    %24 = vector.load %arg4[%c0_15, %c0_16, %c0_17] : memref<1x1x8xi32, #tpu.memory_space<vmem>>, vector<1x1x8xi32>
    %25 = vector.shape_cast %24 : vector<1x1x8xi32> to vector<1x8xi32>
    %c0_i32 = arith.constant 0 : i32
    %26 = vector.broadcast %c0_i32 : i32 to vector<1x8xi32>
    %27 = arith.cmpi ne, %25, %26 : vector<1x8xi32>
    %cst_18 = arith.constant -1.000000e+09 : f32
    %cst_19 = arith.constant 0.000000e+00 : f32
    %28 = vector.broadcast %cst_18 : f32 to vector<1x8xf32>
    %29 = vector.broadcast %cst_19 : f32 to vector<1x8xf32>
    %30 = arith.select %27, %28, %29 : vector<1x8xi1>, vector<1x8xf32>
    %31 = vector.shape_cast %30 : vector<1x8xf32> to vector<1x1x8xf32>
    %32 = vector.broadcast %31 : vector<1x1x8xf32> to vector<4x8x8xf32>
    %33 = arith.addf %23, %32 : vector<4x8x8xf32>
    %cst_20 = arith.constant dense<0xFF800000> : vector<4x8xf32>
    %34 = vector.multi_reduction <maximumf>, %33, %cst_20 [2] : vector<4x8x8xf32> to vector<4x8xf32>
    %35 = vector.shape_cast %34 : vector<4x8xf32> to vector<4x8x1xf32>
    %36 = vector.broadcast %35 : vector<4x8x1xf32> to vector<4x8x8xf32>
    %37 = arith.subf %33, %36 : vector<4x8x8xf32>
    %38 = math.exp %37 : vector<4x8x8xf32>
    %cst_21 = arith.constant dense<0.000000e+00> : vector<4x8xf32>
    %39 = vector.multi_reduction <add>, %38, %cst_21 [2] : vector<4x8x8xf32> to vector<4x8xf32>
    %40 = vector.shape_cast %39 : vector<4x8xf32> to vector<4x8x1xf32>
    %41 = vector.broadcast %40 : vector<4x8x1xf32> to vector<4x8x8xf32>
    %42 = arith.divf %38, %41 : vector<4x8x8xf32>
    %43 = arith.truncf %42 : vector<4x8x8xf32> to vector<4x8x8xbf16>
    "tpu.trace_start"() <{level = 10 : i32, message = "hqk,khd->qhd"}> : () -> ()
    %cst_22 = arith.constant dense<0.000000e+00> : vector<4x8x8xf32>
    %44 = tpu.matmul %22, %43, %cst_22 {dimension_numbers = #tpu.dot_dimension_numbers<[0], [2], [2], [1], [0, 1, 0, 2, 1, 1], [1], [0]>} : vector<8x4x8xbf16>, vector<4x8x8xbf16>, vector<4x8x8xf32> -> vector<4x8x8xf32>
    %45 = tpu.transpose %44, [2, 0, 1] : vector<4x8x8xf32> -> vector<8x4x8xf32>
    "tpu.trace_stop"() : () -> ()
    %46 = vector.shape_cast %45 : vector<8x4x8xf32> to vector<8x32xf32>
    %47 = arith.truncf %46 : vector<8x32xf32> to vector<8x32xbf16>
    %c0_23 = arith.constant 0 : index
    %c0_24 = arith.constant 0 : index
    %48 = vector.load %arg9[%c0_23, %c0_24] : memref<32x32xbf16, #tpu.memory_space<vmem>>, vector<32x32xbf16>
    %cst_25 = arith.constant dense<0.000000e+00> : vector<8x32xf32>
    %49 = tpu.matmul %47, %48, %cst_25 {dimension_numbers = #tpu.dot_dimension_numbers<[1], [0], [0], [1], [0, 0, 1, 1], [], []>} : vector<8x32xbf16>, vector<32x32xbf16>, vector<8x32xf32> -> vector<8x32xf32>
    %50 = arith.addf %1, %49 : vector<8x32xf32>
    %c0_26 = arith.constant 0 : index
    %c0_27 = arith.constant 0 : index
    %51 = vector.load %arg10[%c0_26, %c0_27] : memref<1x32xf32, #tpu.memory_space<vmem>>, vector<1x32xf32>
    %52 = vector.broadcast %51 : vector<1x32xf32> to vector<8x32xf32>
    %53 = arith.addf %50, %52 : vector<8x32xf32>
    %c0_28 = arith.constant 0 : index
    %c0_29 = arith.constant 0 : index
    %54 = vector.load %arg11[%c0_28, %c0_29] : memref<1x32xf32, #tpu.memory_space<vmem>>, vector<1x32xf32>
    %c0_30 = arith.constant 0 : index
    %c0_31 = arith.constant 0 : index
    %55 = vector.load %arg12[%c0_30, %c0_31] : memref<1x32xf32, #tpu.memory_space<vmem>>, vector<1x32xf32>
    %cst_32 = arith.constant dense<0.000000e+00> : vector<8xf32>
    %56 = vector.multi_reduction <add>, %53, %cst_32 [1] : vector<8x32xf32> to vector<8xf32>
    %57 = vector.shape_cast %56 : vector<8xf32> to vector<8x1xf32>
    %cst_33 = arith.constant 3.200000e+01 : f32
    %58 = vector.broadcast %cst_33 : f32 to vector<8x1xf32>
    %59 = arith.divf %57, %58 : vector<8x1xf32>
    %60 = vector.broadcast %59 : vector<8x1xf32> to vector<8x32xf32>
    %61 = arith.subf %53, %60 : vector<8x32xf32>
    %62 = arith.mulf %61, %61 : vector<8x32xf32>
    %cst_34 = arith.constant dense<0.000000e+00> : vector<8xf32>
    %63 = vector.multi_reduction <add>, %62, %cst_34 [1] : vector<8x32xf32> to vector<8xf32>
    %64 = vector.shape_cast %63 : vector<8xf32> to vector<8x1xf32>
    %cst_35 = arith.constant 3.200000e+01 : f32
    %65 = vector.broadcast %cst_35 : f32 to vector<8x1xf32>
    %66 = arith.divf %64, %65 : vector<8x1xf32>
    %67 = vector.broadcast %59 : vector<8x1xf32> to vector<8x32xf32>
    %68 = arith.subf %53, %67 : vector<8x32xf32>
    %cst_36 = arith.constant 9.99999974E-6 : f32
    %69 = vector.broadcast %cst_36 : f32 to vector<8x1xf32>
    %70 = arith.addf %66, %69 : vector<8x1xf32>
    %71 = math.rsqrt %70 : vector<8x1xf32>
    %72 = vector.broadcast %71 : vector<8x1xf32> to vector<8x32xf32>
    %73 = arith.mulf %68, %72 : vector<8x32xf32>
    %74 = vector.broadcast %54 : vector<1x32xf32> to vector<8x32xf32>
    %75 = arith.mulf %73, %74 : vector<8x32xf32>
    %76 = vector.broadcast %55 : vector<1x32xf32> to vector<8x32xf32>
    %77 = arith.addf %75, %76 : vector<8x32xf32>
    %c0_37 = arith.constant 0 : index
    %c0_38 = arith.constant 0 : index
    %c0_39 = arith.constant 0 : index
    %78 = vector.load %arg13[%c0_37, %c0_38, %c0_39] : memref<1x8x32xf32, #tpu.memory_space<vmem>>, vector<1x8x32xf32>
    %79 = vector.shape_cast %78 : vector<1x8x32xf32> to vector<8x32xf32>
    %80 = vector.shape_cast %77 : vector<8x32xf32> to vector<1x8x32xf32>
    tpu.vector_store %arg13[%c0_37, %c0_38, %c0_39], %80 {strides = array<i32>} : memref<1x8x32xf32, #tpu.memory_space<vmem>>, vector<1x8x32xf32>,
    return
  }
  func.func @transform_0(%arg0: i32, %arg1: i32) -> (i32, i32, i32) {
    %c0_i32 = arith.constant 0 : i32
    %c0_i32_0 = arith.constant 0 : i32
    return %arg0, %arg1, %c0_i32 : i32, i32, i32
  }
  func.func @transform_1(%arg0: i32, %arg1: i32) -> (i32, i32, i32) {
    %c0_i32 = arith.constant 0 : i32
    %c0_i32_0 = arith.constant 0 : i32
    %c0_i32_1 = arith.constant 0 : i32
    return %arg0, %c0_i32, %c0_i32_0 : i32, i32, i32
  }
  func.func @transform_2(%arg0: i32, %arg1: i32) -> (i32, i32, i32) {
    %c0_i32 = arith.constant 0 : i32
    %c0_i32_0 = arith.constant 0 : i32
    %c0_i32_1 = arith.constant 0 : i32
    return %arg0, %c0_i32, %c0_i32_0 : i32, i32, i32
  }
  func.func @transform_3(%arg0: i32, %arg1: i32) -> (i32, i32) {
    %c0_i32 = arith.constant 0 : i32
    %c0_i32_0 = arith.constant 0 : i32
    %c0_i32_1 = arith.constant 0 : i32
    return %c0_i32, %c0_i32_0 : i32, i32
  }
  func.func @transform_4(%arg0: i32, %arg1: i32) -> (i32, i32) {
    %c0_i32 = arith.constant 0 : i32
    %c0_i32_0 = arith.constant 0 : i32
    %c0_i32_1 = arith.constant 0 : i32
    return %c0_i32, %c0_i32_0 : i32, i32
  }
  func.func @transform_5(%arg0: i32, %arg1: i32) -> (i32, i32) {
    %c0_i32 = arith.constant 0 : i32
    %c0_i32_0 = arith.constant 0 : i32
    %c0_i32_1 = arith.constant 0 : i32
    return %c0_i32, %c0_i32_0 : i32, i32
  }
  func.func @transform_6(%arg0: i32, %arg1: i32) -> (i32, i32) {
    %c0_i32 = arith.constant 0 : i32
    %c0_i32_0 = arith.constant 0 : i32
    %c0_i32_1 = arith.constant 0 : i32
    return %c0_i32, %c0_i32_0 : i32, i32
  }
  func.func @transform_7(%arg0: i32, %arg1: i32) -> (i32, i32) {
    %c0_i32 = arith.constant 0 : i32
    %c0_i32_0 = arith.constant 0 : i32
    %c0_i32_1 = arith.constant 0 : i32
    return %c0_i32, %c0_i32_0 : i32, i32
  }
  func.func @transform_8(%arg0: i32, %arg1: i32) -> (i32, i32) {
    %c0_i32 = arith.constant 0 : i32
    %c0_i32_0 = arith.constant 0 : i32
    %c0_i32_1 = arith.constant 0 : i32
    return %c0_i32, %c0_i32_0 : i32, i32
  }
  func.func @transform_9(%arg0: i32, %arg1: i32) -> (i32, i32) {
    %c0_i32 = arith.constant 0 : i32
    %c0_i32_0 = arith.constant 0 : i32
    %c0_i32_1 = arith.constant 0 : i32
    return %c0_i32, %c0_i32_0 : i32, i32
  }
  func.func @transform_10(%arg0: i32, %arg1: i32) -> (i32, i32) {
    %c0_i32 = arith.constant 0 : i32
    %c0_i32_0 = arith.constant 0 : i32
    %c0_i32_1 = arith.constant 0 : i32
    return %c0_i32, %c0_i32_0 : i32, i32
  }
  func.func @transform_11(%arg0: i32, %arg1: i32) -> (i32, i32, i32) {
    %c0_i32 = arith.constant 0 : i32
    %c0_i32_0 = arith.constant 0 : i32
    return %arg0, %arg1, %c0_i32 : i32, i32, i32
  }
}

module attributes {stable_mosaic.version = 11 : i64} {
  func.func @_ffn_block_kernel(%arg0: i32, %arg1: memref<16x32xf32, #tpu.memory_space<vmem>>, %arg2: memref<32x64xbf16, #tpu.memory_space<vmem>>, %arg3: memref<1x64xf32, #tpu.memory_space<vmem>>, %arg4: memref<64x32xbf16, #tpu.memory_space<vmem>>, %arg5: memref<1x32xf32, #tpu.memory_space<vmem>>, %arg6: memref<1x32xf32, #tpu.memory_space<vmem>>, %arg7: memref<1x32xf32, #tpu.memory_space<vmem>>, %arg8: memref<16x32xf32, #tpu.memory_space<vmem>>) attributes {dimension_semantics = [#tpu.dimension_semantics<parallel>], iteration_bounds = array<i64: 1>, scalar_prefetch = 0 : i64, scratch_operands = 0 : i64, tpu.core_type = #tpu.core_type<tc>, window_params = [{transform_indices = @transform_0, window_bounds = array<i64: 16, 32>}, {pipeline_mode = #tpu.pipeline_mode<synchronous>, transform_indices = @transform_1, window_bounds = array<i64: 32, 64>}, {pipeline_mode = #tpu.pipeline_mode<synchronous>, transform_indices = @transform_2, window_bounds = array<i64: 1, 64>}, {pipeline_mode = #tpu.pipeline_mode<synchronous>, transform_indices = @transform_3, window_bounds = array<i64: 64, 32>}, {pipeline_mode = #tpu.pipeline_mode<synchronous>, transform_indices = @transform_4, window_bounds = array<i64: 1, 32>}, {pipeline_mode = #tpu.pipeline_mode<synchronous>, transform_indices = @transform_5, window_bounds = array<i64: 1, 32>}, {pipeline_mode = #tpu.pipeline_mode<synchronous>, transform_indices = @transform_6, window_bounds = array<i64: 1, 32>}, {transform_indices = @transform_7, window_bounds = array<i64: 16, 32>}]} {
    %c0 = arith.constant 0 : index
    %c0_0 = arith.constant 0 : index
    %0 = vector.load %arg1[%c0, %c0_0] : memref<16x32xf32, #tpu.memory_space<vmem>>, vector<16x32xf32>
    %1 = arith.truncf %0 : vector<16x32xf32> to vector<16x32xbf16>
    %c0_1 = arith.constant 0 : index
    %c0_2 = arith.constant 0 : index
    %2 = vector.load %arg2[%c0_1, %c0_2] : memref<32x64xbf16, #tpu.memory_space<vmem>>, vector<32x64xbf16>
    %cst = arith.constant dense<0.000000e+00> : vector<16x64xf32>
    %3 = tpu.matmul %1, %2, %cst {dimension_numbers = #tpu.dot_dimension_numbers<[1], [0], [0], [1], [0, 0, 1, 1], [], []>} : vector<16x32xbf16>, vector<32x64xbf16>, vector<16x64xf32> -> vector<16x64xf32>
    %c0_3 = arith.constant 0 : index
    %c0_4 = arith.constant 0 : index
    %4 = vector.load %arg3[%c0_3, %c0_4] : memref<1x64xf32, #tpu.memory_space<vmem>>, vector<1x64xf32>
    %5 = vector.broadcast %4 : vector<1x64xf32> to vector<16x64xf32>
    %6 = arith.addf %3, %5 : vector<16x64xf32>
    %cst_5 = arith.constant 0.000000e+00 : f32
    %7 = vector.broadcast %cst_5 : f32 to vector<16x64xf32>
    %8 = arith.maximumf %6, %7 : vector<16x64xf32>
    %9 = arith.truncf %8 : vector<16x64xf32> to vector<16x64xbf16>
    %c0_6 = arith.constant 0 : index
    %c0_7 = arith.constant 0 : index
    %10 = vector.load %arg4[%c0_6, %c0_7] : memref<64x32xbf16, #tpu.memory_space<vmem>>, vector<64x32xbf16>
    %cst_8 = arith.constant dense<0.000000e+00> : vector<16x32xf32>
    %11 = tpu.matmul %9, %10, %cst_8 {dimension_numbers = #tpu.dot_dimension_numbers<[1], [0], [0], [1], [0, 0, 1, 1], [], []>} : vector<16x64xbf16>, vector<64x32xbf16>, vector<16x32xf32> -> vector<16x32xf32>
    %c0_9 = arith.constant 0 : index
    %c0_10 = arith.constant 0 : index
    %12 = vector.load %arg5[%c0_9, %c0_10] : memref<1x32xf32, #tpu.memory_space<vmem>>, vector<1x32xf32>
    %13 = vector.broadcast %12 : vector<1x32xf32> to vector<16x32xf32>
    %14 = arith.addf %11, %13 : vector<16x32xf32>
    %15 = arith.addf %14, %0 : vector<16x32xf32>
    %c0_11 = arith.constant 0 : index
    %c0_12 = arith.constant 0 : index
    %16 = vector.load %arg6[%c0_11, %c0_12] : memref<1x32xf32, #tpu.memory_space<vmem>>, vector<1x32xf32>
    %c0_13 = arith.constant 0 : index
    %c0_14 = arith.constant 0 : index
    %17 = vector.load %arg7[%c0_13, %c0_14] : memref<1x32xf32, #tpu.memory_space<vmem>>, vector<1x32xf32>
    %cst_15 = arith.constant dense<0.000000e+00> : vector<16xf32>
    %18 = vector.multi_reduction <add>, %15, %cst_15 [1] : vector<16x32xf32> to vector<16xf32>
    %19 = vector.shape_cast %18 : vector<16xf32> to vector<16x1xf32>
    %cst_16 = arith.constant 3.200000e+01 : f32
    %20 = vector.broadcast %cst_16 : f32 to vector<16x1xf32>
    %21 = arith.divf %19, %20 : vector<16x1xf32>
    %22 = vector.broadcast %21 : vector<16x1xf32> to vector<16x32xf32>
    %23 = arith.subf %15, %22 : vector<16x32xf32>
    %24 = arith.mulf %23, %23 : vector<16x32xf32>
    %cst_17 = arith.constant dense<0.000000e+00> : vector<16xf32>
    %25 = vector.multi_reduction <add>, %24, %cst_17 [1] : vector<16x32xf32> to vector<16xf32>
    %26 = vector.shape_cast %25 : vector<16xf32> to vector<16x1xf32>
    %cst_18 = arith.constant 3.200000e+01 : f32
    %27 = vector.broadcast %cst_18 : f32 to vector<16x1xf32>
    %28 = arith.divf %26, %27 : vector<16x1xf32>
    %29 = vector.broadcast %21 : vector<16x1xf32> to vector<16x32xf32>
    %30 = arith.subf %15, %29 : vector<16x32xf32>
    %cst_19 = arith.constant 9.99999974E-6 : f32
    %31 = vector.broadcast %cst_19 : f32 to vector<16x1xf32>
    %32 = arith.addf %28, %31 : vector<16x1xf32>
    %33 = math.rsqrt %32 : vector<16x1xf32>
    %34 = vector.broadcast %33 : vector<16x1xf32> to vector<16x32xf32>
    %35 = arith.mulf %30, %34 : vector<16x32xf32>
    %36 = vector.broadcast %16 : vector<1x32xf32> to vector<16x32xf32>
    %37 = arith.mulf %35, %36 : vector<16x32xf32>
    %38 = vector.broadcast %17 : vector<1x32xf32> to vector<16x32xf32>
    %39 = arith.addf %37, %38 : vector<16x32xf32>
    %c0_20 = arith.constant 0 : index
    %c0_21 = arith.constant 0 : index
    %40 = vector.load %arg8[%c0_20, %c0_21] : memref<16x32xf32, #tpu.memory_space<vmem>>, vector<16x32xf32>
    tpu.vector_store %arg8[%c0_20, %c0_21], %39 {strides = array<i32>} : memref<16x32xf32, #tpu.memory_space<vmem>>, vector<16x32xf32>,
    return
  }
  func.func @transform_0(%arg0: i32) -> (i32, i32) {
    %c0_i32 = arith.constant 0 : i32
    %c0_i32_0 = arith.constant 0 : i32
    return %arg0, %c0_i32 : i32, i32
  }
  func.func @transform_1(%arg0: i32) -> (i32, i32) {
    %c0_i32 = arith.constant 0 : i32
    %c0_i32_0 = arith.constant 0 : i32
    %c0_i32_1 = arith.constant 0 : i32
    return %c0_i32, %c0_i32_0 : i32, i32
  }
  func.func @transform_2(%arg0: i32) -> (i32, i32) {
    %c0_i32 = arith.constant 0 : i32
    %c0_i32_0 = arith.constant 0 : i32
    %c0_i32_1 = arith.constant 0 : i32
    return %c0_i32, %c0_i32_0 : i32, i32
  }
  func.func @transform_3(%arg0: i32) -> (i32, i32) {
    %c0_i32 = arith.constant 0 : i32
    %c0_i32_0 = arith.constant 0 : i32
    %c0_i32_1 = arith.constant 0 : i32
    return %c0_i32, %c0_i32_0 : i32, i32
  }
  func.func @transform_4(%arg0: i32) -> (i32, i32) {
    %c0_i32 = arith.constant 0 : i32
    %c0_i32_0 = arith.constant 0 : i32
    %c0_i32_1 = arith.constant 0 : i32
    return %c0_i32, %c0_i32_0 : i32, i32
  }
  func.func @transform_5(%arg0: i32) -> (i32, i32) {
    %c0_i32 = arith.constant 0 : i32
    %c0_i32_0 = arith.constant 0 : i32
    %c0_i32_1 = arith.constant 0 : i32
    return %c0_i32, %c0_i32_0 : i32, i32
  }
  func.func @transform_6(%arg0: i32) -> (i32, i32) {
    %c0_i32 = arith.constant 0 : i32
    %c0_i32_0 = arith.constant 0 : i32
    %c0_i32_1 = arith.constant 0 : i32
    return %c0_i32, %c0_i32_0 : i32, i32
  }
  func.func @transform_7(%arg0: i32) -> (i32, i32) {
    %c0_i32 = arith.constant 0 : i32
    %c0_i32_0 = arith.constant 0 : i32
    return %arg0, %c0_i32 : i32, i32
  }
}

module attributes {stable_mosaic.version = 11 : i64} {
  func.func @_logits_kernel(%arg0: i32, %arg1: i32, %arg2: memref<16x32xf32, #tpu.memory_space<vmem>>, %arg3: memref<32x128xbf16, #tpu.memory_space<vmem>>, %arg4: memref<16x128xf32, #tpu.memory_space<vmem>>) attributes {dimension_semantics = [#tpu.dimension_semantics<parallel>, #tpu.dimension_semantics<parallel>], iteration_bounds = array<i64: 1, 1>, scalar_prefetch = 0 : i64, scratch_operands = 0 : i64, tpu.core_type = #tpu.core_type<tc>, window_params = [{transform_indices = @transform_0, window_bounds = array<i64: 16, 32>}, {transform_indices = @transform_1, window_bounds = array<i64: 32, 128>}, {transform_indices = @transform_2, window_bounds = array<i64: 16, 128>}]} {
    %c0 = arith.constant 0 : index
    %c0_0 = arith.constant 0 : index
    %0 = vector.load %arg2[%c0, %c0_0] : memref<16x32xf32, #tpu.memory_space<vmem>>, vector<16x32xf32>
    %1 = arith.truncf %0 : vector<16x32xf32> to vector<16x32xbf16>
    %c0_1 = arith.constant 0 : index
    %c0_2 = arith.constant 0 : index
    %2 = vector.load %arg3[%c0_1, %c0_2] : memref<32x128xbf16, #tpu.memory_space<vmem>>, vector<32x128xbf16>
    %cst = arith.constant dense<0.000000e+00> : vector<16x128xf32>
    %3 = tpu.matmul %1, %2, %cst {dimension_numbers = #tpu.dot_dimension_numbers<[1], [0], [0], [1], [0, 0, 1, 1], [], []>} : vector<16x32xbf16>, vector<32x128xbf16>, vector<16x128xf32> -> vector<16x128xf32>
    %c0_3 = arith.constant 0 : index
    %c0_4 = arith.constant 0 : index
    %4 = vector.load %arg4[%c0_3, %c0_4] : memref<16x128xf32, #tpu.memory_space<vmem>>, vector<16x128xf32>
    tpu.vector_store %arg4[%c0_3, %c0_4], %3 {strides = array<i32>} : memref<16x128xf32, #tpu.memory_space<vmem>>, vector<16x128xf32>,
    return
  }
  func.func @transform_0(%arg0: i32, %arg1: i32) -> (i32, i32) {
    %c0_i32 = arith.constant 0 : i32
    %c0_i32_0 = arith.constant 0 : i32
    return %arg0, %c0_i32 : i32, i32
  }
  func.func @transform_1(%arg0: i32, %arg1: i32) -> (i32, i32) {
    %c0_i32 = arith.constant 0 : i32
    %c0_i32_0 = arith.constant 0 : i32
    return %c0_i32, %arg1 : i32, i32
  }
  func.func @transform_2(%arg0: i32, %arg1: i32) -> (i32, i32) {
    %c0_i32 = arith.constant 0 : i32
    return %arg0, %arg1 : i32, i32
  }
}

module attributes {stable_mosaic.version = 11 : i64} {
  func.func @_attn_block_kernel(%arg0: i32, %arg1: i32, %arg2: memref<1x8x32xf32, #tpu.memory_space<vmem>>, %arg3: memref<1x8x32xf32, #tpu.memory_space<vmem>>, %arg4: memref<1x1x8xi32, #tpu.memory_space<vmem>>, %arg5: memref<32x32xbf16, #tpu.memory_space<vmem>>, %arg6: memref<1x32xf32, #tpu.memory_space<vmem>>, %arg7: memref<32x64xbf16, #tpu.memory_space<vmem>>, %arg8: memref<1x64xf32, #tpu.memory_space<vmem>>, %arg9: memref<32x32xbf16, #tpu.memory_space<vmem>>, %arg10: memref<1x32xf32, #tpu.memory_space<vmem>>, %arg11: memref<1x32xf32, #tpu.memory_space<vmem>>, %arg12: memref<1x32xf32, #tpu.memory_space<vmem>>, %arg13: memref<1x8x32xf32, #tpu.memory_space<vmem>>) attributes {dimension_semantics = [#tpu.dimension_semantics<parallel>, #tpu.dimension_semantics<parallel>], iteration_bounds = array<i64: 2, 1>, scalar_prefetch = 0 : i64, scratch_operands = 0 : i64, tpu.core_type = #tpu.core_type<tc>, window_params = [{transform_indices = @transform_0, window_bounds = array<i64: 1, 8, 32>}, {transform_indices = @transform_1, window_bounds = array<i64: 1, 8, 32>}, {transform_indices = @transform_2, window_bounds = array<i64: 1, 1, 8>}, {pipeline_mode = #tpu.pipeline_mode<synchronous>, transform_indices = @transform_3, window_bounds = array<i64: 32, 32>}, {pipeline_mode = #tpu.pipeline_mode<synchronous>, transform_indices = @transform_4, window_bounds = array<i64: 1, 32>}, {pipeline_mode = #tpu.pipeline_mode<synchronous>, transform_indices = @transform_5, window_bounds = array<i64: 32, 64>}, {pipeline_mode = #tpu.pipeline_mode<synchronous>, transform_indices = @transform_6, window_bounds = array<i64: 1, 64>}, {pipeline_mode = #tpu.pipeline_mode<synchronous>, transform_indices = @transform_7, window_bounds = array<i64: 32, 32>}, {pipeline_mode = #tpu.pipeline_mode<synchronous>, transform_indices = @transform_8, window_bounds = array<i64: 1, 32>}, {pipeline_mode = #tpu.pipeline_mode<synchronous>, transform_indices = @transform_9, window_bounds = array<i64: 1, 32>}, {pipeline_mode = #tpu.pipeline_mode<synchronous>, transform_indices = @transform_10, window_bounds = array<i64: 1, 32>}, {transform_indices = @transform_11, window_bounds = array<i64: 1, 8, 32>}]} {
    %c0 = arith.constant 0 : index
    %c0_0 = arith.constant 0 : index
    %c0_1 = arith.constant 0 : index
    %0 = vector.load %arg2[%c0, %c0_0, %c0_1] : memref<1x8x32xf32, #tpu.memory_space<vmem>>, vector<1x8x32xf32>
    %1 = vector.shape_cast %0 : vector<1x8x32xf32> to vector<8x32xf32>
    %c0_2 = arith.constant 0 : index
    %c0_3 = arith.constant 0 : index
    %c0_4 = arith.constant 0 : index
    %2 = vector.load %arg3[%c0_2, %c0_3, %c0_4] : memref<1x8x32xf32, #tpu.memory_space<vmem>>, vector<1x8x32xf32>
    %3 = vector.shape_cast %2 : vector<1x8x32xf32> to vector<8x32xf32>
    %4 = arith.truncf %1 : vector<8x32xf32> to vector<8x32xbf16>
    %c0_5 = arith.constant 0 : index
    %c0_6 = arith.constant 0 : index
    %5 = vector.load %arg5[%c0_5, %c0_6] : memref<32x32xbf16, #tpu.memory_space<vmem>>, vector<32x32xbf16>
    %cst = arith.constant dense<0.000000e+00> : vector<8x32xf32>
    %6 = tpu.matmul %4, %5, %cst {dimension_numbers = #tpu.dot_dimension_numbers<[1], [0], [0], [1], [0, 0, 1, 1], [], []>} : vector<8x32xbf16>, vector<32x32xbf16>, vector<8x32xf32> -> vector<8x32xf32>
    %c0_7 = arith.constant 0 : index
    %c0_8 = arith.constant 0 : index
    %7 = vector.load %arg6[%c0_7, %c0_8] : memref<1x32xf32, #tpu.memory_space<vmem>>, vector<1x32xf32>
    %8 = vector.broadcast %7 : vector<1x32xf32> to vector<8x32xf32>
    %9 = arith.addf %6, %8 : vector<8x32xf32>
    %10 = arith.truncf %9 : vector<8x32xf32> to vector<8x32xbf16>
    %11 = arith.truncf %3 : vector<8x32xf32> to vector<8x32xbf16>
    %c0_9 = arith.constant 0 : index
    %c0_10 = arith.constant 0 : index
    %12 = vector.load %arg7[%c0_9, %c0_10] : memref<32x64xbf16, #tpu.memory_space<vmem>>, vector<32x64xbf16>
    %cst_11 = arith.constant dense<0.000000e+00> : vector<8x64xf32>
    %13 = tpu.matmul %11, %12, %cst_11 {dimension_numbers = #tpu.dot_dimension_numbers<[1], [0], [0], [1], [0, 0, 1, 1], [], []>} : vector<8x32xbf16>, vector<32x64xbf16>, vector<8x64xf32> -> vector<8x64xf32>
    %c0_12 = arith.constant 0 : index
    %c0_13 = arith.constant 0 : index
    %14 = vector.load %arg8[%c0_12, %c0_13] : memref<1x64xf32, #tpu.memory_space<vmem>>, vector<1x64xf32>
    %15 = vector.broadcast %14 : vector<1x64xf32> to vector<8x64xf32>
    %16 = arith.addf %13, %15 : vector<8x64xf32>
    %17 = arith.truncf %16 : vector<8x64xf32> to vector<8x64xbf16>
    %18 = vector.shape_cast %10 : vector<8x32xbf16> to vector<8x4x8xbf16>
    %19 = vector.extract_strided_slice %17 {offsets = [0, 0], sizes = [8, 32], strides = [1, 1]} : vector<8x64xbf16> to vector<8x32xbf16>
    %20 = vector.shape_cast %19 : vector<8x32xbf16> to vector<8x4x8xbf16>
    %21 = vector.extract_strided_slice %17 {offsets = [0, 32], sizes = [8, 32], strides = [1, 1]} : vector<8x64xbf16> to vector<8x32xbf16>
    %22 = vector.shape_cast %21 : vector<8x32xbf16> to vector<8x4x8xbf16>
    "tpu.trace_start"() <{level = 10 : i32, message = "qhd,khd->hqk"}> : () -> ()
    %cst_14 = arith.constant dense<0.000000e+00> : vector<4x8x8xf32>
    %23 = tpu.matmul %18, %20, %cst_14 {dimension_numbers = #tpu.dot_dimension_numbers<[2], [2], [0], [0], [0, 1, 0, 0, 1, 0], [1], [1]>} : vector<8x4x8xbf16>, vector<8x4x8xbf16>, vector<4x8x8xf32> -> vector<4x8x8xf32>
    "tpu.trace_stop"() : () -> ()
    %c0_15 = arith.constant 0 : index
    %c0_16 = arith.constant 0 : index
    %c0_17 = arith.constant 0 : index
    %24 = vector.load %arg4[%c0_15, %c0_16, %c0_17] : memref<1x1x8xi32, #tpu.memory_space<vmem>>, vector<1x1x8xi32>
    %25 = vector.shape_cast %24 : vector<1x1x8xi32> to vector<1x8xi32>
    %c0_i32 = arith.constant 0 : i32
    %26 = vector.broadcast %c0_i32 : i32 to vector<1x8xi32>
    %27 = arith.cmpi ne, %25, %26 : vector<1x8xi32>
    %c8_i32 = arith.constant 8 : i32
    %28 = arith.muli %arg1, %c8_i32 : i32
    %29 = tpu.iota {dimensions = array<i32: 0>} : vector<8x8xi32>
    %30 = vector.broadcast %28 : i32 to vector<8x8xi32>
    %31 = arith.addi %30, %29 : vector<8x8xi32>
    %32 = tpu.iota {dimensions = array<i32: 1>} : vector<8x8xi32>
    %33 = arith.cmpi sgt, %32, %31 : vector<8x8xi32>
    %34 = vector.broadcast %27 : vector<1x8xi1> to vector<8x8xi1>
    %35 = arith.ori %34, %33 : vector<8x8xi1>
    %cst_18 = arith.constant -1.000000e+09 : f32
    %cst_19 = arith.constant 0.000000e+00 : f32
    %36 = vector.broadcast %cst_18 : f32 to vector<8x8xf32>
    %37 = vector.broadcast %cst_19 : f32 to vector<8x8xf32>
    %38 = arith.select %35, %36, %37 : vector<8x8xi1>, vector<8x8xf32>
    %39 = vector.shape_cast %38 : vector<8x8xf32> to vector<1x8x8xf32>
    %40 = vector.broadcast %39 : vector<1x8x8xf32> to vector<4x8x8xf32>
    %41 = arith.addf %23, %40 : vector<4x8x8xf32>
    %cst_20 = arith.constant dense<0xFF800000> : vector<4x8xf32>
    %42 = vector.multi_reduction <maximumf>, %41, %cst_20 [2] : vector<4x8x8xf32> to vector<4x8xf32>
    %43 = vector.shape_cast %42 : vector<4x8xf32> to vector<4x8x1xf32>
    %44 = vector.broadcast %43 : vector<4x8x1xf32> to vector<4x8x8xf32>
    %45 = arith.subf %41, %44 : vector<4x8x8xf32>
    %46 = math.exp %45 : vector<4x8x8xf32>
    %cst_21 = arith.constant dense<0.000000e+00> : vector<4x8xf32>
    %47 = vector.multi_reduction <add>, %46, %cst_21 [2] : vector<4x8x8xf32> to vector<4x8xf32>
    %48 = vector.shape_cast %47 : vector<4x8xf32> to vector<4x8x1xf32>
    %49 = vector.broadcast %48 : vector<4x8x1xf32> to vector<4x8x8xf32>
    %50 = arith.divf %46, %49 : vector<4x8x8xf32>
    %51 = arith.truncf %50 : vector<4x8x8xf32> to vector<4x8x8xbf16>
    "tpu.trace_start"() <{level = 10 : i32, message = "hqk,khd->qhd"}> : () -> ()
    %cst_22 = arith.constant dense<0.000000e+00> : vector<4x8x8xf32>
    %52 = tpu.matmul %22, %51, %cst_22 {dimension_numbers = #tpu.dot_dimension_numbers<[0], [2], [2], [1], [0, 1, 0, 2, 1, 1], [1], [0]>} : vector<8x4x8xbf16>, vector<4x8x8xbf16>, vector<4x8x8xf32> -> vector<4x8x8xf32>
    %53 = tpu.transpose %52, [2, 0, 1] : vector<4x8x8xf32> -> vector<8x4x8xf32>
    "tpu.trace_stop"() : () -> ()
    %54 = vector.shape_cast %53 : vector<8x4x8xf32> to vector<8x32xf32>
    %55 = arith.truncf %54 : vector<8x32xf32> to vector<8x32xbf16>
    %c0_23 = arith.constant 0 : index
    %c0_24 = arith.constant 0 : index
    %56 = vector.load %arg9[%c0_23, %c0_24] : memref<32x32xbf16, #tpu.memory_space<vmem>>, vector<32x32xbf16>
    %cst_25 = arith.constant dense<0.000000e+00> : vector<8x32xf32>
    %57 = tpu.matmul %55, %56, %cst_25 {dimension_numbers = #tpu.dot_dimension_numbers<[1], [0], [0], [1], [0, 0, 1, 1], [], []>} : vector<8x32xbf16>, vector<32x32xbf16>, vector<8x32xf32> -> vector<8x32xf32>
    %58 = arith.addf %1, %57 : vector<8x32xf32>
    %c0_26 = arith.constant 0 : index
    %c0_27 = arith.constant 0 : index
    %59 = vector.load %arg10[%c0_26, %c0_27] : memref<1x32xf32, #tpu.memory_space<vmem>>, vector<1x32xf32>
    %60 = vector.broadcast %59 : vector<1x32xf32> to vector<8x32xf32>
    %61 = arith.addf %58, %60 : vector<8x32xf32>
    %c0_28 = arith.constant 0 : index
    %c0_29 = arith.constant 0 : index
    %62 = vector.load %arg11[%c0_28, %c0_29] : memref<1x32xf32, #tpu.memory_space<vmem>>, vector<1x32xf32>
    %c0_30 = arith.constant 0 : index
    %c0_31 = arith.constant 0 : index
    %63 = vector.load %arg12[%c0_30, %c0_31] : memref<1x32xf32, #tpu.memory_space<vmem>>, vector<1x32xf32>
    %cst_32 = arith.constant dense<0.000000e+00> : vector<8xf32>
    %64 = vector.multi_reduction <add>, %61, %cst_32 [1] : vector<8x32xf32> to vector<8xf32>
    %65 = vector.shape_cast %64 : vector<8xf32> to vector<8x1xf32>
    %cst_33 = arith.constant 3.200000e+01 : f32
    %66 = vector.broadcast %cst_33 : f32 to vector<8x1xf32>
    %67 = arith.divf %65, %66 : vector<8x1xf32>
    %68 = vector.broadcast %67 : vector<8x1xf32> to vector<8x32xf32>
    %69 = arith.subf %61, %68 : vector<8x32xf32>
    %70 = arith.mulf %69, %69 : vector<8x32xf32>
    %cst_34 = arith.constant dense<0.000000e+00> : vector<8xf32>
    %71 = vector.multi_reduction <add>, %70, %cst_34 [1] : vector<8x32xf32> to vector<8xf32>
    %72 = vector.shape_cast %71 : vector<8xf32> to vector<8x1xf32>
    %cst_35 = arith.constant 3.200000e+01 : f32
    %73 = vector.broadcast %cst_35 : f32 to vector<8x1xf32>
    %74 = arith.divf %72, %73 : vector<8x1xf32>
    %75 = vector.broadcast %67 : vector<8x1xf32> to vector<8x32xf32>
    %76 = arith.subf %61, %75 : vector<8x32xf32>
    %cst_36 = arith.constant 9.99999974E-6 : f32
    %77 = vector.broadcast %cst_36 : f32 to vector<8x1xf32>
    %78 = arith.addf %74, %77 : vector<8x1xf32>
    %79 = math.rsqrt %78 : vector<8x1xf32>
    %80 = vector.broadcast %79 : vector<8x1xf32> to vector<8x32xf32>
    %81 = arith.mulf %76, %80 : vector<8x32xf32>
    %82 = vector.broadcast %62 : vector<1x32xf32> to vector<8x32xf32>
    %83 = arith.mulf %81, %82 : vector<8x32xf32>
    %84 = vector.broadcast %63 : vector<1x32xf32> to vector<8x32xf32>
    %85 = arith.addf %83, %84 : vector<8x32xf32>
    %c0_37 = arith.constant 0 : index
    %c0_38 = arith.constant 0 : index
    %c0_39 = arith.constant 0 : index
    %86 = vector.load %arg13[%c0_37, %c0_38, %c0_39] : memref<1x8x32xf32, #tpu.memory_space<vmem>>, vector<1x8x32xf32>
    %87 = vector.shape_cast %86 : vector<1x8x32xf32> to vector<8x32xf32>
    %88 = vector.shape_cast %85 : vector<8x32xf32> to vector<1x8x32xf32>
    tpu.vector_store %arg13[%c0_37, %c0_38, %c0_39], %88 {strides = array<i32>} : memref<1x8x32xf32, #tpu.memory_space<vmem>>, vector<1x8x32xf32>,
    return
  }
  func.func @transform_0(%arg0: i32, %arg1: i32) -> (i32, i32, i32) {
    %c0_i32 = arith.constant 0 : i32
    %c0_i32_0 = arith.constant 0 : i32
    return %arg0, %arg1, %c0_i32 : i32, i32, i32
  }
  func.func @transform_1(%arg0: i32, %arg1: i32) -> (i32, i32, i32) {
    %c0_i32 = arith.constant 0 : i32
    %c0_i32_0 = arith.constant 0 : i32
    %c0_i32_1 = arith.constant 0 : i32
    return %arg0, %c0_i32, %c0_i32_0 : i32, i32, i32
  }
  func.func @transform_2(%arg0: i32, %arg1: i32) -> (i32, i32, i32) {
    %c0_i32 = arith.constant 0 : i32
    %c0_i32_0 = arith.constant 0 : i32
    %c0_i32_1 = arith.constant 0 : i32
    return %arg0, %c0_i32, %c0_i32_0 : i32, i32, i32
  }
  func.func @transform_3(%arg0: i32, %arg1: i32) -> (i32, i32) {
    %c0_i32 = arith.constant 0 : i32
    %c0_i32_0 = arith.constant 0 : i32
    %c0_i32_1 = arith.constant 0 : i32
    return %c0_i32, %c0_i32_0 : i32, i32
  }
  func.func @transform_4(%arg0: i32, %arg1: i32) -> (i32, i32) {
    %c0_i32 = arith.constant 0 : i32
    %c0_i32_0 = arith.constant 0 : i32
    %c0_i32_1 = arith.constant 0 : i32
    return %c0_i32, %c0_i32_0 : i32, i32
  }
  func.func @transform_5(%arg0: i32, %arg1: i32) -> (i32, i32) {
    %c0_i32 = arith.constant 0 : i32
    %c0_i32_0 = arith.constant 0 : i32
    %c0_i32_1 = arith.constant 0 : i32
    return %c0_i32, %c0_i32_0 : i32, i32
  }
  func.func @transform_6(%arg0: i32, %arg1: i32) -> (i32, i32) {
    %c0_i32 = arith.constant 0 : i32
    %c0_i32_0 = arith.constant 0 : i32
    %c0_i32_1 = arith.constant 0 : i32
    return %c0_i32, %c0_i32_0 : i32, i32
  }
  func.func @transform_7(%arg0: i32, %arg1: i32) -> (i32, i32) {
    %c0_i32 = arith.constant 0 : i32
    %c0_i32_0 = arith.constant 0 : i32
    %c0_i32_1 = arith.constant 0 : i32
    return %c0_i32, %c0_i32_0 : i32, i32
  }
  func.func @transform_8(%arg0: i32, %arg1: i32) -> (i32, i32) {
    %c0_i32 = arith.constant 0 : i32
    %c0_i32_0 = arith.constant 0 : i32
    %c0_i32_1 = arith.constant 0 : i32
    return %c0_i32, %c0_i32_0 : i32, i32
  }
  func.func @transform_9(%arg0: i32, %arg1: i32) -> (i32, i32) {
    %c0_i32 = arith.constant 0 : i32
    %c0_i32_0 = arith.constant 0 : i32
    %c0_i32_1 = arith.constant 0 : i32
    return %c0_i32, %c0_i32_0 : i32, i32
  }
  func.func @transform_10(%arg0: i32, %arg1: i32) -> (i32, i32) {
    %c0_i32 = arith.constant 0 : i32
    %c0_i32_0 = arith.constant 0 : i32
    %c0_i32_1 = arith.constant 0 : i32
    return %c0_i32, %c0_i32_0 : i32, i32
  }
  func.func @transform_11(%arg0: i32, %arg1: i32) -> (i32, i32, i32) {
    %c0_i32 = arith.constant 0 : i32
    %c0_i32_0 = arith.constant 0 : i32
    return %arg0, %arg1, %c0_i32 : i32, i32, i32
  }
}

</mosaic_0001>

<llo_original>
// kernel: transformer_adapter2_forward.11
$region0: #{transformer_adapter2_forward.11}
  #allocation0 [shape = 'u32[]', space=smem, size = 0x4, offset = 0x4, fixed_abs, tag = 'smem constant byte address 0x4 - core index']
  #allocation1 [shape = 'u32[144,128]{1,0:T(1,128)}', space=vmem, size = 0x12000, scoped, tag = 'internal scratch']
  %s0 = inlined_call_operand.vmem [shape: f32[16,32], index: 0, kind: input, shape index: {}]
  %s1 = inlined_call_operand.vmem [shape: bf16[32,128], index: 1, kind: input, shape index: {}]
  %s2 = inlined_call_operand.vmem [shape: f32[16,128], index: 2, kind: output, shape index: {}]
  %s3 = sld [smem:[#allocation0]]
  $region18: #{transformer_adapter2_forward.11} parent=0
    _
  %s5 = ssub.s32 1, %s3
  %s6 = scalar_select 0, %s5, %s3
  // Predicated region
  $region2: #{transformer_adapter2_forward.11} parent=0 // pred_check
    _
  $region3: #{transformer_adapter2_forward.11} parent=0 // pred_check_branch
    %8 = sbr.rel (0) target = $region5
  $region4: #{transformer_adapter2_forward.11} parent=0 // pred_region
    _
  $region5: #{transformer_adapter2_forward.11} parent=0 // pred_fallthru
    _
  // Predicated region
  $region6: #{transformer_adapter2_forward.11} parent=0 // pred_check
    _
  $region7: #{transformer_adapter2_forward.11} parent=0 // pred_check_branch
    %10 = sbr.rel (0) target = $region9
  $region8: #{transformer_adapter2_forward.11} parent=0 // pred_region
    _
  $region9: #{transformer_adapter2_forward.11} parent=0 // pred_fallthru
    _
  %v12 = vld [vmem:[%s0] sm:$0xff]
  %v13 = vld [vmem:[%s0 + $0x8] sm:$0xff]
  %v14 = vpack.c.bf16 %v13, %v12
  %v15 = vld [vmem:[%s1] sm:$0xf]
  %v16 = vld [vmem:[%s1 + $0x4] sm:$0xf]
  %v17 = vld [vmem:[%s1 + $0x8] sm:$0xf]
  %v18 = vld [vmem:[%s1 + $0xc] sm:$0xf]
  %v23 = vunpack.c.l.b16 %v15
  %v24 = vunpack.c.l.b16 %v16
  %v25 = vunpack.c.l.b16 %v17
  %v26 = vunpack.c.l.b16 %v18
  %v27 = vpack.c.b16 %v24, %v23
  %v28 = vpack.c.b16 %v26, %v25
  %vm31 = vcmask 261120
  %v33 = vsel %vm31, %v14, 0
  %35 = vmatprep.subr.bf16.mxu0 0
  %36 = vmatpush1.bf16.msra.mxu0 %v27
  %37 = vmatprep.subr.bf16.mxu0 0
  %38 = vmatpush1.bf16.msra.mxu0 %v28
  %39 = vmatprep.subr.bf16.mxu0 0
  %40 = vmatpush1.bf16.msra.mxu0 0
  %41 = vmatprep.subr.bf16.mxu0 0
  %42 = vmatpush1.bf16.msra.mxu0 0
  %43 = vmatprep.subr.bf16.mxu0 0
  %44 = vmatpush1.bf16.msra.mxu0 0
  %45 = vmatprep.subr.bf16.mxu0 0
  %46 = vmatpush1.bf16.msra.mxu0 0
  %47 = vmatprep.subr.bf16.mxu0 0
  %48 = vmatpush1.bf16.msra.mxu0 0
  %49 = vmatprep.subr.bf16.mxu0 0
  %50 = vmatpush1.bf16.msra.mxu0 0
  %51 = vmatprep.subr.bf16.mxu0 0
  %52 = vmatpush1.bf16.msra.mxu0 0
  %53 = vmatprep.subr.bf16.mxu0 0
  %54 = vmatpush1.bf16.msra.mxu0 0
  %55 = vmatprep.subr.bf16.mxu0 0
  %56 = vmatpush1.bf16.msra.mxu0 0
  %57 = vmatprep.subr.bf16.mxu0 0
  %58 = vmatpush1.bf16.msra.mxu0 0
  %59 = vmatprep.subr.bf16.mxu0 0
  %60 = vmatpush1.bf16.msra.mxu0 0
  %61 = vmatprep.subr.bf16.mxu0 0
  %62 = vmatpush1.bf16.msra.mxu0 0
  %63 = vmatprep.subr.bf16.mxu0 0
  %64 = vmatpush1.bf16.msra.mxu0 0
  %65 = vmatprep.subr.bf16.mxu0 0
  %66 = vmatpush1.bf16.msra.mxu0 0
  %67 = vmatprep.mubr.bf16.mxu0 0
  %68 = vmatmul.mubr.bf16.gmra.mrb[0].mxu0 %v33
  %v69 = vpop.f32.mrb[0].mxu0
  %v70 = vadd.f32 0.0, %v69
  %v71 = vpop.f32.mrb[0].mxu0
  %v72 = vpop.f32.mrb[0].mxu0
  %v73 = vadd.f32 0.0, %v72
  %v74 = vpop.f32.mrb[0].mxu0
  %75 = vdwg.mxu0
  %76 = vst [vmem:[%s2] sm:$0xff] %v70
  %77 = vst [vmem:[%s2 + $0x8] sm:$0xff] %v73
  // Predicated region
  $region10: #{transformer_adapter2_forward.11} parent=0 // pred_check
    _
  $region11: #{transformer_adapter2_forward.11} parent=0 // pred_check_branch
    %79 = sbr.rel (0) target = $region13
  $region12: #{transformer_adapter2_forward.11} parent=0 // pred_region
    _
  $region13: #{transformer_adapter2_forward.11} parent=0 // pred_fallthru
    _
  // Predicated region
  $region14: #{transformer_adapter2_forward.11} parent=0 // pred_check
    _
  $region15: #{transformer_adapter2_forward.11} parent=0 // pred_check_branch
    %81 = sbr.rel (0) target = $region17
  $region16: #{transformer_adapter2_forward.11} parent=0 // pred_region
    _
  $region17: #{transformer_adapter2_forward.11} parent=0 // pred_fallthru
    _

// kernel: transformer_adapter2_forward.7
$region0: #{transformer_adapter2_forward.7}
  #allocation0 [shape = 'u32[]', space=smem, size = 0x4, offset = 0x4, fixed_abs, tag = 'smem constant byte address 0x4 - core index']
  #allocation1 [shape = 'u32[144,128]{1,0:T(1,128)}', space=vmem, size = 0x12000, scoped, tag = 'internal scratch']
  %s0 = inlined_call_operand.vmem [shape: f32[16,32], index: 0, kind: input, shape index: {}]
  %s1 = inlined_call_operand.vmem [shape: bf16[32,64], index: 1, kind: input, shape index: {}]
  %s2 = inlined_call_operand.vmem [shape: f32[1,64], index: 2, kind: input, shape index: {}]
  %s3 = inlined_call_operand.vmem [shape: bf16[64,32], index: 3, kind: input, shape index: {}]
  %s4 = inlined_call_operand.vmem [shape: f32[1,32], index: 4, kind: input, shape index: {}]
  %s5 = inlined_call_operand.vmem [shape: f32[1,32], index: 5, kind: input, shape index: {}]
  %s6 = inlined_call_operand.vmem [shape: f32[1,32], index: 6, kind: input, shape index: {}]
  %s7 = inlined_call_operand.vmem [shape: f32[16,32], index: 7, kind: output, shape index: {}]
  %s8 = sld [smem:[#allocation0]]
  $region38: #{transformer_adapter2_forward.7} parent=0
    _
  %s10 = ssub.s32 1, %s8
  %s11 = scalar_select 0, %s10, %s8
  // Predicated region
  $region2: #{transformer_adapter2_forward.7} parent=0 // pred_check
    _
  $region3: #{transformer_adapter2_forward.7} parent=0 // pred_check_branch
    %13 = sbr.rel (0) target = $region5
  $region4: #{transformer_adapter2_forward.7} parent=0 // pred_region
    _
  $region5: #{transformer_adapter2_forward.7} parent=0 // pred_fallthru
    _
  // Predicated region
  $region6: #{transformer_adapter2_forward.7} parent=0 // pred_check
    _
  $region7: #{transformer_adapter2_forward.7} parent=0 // pred_check_branch
    %15 = sbr.rel (0) target = $region9
  $region8: #{transformer_adapter2_forward.7} parent=0 // pred_region
    _
  $region9: #{transformer_adapter2_forward.7} parent=0 // pred_fallthru
    _
  // Predicated region
  $region10: #{transformer_adapter2_forward.7} parent=0 // pred_check
    _
  $region11: #{transformer_adapter2_forward.7} parent=0 // pred_check_branch
    %17 = sbr.rel (0) target = $region13
  $region12: #{transformer_adapter2_forward.7} parent=0 // pred_region
    _
  $region13: #{transformer_adapter2_forward.7} parent=0 // pred_fallthru
    _
  // Predicated region
  $region14: #{transformer_adapter2_forward.7} parent=0 // pred_check
    _
  $region15: #{transformer_adapter2_forward.7} parent=0 // pred_check_branch
    %19 = sbr.rel (0) target = $region17
  $region16: #{transformer_adapter2_forward.7} parent=0 // pred_region
    _
  $region17: #{transformer_adapter2_forward.7} parent=0 // pred_fallthru
    _
  // Predicated region
  $region18: #{transformer_adapter2_forward.7} parent=0 // pred_check
    _
  $region19: #{transformer_adapter2_forward.7} parent=0 // pred_check_branch
    %21 = sbr.rel (0) target = $region21
  $region20: #{transformer_adapter2_forward.7} parent=0 // pred_region
    _
  $region21: #{transformer_adapter2_forward.7} parent=0 // pred_fallthru
    _
  // Predicated region
  $region22: #{transformer_adapter2_forward.7} parent=0 // pred_check
    _
  $region23: #{transformer_adapter2_forward.7} parent=0 // pred_check_branch
    %23 = sbr.rel (0) target = $region25
  $region24: #{transformer_adapter2_forward.7} parent=0 // pred_region
    _
  $region25: #{transformer_adapter2_forward.7} parent=0 // pred_fallthru
    _
  // Predicated region
  $region26: #{transformer_adapter2_forward.7} parent=0 // pred_check
    _
  $region27: #{transformer_adapter2_forward.7} parent=0 // pred_check_branch
    %25 = sbr.rel (0) target = $region29
  $region28: #{transformer_adapter2_forward.7} parent=0 // pred_region
    _
  $region29: #{transformer_adapter2_forward.7} parent=0 // pred_fallthru
    _
  %v27 = vld [vmem:[%s0] sm:$0xff]
  %v28 = vld [vmem:[%s0 + $0x8] sm:$0xff]
  %v29 = vpack.c.bf16 %v28, %v27
  %v30 = vld [vmem:[%s1] sm:$0xf]
  %v31 = vld [vmem:[%s1 + $0x4] sm:$0xf]
  %v32 = vld [vmem:[%s1 + $0x8] sm:$0xf]
  %v33 = vld [vmem:[%s1 + $0xc] sm:$0xf]
  %v34 = vld [vmem:[%s2] sm:$0x1]
  %v36 = vlaneseq
  %v37 = vshrl.u32 %v36, 7
  %v38 = vsub.s32 0, %v37
  %v39 = vrot.slane %v34, %v38
  %v45 = vunpack.c.l.b16 %v30
  %v46 = vunpack.c.l.b16 %v31
  %v47 = vunpack.c.l.b16 %v32
  %v48 = vunpack.c.l.b16 %v33
  %v49 = vpack.c.b16 %v46, %v45
  %v50 = vpack.c.b16 %v48, %v47
  %vm53 = vcmask 261120
  %v55 = vsel %vm53, %v29, 0
  %57 = vmatprep.subr.bf16.mxu0 0
  %58 = vmatpush1.bf16.msra.mxu0 %v49
  %59 = vmatprep.subr.bf16.mxu0 0
  %60 = vmatpush1.bf16.msra.mxu0 %v50
  %61 = vmatprep.subr.bf16.mxu0 0
  %62 = vmatpush1.bf16.msra.mxu0 0
  %63 = vmatprep.subr.bf16.mxu0 0
  %64 = vmatpush1.bf16.msra.mxu0 0
  %65 = vmatprep.subr.bf16.mxu0 0
  %66 = vmatpush1.bf16.msra.mxu0 0
  %67 = vmatprep.subr.bf16.mxu0 0
  %68 = vmatpush1.bf16.msra.mxu0 0
  %69 = vmatprep.subr.bf16.mxu0 0
  %70 = vmatpush1.bf16.msra.mxu0 0
  %71 = vmatprep.subr.bf16.mxu0 0
  %72 = vmatpush1.bf16.msra.mxu0 0
  %73 = vmatprep.subr.bf16.mxu0 0
  %74 = vmatpush1.bf16.msra.mxu0 0
  %75 = vmatprep.subr.bf16.mxu0 0
  %76 = vmatpush1.bf16.msra.mxu0 0
  %77 = vmatprep.subr.bf16.mxu0 0
  %78 = vmatpush1.bf16.msra.mxu0 0
  %79 = vmatprep.subr.bf16.mxu0 0
  %80 = vmatpush1.bf16.msra.mxu0 0
  %81 = vmatprep.subr.bf16.mxu0 0
  %82 = vmatpush1.bf16.msra.mxu0 0
  %83 = vmatprep.subr.bf16.mxu0 0
  %84 = vmatpush1.bf16.msra.mxu0 0
  %85 = vmatprep.subr.bf16.mxu0 0
  %86 = vmatpush1.bf16.msra.mxu0 0
  %87 = vmatprep.subr.bf16.mxu0 0
  %88 = vmatpush1.bf16.msra.mxu0 0
  %89 = vmatprep.mubr.bf16.mxu0 0
  %90 = vmatmul.mubr.bf16.gmra.mrb[0].mxu0 %v55
  %v91 = vpop.f32.mrb[0].mxu0
  %v92 = vadd.f32 %v39, %v91
  %v93 = vpop.f32.mrb[0].mxu0
  %v94 = vpop.f32.mrb[0].mxu0
  %v95 = vadd.f32 %v39, %v94
  %v96 = vpop.f32.mrb[0].mxu0
  %97 = vdwg.mxu0
  %v98 = vmax.f32 %v92, 0.0
  %v99 = vmax.f32 %v95, 0.0
  %v100 = vpack.c.bf16 %v99, %v98
  %v101 = vld [vmem:[%s3] sm:$0xf]
  %v102 = vld [vmem:[%s3 + $0x4] sm:$0xf]
  %v103 = vld [vmem:[%s3 + $0x8] sm:$0xf]
  %v104 = vld [vmem:[%s3 + $0xc] sm:$0xf]
  %v105 = vld [vmem:[%s3 + $0x10] sm:$0xf]
  %v106 = vld [vmem:[%s3 + $0x14] sm:$0xf]
  %v107 = vld [vmem:[%s3 + $0x18] sm:$0xf]
  %v108 = vld [vmem:[%s3 + $0x1c] sm:$0xf]
  %v109 = vld [vmem:[%s4] sm:$0x1]
  %v111 = vlaneseq
  %v112 = vshrl.u32 %v111, 7
  %v113 = vsub.s32 0, %v112
  %v114 = vrot.slane %v109, %v113
  %v124 = vunpack.c.l.b16 %v101
  %v125 = vunpack.c.l.b16 %v102
  %v126 = vunpack.c.l.b16 %v103
  %v127 = vunpack.c.l.b16 %v104
  %v128 = vunpack.c.l.b16 %v105
  %v129 = vunpack.c.l.b16 %v106
  %v130 = vunpack.c.l.b16 %v107
  %v131 = vunpack.c.l.b16 %v108
  %v132 = vpack.c.b16 %v125, %v124
  %v133 = vpack.c.b16 %v127, %v126
  %v134 = vpack.c.b16 %v129, %v128
  %v135 = vpack.c.b16 %v131, %v130
  %vm140 = vcmask 523264
  %v142 = vsel %vm140, %v100, 0
  %144 = vmatprep.subr.bf16.mxu0 0
  %145 = vmatpush1.bf16.msra.mxu0 %v132
  %146 = vmatprep.subr.bf16.mxu0 0
  %147 = vmatpush1.bf16.msra.mxu0 %v133
  %148 = vmatprep.subr.bf16.mxu0 0
  %149 = vmatpush1.bf16.msra.mxu0 %v134
  %150 = vmatprep.subr.bf16.mxu0 0
  %151 = vmatpush1.bf16.msra.mxu0 %v135
  %152 = vmatprep.subr.bf16.mxu0 0
  %153 = vmatpush1.bf16.msra.mxu0 0
  %154 = vmatprep.subr.bf16.mxu0 0
  %155 = vmatpush1.bf16.msra.mxu0 0
  %156 = vmatprep.subr.bf16.mxu0 0
  %157 = vmatpush1.bf16.msra.mxu0 0
  %158 = vmatprep.subr.bf16.mxu0 0
  %159 = vmatpush1.bf16.msra.mxu0 0
  %160 = vmatprep.subr.bf16.mxu0 0
  %161 = vmatpush1.bf16.msra.mxu0 0
  %162 = vmatprep.subr.bf16.mxu0 0
  %163 = vmatpush1.bf16.msra.mxu0 0
  %164 = vmatprep.subr.bf16.mxu0 0
  %165 = vmatpush1.bf16.msra.mxu0 0
  %166 = vmatprep.subr.bf16.mxu0 0
  %167 = vmatpush1.bf16.msra.mxu0 0
  %168 = vmatprep.subr.bf16.mxu0 0
  %169 = vmatpush1.bf16.msra.mxu0 0
  %170 = vmatprep.subr.bf16.mxu0 0
  %171 = vmatpush1.bf16.msra.mxu0 0
  %172 = vmatprep.subr.bf16.mxu0 0
  %173 = vmatpush1.bf16.msra.mxu0 0
  %174 = vmatprep.subr.bf16.mxu0 0
  %175 = vmatpush1.bf16.msra.mxu0 0
  %176 = vmatprep.mubr.bf16.mxu0 0
  %177 = vmatmul.mubr.bf16.gmra.mrb[0].mxu0 %v142
  %v178 = vpop.f32.mrb[0].mxu0
  %v179 = vadd.f32 %v114, %v178
  %v180 = vpop.f32.mrb[0].mxu0
  %v181 = vpop.f32.mrb[0].mxu0
  %v182 = vadd.f32 %v114, %v181
  %v183 = vpop.f32.mrb[0].mxu0
  %184 = vdwg.mxu0
  %v185 = vadd.f32 %v179, %v27
  %v186 = vadd.f32 %v182, %v28
  %v187 = vld [vmem:[%s5] sm:$0x1]
  %v188 = vld [vmem:[%s6] sm:$0x1]
  %v189 = vsel %vm53, %v185, 0.0
  %190 = vadd.xlane.f32.xlu0 %v189
  %v191 = vpop.xlane.xlu0 %190
  %v192 = vsel %vm53, %v186, 0.0
  %193 = vadd.xlane.f32.xlu0 %v192
  %v194 = vpop.xlane.xlu0 %193
  %v195 = vrcp.pop 32.0
  %v196 = vmul.f32 %v191, %v195
  %v197 = vmul.f32 %v194, %v195
  %v198 = vsub.f32 %v185, %v196
  %v199 = vsub.f32 %v186, %v197
  %v200 = vmul.f32 %v198, %v198
  %v201 = vmul.f32 %v199, %v199
  %v202 = vsel %vm53, %v200, 0.0
  %203 = vadd.xlane.f32.xlu0 %v202
  %v204 = vpop.xlane.xlu0 %203
  %v205 = vsel %vm53, %v201, 0.0
  %206 = vadd.xlane.f32.xlu0 %v205
  %v207 = vpop.xlane.xlu0 %206
  %v208 = vmul.f32 %v204, %v195
  %v209 = vmul.f32 %v207, %v195
  %v210 = vadd.f32 %v208, 1e-05
  %v211 = vadd.f32 %v209, 1e-05
  %v212 = vrsqrt.pop %v210
  %v213 = vrsqrt.pop %v211
  %v214 = vmul.f32 %v198, %v212
  %v215 = vmul.f32 %v199, %v213
  %v217 = vlaneseq
  %v218 = vshrl.u32 %v217, 7
  %v219 = vsub.s32 0, %v218
  %v220 = vrot.slane %v187, %v219
  %v222 = vmul.f32 %v214, %v220
  %v223 = vmul.f32 %v215, %v220
  %v225 = vlaneseq
  %v226 = vshrl.u32 %v225, 7
  %v227 = vsub.s32 0, %v226
  %v228 = vrot.slane %v188, %v227
  %v230 = vadd.f32 %v222, %v228
  %v231 = vadd.f32 %v223, %v228
  %232 = vst.msk [vmem:[%s7] sm:$0xff] %vm53, %v230
  %233 = vst.msk [vmem:[%s7 + $0x8] sm:$0xff] %vm53, %v231
  // Predicated region
  $region30: #{transformer_adapter2_forward.7} parent=0 // pred_check
    _
  $region31: #{transformer_adapter2_forward.7} parent=0 // pred_check_branch
    %235 = sbr.rel (0) target = $region33
  $region32: #{transformer_adapter2_forward.7} parent=0 // pred_region
    _
  $region33: #{transformer_adapter2_forward.7} parent=0 // pred_fallthru
    _
  // Predicated region
  $region34: #{transformer_adapter2_forward.7} parent=0 // pred_check
    _
  $region35: #{transformer_adapter2_forward.7} parent=0 // pred_check_branch
    %237 = sbr.rel (0) target = $region37
  $region36: #{transformer_adapter2_forward.7} parent=0 // pred_region
    _
  $region37: #{transformer_adapter2_forward.7} parent=0 // pred_fallthru
    _

// kernel: transformer_adapter2_forward.6
$region0: #{transformer_adapter2_forward.6}
  #allocation0 [shape = 'u32[]', space=smem, size = 0x4, offset = 0x4, fixed_abs, tag = 'smem constant byte address 0x4 - core index']
  #allocation1 [shape = 'u32[144,128]{1,0:T(1,128)}', space=vmem, size = 0x12000, scoped, tag = 'internal scratch']
  %s0 = inlined_call_operand.vmem [shape: f32[2,8,32], index: 0, kind: input, shape index: {}, may-alias: {0,1}]
  %s1 = inlined_call_operand.vmem [shape: f32[2,8,32], index: 1, kind: input, shape index: {}, may-alias: {0,1}]
  %s2 = inlined_call_operand.vmem [shape: s32[2,1,8], index: 2, kind: input, shape index: {}]
  %s3 = inlined_call_operand.vmem [shape: bf16[32,32], index: 3, kind: input, shape index: {}]
  %s4 = inlined_call_operand.vmem [shape: f32[1,32], index: 4, kind: input, shape index: {}]
  %s5 = inlined_call_operand.vmem [shape: bf16[32,64], index: 5, kind: input, shape index: {}]
  %s6 = inlined_call_operand.vmem [shape: f32[1,64], index: 6, kind: input, shape index: {}]
  %s7 = inlined_call_operand.vmem [shape: bf16[32,32], index: 7, kind: input, shape index: {}]
  %s8 = inlined_call_operand.vmem [shape: f32[1,32], index: 8, kind: input, shape index: {}]
  %s9 = inlined_call_operand.vmem [shape: f32[1,32], index: 9, kind: input, shape index: {}]
  %s10 = inlined_call_operand.vmem [shape: f32[1,32], index: 10, kind: input, shape index: {}]
  %s11 = inlined_call_operand.vmem [shape: f32[2,8,32], index: 11, kind: output, shape index: {}]
  %s12 = sld [smem:[#allocation0]]
  $region77: #{transformer_adapter2_forward.6} parent=0
    _
  %s14 = ssub.s32 1, %s12
  %s15 = scalar_select 0, %s14, %s12
  loop: start=0, step=1, limit=4
  $region2: #{transformer_adapter2_forward.6} parent=0 // loop_pre_header
    _
  $region3: #{transformer_adapter2_forward.6} parent=0 // loop_header
    %s17 = sphi 0, %s21
    %p18 = scmp.ge.s32.totalorder %s17, 4
    %s24 = sphi 0, %s36
    %s25 = sphi 0, %s32
    %s26 = sphi 0, %s24
    %s27 = sphi 0, %s25
    %s28 = sphi 0, %s26
    %s29 = sphi 0, %s27
    %s41 = sphi 0, %s43
    %s44 = sphi 0, %s41
    %s45 = sphi 0, %s44
    %s61 = sphi 0, %s45
    %s67 = sphi 0, %s69
    %s70 = sphi 0, %s67
    %s71 = sphi 0, %s70
    %s87 = sphi 0, %s71
    %s93 = sphi 0, %s95
    %s96 = sphi 0, %s93
    %s97 = sphi 0, %s96
    %s113 = sphi 0, %s97
    %s117 = sphi 0, %s117
    %s119 = sphi 0, %s117
    %s120 = sphi 0, %s119
    %s134 = sphi 0, %s120
    %s138 = sphi 0, %s138
    %s140 = sphi 0, %s138
    %s141 = sphi 0, %s140
    %s155 = sphi 0, %s141
    %s159 = sphi 0, %s159
    %s161 = sphi 0, %s159
    %s162 = sphi 0, %s161
    %s176 = sphi 0, %s162
    %s180 = sphi 0, %s180
    %s182 = sphi 0, %s180
    %s183 = sphi 0, %s182
    %s197 = sphi 0, %s183
    %s201 = sphi 0, %s201
    %s203 = sphi 0, %s201
    %s204 = sphi 0, %s203
    %s218 = sphi 0, %s204
    %s222 = sphi 0, %s222
    %s224 = sphi 0, %s222
    %s225 = sphi 0, %s224
    %s239 = sphi 0, %s225
    %s243 = sphi 0, %s243
    %s245 = sphi 0, %s243
    %s246 = sphi 0, %s245
    %s260 = sphi 0, %s246
    %s264 = sphi 0, %s264
    %s266 = sphi 0, %s264
    %s267 = sphi 0, %s266
    %s281 = sphi 0, %s267
    %s289 = sphi 0, %s291
    %s292 = sphi 0, %s289
    %s293 = sphi 0, %s292
    %s309 = sphi 0, %s293
  $region4: #{transformer_adapter2_forward.6} parent=0 // loop_header_branch
    %20 = sbr.rel (%p18) target = $region8
  $region5: #{transformer_adapter2_forward.6} parent=0 // loop_body
    %s22 = ssub.s32 %s17, 1
    %s23 = ssub.s32 %s17, 2
    %s30 = sadd.s32 1, %s25
    %p31 = scmp.ge.s32.totalorder %s30, 1
    %s32 = scalar_select %p31, 0, %s30
    %s33 = sadd.s32 1, %s24
    %s34 = scalar_select %p31, %s33, %s24
    %p35 = scmp.ge.s32.totalorder %s34, 2
    %s36 = scalar_select %p35, 0, %s34
    %s37 = ssub.s32 %s24, %s36
    %s38 = ssub.s32 %s25, %s32
    %s39 = sor.u32 %s37, %s38
    %p40 = scmp.eq.s32.totalorder %s39, 0
    %s42 = sadd.s32 %s41, 1
    %s43 = scalar_select %p40, %s41, %s42
    %p46 = pneg %p40
    %p47 = scmp.eq.s32.totalorder %s17, 1
    %p48 = por %p46, %p47
    %p49 = scmp.ne.s32.totalorder %s41, %s44
    %p50 = scmp.eq.s32.totalorder %s17, 0
    %p51 = por %p49, %p50
    %p52 = scmp.ne.s32.totalorder %s41, %s44
    %p53 = scmp.eq.s32.totalorder %s22, 1
    %p54 = por %p52, %p53
    %p55 = scmp.ne.s32.totalorder %s44, %s45
    %p56 = scmp.eq.s32.totalorder %s22, 0
    %p57 = por %p55, %p56
    %p58 = scmp.ne.s32.totalorder %s44, %s45
    %p59 = scmp.eq.s32.totalorder %s23, 1
    %p60 = por %p58, %p59
    %p62 = scmp.ne.s32.totalorder %s45, %s61
    %p63 = scmp.eq.s32.totalorder %s23, 0
    %p64 = por %p62, %p63
    %s65 = ssub.s32 %s24, %s36
    %p66 = scmp.eq.s32.totalorder %s65, 0
    %s68 = sadd.s32 %s67, 1
    %s69 = scalar_select %p66, %s67, %s68
    %p72 = pneg %p66
    %p73 = scmp.eq.s32.totalorder %s17, 1
    %p74 = por %p72, %p73
    %p75 = scmp.ne.s32.totalorder %s67, %s70
    %p76 = scmp.eq.s32.totalorder %s17, 0
    %p77 = por %p75, %p76
    %p78 = scmp.ne.s32.totalorder %s67, %s70
    %p79 = scmp.eq.s32.totalorder %s22, 1
    %p80 = por %p78, %p79
    %p81 = scmp.ne.s32.totalorder %s70, %s71
    %p82 = scmp.eq.s32.totalorder %s22, 0
    %p83 = por %p81, %p82
    %p84 = scmp.ne.s32.totalorder %s70, %s71
    %p85 = scmp.eq.s32.totalorder %s23, 1
    %p86 = por %p84, %p85
    %p88 = scmp.ne.s32.totalorder %s71, %s87
    %p89 = scmp.eq.s32.totalorder %s23, 0
    %p90 = por %p88, %p89
    %s91 = ssub.s32 %s24, %s36
    %p92 = scmp.eq.s32.totalorder %s91, 0
    %s94 = sadd.s32 %s93, 1
    %s95 = scalar_select %p92, %s93, %s94
    %p98 = pneg %p92
    %p99 = scmp.eq.s32.totalorder %s17, 1
    %p100 = por %p98, %p99
    %p101 = scmp.ne.s32.totalorder %s93, %s96
    %p102 = scmp.eq.s32.totalorder %s17, 0
    %p103 = por %p101, %p102
    %p104 = scmp.ne.s32.totalorder %s93, %s96
    %p105 = scmp.eq.s32.totalorder %s22, 1
    %p106 = por %p104, %p105
    %p107 = scmp.ne.s32.totalorder %s96, %s97
    %p108 = scmp.eq.s32.totalorder %s22, 0
    %p109 = por %p107, %p108
    %p110 = scmp.ne.s32.totalorder %s96, %s97
    %p111 = scmp.eq.s32.totalorder %s23, 1
    %p112 = por %p110, %p111
    %p114 = scmp.ne.s32.totalorder %s97, %s113
    %p115 = scmp.eq.s32.totalorder %s23, 0
    %p116 = por %p114, %p115
    %s118 = sadd.s32 %s117, 1
    %p121 = scmp.eq.s32.totalorder %s17, 1
    %p122 = scmp.ne.s32.totalorder %s117, %s119
    %p123 = scmp.eq.s32.totalorder %s17, 0
    %p124 = por %p122, %p123
    %p125 = scmp.ne.s32.totalorder %s117, %s119
    %p126 = scmp.eq.s32.totalorder %s22, 1
    %p127 = por %p125, %p126
    %p128 = scmp.ne.s32.totalorder %s119, %s120
    %p129 = scmp.eq.s32.totalorder %s22, 0
    %p130 = por %p128, %p129
    %p131 = scmp.ne.s32.totalorder %s119, %s120
    %p132 = scmp.eq.s32.totalorder %s23, 1
    %p133 = por %p131, %p132
    %p135 = scmp.ne.s32.totalorder %s120, %s134
    %p136 = scmp.eq.s32.totalorder %s23, 0
    %p137 = por %p135, %p136
    %s139 = sadd.s32 %s138, 1
    %p142 = scmp.eq.s32.totalorder %s17, 1
    %p143 = scmp.ne.s32.totalorder %s138, %s140
    %p144 = scmp.eq.s32.totalorder %s17, 0
    %p145 = por %p143, %p144
    %p146 = scmp.ne.s32.totalorder %s138, %s140
    %p147 = scmp.eq.s32.totalorder %s22, 1
    %p148 = por %p146, %p147
    %p149 = scmp.ne.s32.totalorder %s140, %s141
    %p150 = scmp.eq.s32.totalorder %s22, 0
    %p151 = por %p149, %p150
    %p152 = scmp.ne.s32.totalorder %s140, %s141
    %p153 = scmp.eq.s32.totalorder %s23, 1
    %p154 = por %p152, %p153
    %p156 = scmp.ne.s32.totalorder %s141, %s155
    %p157 = scmp.eq.s32.totalorder %s23, 0
    %p158 = por %p156, %p157
    %s160 = sadd.s32 %s159, 1
    %p163 = scmp.eq.s32.totalorder %s17, 1
    %p164 = scmp.ne.s32.totalorder %s159, %s161
    %p165 = scmp.eq.s32.totalorder %s17, 0
    %p166 = por %p164, %p165
    %p167 = scmp.ne.s32.totalorder %s159, %s161
    %p168 = scmp.eq.s32.totalorder %s22, 1
    %p169 = por %p167, %p168
    %p170 = scmp.ne.s32.totalorder %s161, %s162
    %p171 = scmp.eq.s32.totalorder %s22, 0
    %p172 = por %p170, %p171
    %p173 = scmp.ne.s32.totalorder %s161, %s162
    %p174 = scmp.eq.s32.totalorder %s23, 1
    %p175 = por %p173, %p174
    %p177 = scmp.ne.s32.totalorder %s162, %s176
    %p178 = scmp.eq.s32.totalorder %s23, 0
    %p179 = por %p177, %p178
    %s181 = sadd.s32 %s180, 1
    %p184 = scmp.eq.s32.totalorder %s17, 1
    %p185 = scmp.ne.s32.totalorder %s180, %s182
    %p186 = scmp.eq.s32.totalorder %s17, 0
    %p187 = por %p185, %p186
    %p188 = scmp.ne.s32.totalorder %s180, %s182
    %p189 = scmp.eq.s32.totalorder %s22, 1
    %p190 = por %p188, %p189
    %p191 = scmp.ne.s32.totalorder %s182, %s183
    %p192 = scmp.eq.s32.totalorder %s22, 0
    %p193 = por %p191, %p192
    %p194 = scmp.ne.s32.totalorder %s182, %s183
    %p195 = scmp.eq.s32.totalorder %s23, 1
    %p196 = por %p194, %p195
    %p198 = scmp.ne.s32.totalorder %s183, %s197
    %p199 = scmp.eq.s32.totalorder %s23, 0
    %p200 = por %p198, %p199
    %s202 = sadd.s32 %s201, 1
    %p205 = scmp.eq.s32.totalorder %s17, 1
    %p206 = scmp.ne.s32.totalorder %s201, %s203
    %p207 = scmp.eq.s32.totalorder %s17, 0
    %p208 = por %p206, %p207
    %p209 = scmp.ne.s32.totalorder %s201, %s203
    %p210 = scmp.eq.s32.totalorder %s22, 1
    %p211 = por %p209, %p210
    %p212 = scmp.ne.s32.totalorder %s203, %s204
    %p213 = scmp.eq.s32.totalorder %s22, 0
    %p214 = por %p212, %p213
    %p215 = scmp.ne.s32.totalorder %s203, %s204
    %p216 = scmp.eq.s32.totalorder %s23, 1
    %p217 = por %p215, %p216
    %p219 = scmp.ne.s32.totalorder %s204, %s218
    %p220 = scmp.eq.s32.totalorder %s23, 0
    %p221 = por %p219, %p220
    %s223 = sadd.s32 %s222, 1
    %p226 = scmp.eq.s32.totalorder %s17, 1
    %p227 = scmp.ne.s32.totalorder %s222, %s224
    %p228 = scmp.eq.s32.totalorder %s17, 0
    %p229 = por %p227, %p228
    %p230 = scmp.ne.s32.totalorder %s222, %s224
    %p231 = scmp.eq.s32.totalorder %s22, 1
    %p232 = por %p230, %p231
    %p233 = scmp.ne.s32.totalorder %s224, %s225
    %p234 = scmp.eq.s32.totalorder %s22, 0
    %p235 = por %p233, %p234
    %p236 = scmp.ne.s32.totalorder %s224, %s225
    %p237 = scmp.eq.s32.totalorder %s23, 1
    %p238 = por %p236, %p237
    %p240 = scmp.ne.s32.totalorder %s225, %s239
    %p241 = scmp.eq.s32.totalorder %s23, 0
    %p242 = por %p240, %p241
    %s244 = sadd.s32 %s243, 1
    %p247 = scmp.eq.s32.totalorder %s17, 1
    %p248 = scmp.ne.s32.totalorder %s243, %s245
    %p249 = scmp.eq.s32.totalorder %s17, 0
    %p250 = por %p248, %p249
    %p251 = scmp.ne.s32.totalorder %s243, %s245
    %p252 = scmp.eq.s32.totalorder %s22, 1
    %p253 = por %p251, %p252
    %p254 = scmp.ne.s32.totalorder %s245, %s246
    %p255 = scmp.eq.s32.totalorder %s22, 0
    %p256 = por %p254, %p255
    %p257 = scmp.ne.s32.totalorder %s245, %s246
    %p258 = scmp.eq.s32.totalorder %s23, 1
    %p259 = por %p257, %p258
    %p261 = scmp.ne.s32.totalorder %s246, %s260
    %p262 = scmp.eq.s32.totalorder %s23, 0
    %p263 = por %p261, %p262
    %s265 = sadd.s32 %s264, 1
    %p268 = scmp.eq.s32.totalorder %s17, 1
    %p269 = scmp.ne.s32.totalorder %s264, %s266
    %p270 = scmp.eq.s32.totalorder %s17, 0
    %p271 = por %p269, %p270
    %p272 = scmp.ne.s32.totalorder %s264, %s266
    %p273 = scmp.eq.s32.totalorder %s22, 1
    %p274 = por %p272, %p273
    %p275 = scmp.ne.s32.totalorder %s266, %s267
    %p276 = scmp.eq.s32.totalorder %s22, 0
    %p277 = por %p275, %p276
    %p278 = scmp.ne.s32.totalorder %s266, %s267
    %p279 = scmp.eq.s32.totalorder %s23, 1
    %p280 = por %p278, %p279
    %p282 = scmp.ne.s32.totalorder %s267, %s281
    %p283 = scmp.eq.s32.totalorder %s23, 0
    %p284 = por %p282, %p283
    %s285 = ssub.s32 %s24, %s36
    %s286 = ssub.s32 %s25, %s32
    %s287 = sor.u32 %s285, %s286
    %p288 = scmp.eq.s32.totalorder %s287, 0
    %s290 = sadd.s32 %s289, 1
    %s291 = scalar_select %p288, %s289, %s290
    %p294 = pneg %p288
    %p295 = scmp.eq.s32.totalorder %s17, 1
    %p296 = por %p294, %p295
    %p297 = scmp.ne.s32.totalorder %s289, %s292
    %p298 = scmp.eq.s32.totalorder %s17, 0
    %p299 = por %p297, %p298
    %p300 = scmp.ne.s32.totalorder %s289, %s292
    %p301 = scmp.eq.s32.totalorder %s22, 1
    %p302 = por %p300, %p301
    %p303 = scmp.ne.s32.totalorder %s292, %s293
    %p304 = scmp.eq.s32.totalorder %s22, 0
    %p305 = por %p303, %p304
    %p306 = scmp.ne.s32.totalorder %s292, %s293
    %p307 = scmp.eq.s32.totalorder %s23, 1
    %p308 = por %p306, %p307
    %p310 = scmp.ne.s32.totalorder %s293, %s309
    %p311 = scmp.eq.s32.totalorder %s23, 0
    %p312 = por %p310, %p311
    %p313 = scmp.le.s32.totalorder 1, %s17
    %p314 = scmp.lt.s32.totalorder %s17, 3
    %p315 = pnand %p313, %p314
    %p316 = pneg %p315
    // Predicated region
    $region9: #{transformer_adapter2_forward.6} parent=5 // pred_check
      _
    $region10: #{transformer_adapter2_forward.6} parent=5 // pred_check_branch
      %318 = sbr.rel (%p315) target = $region12
    $region11: #{transformer_adapter2_forward.6} parent=5 // pred_region
      %s319 = ssub.s32 %s17, 1
      // Predicated region
      $region13: #{transformer_adapter2_forward.6} parent=11 // pred_check
        %p320 = pneg %p130
      $region14: #{transformer_adapter2_forward.6} parent=11 // pred_check_branch
        %322 = sbr.rel (%p320) target = $region16
      $region15: #{transformer_adapter2_forward.6} parent=11 // pred_region
        _
      $region16: #{transformer_adapter2_forward.6} parent=11 // pred_fallthru
        _
      // Predicated region
      $region17: #{transformer_adapter2_forward.6} parent=11 // pred_check
        %p323 = pneg %p151
      $region18: #{transformer_adapter2_forward.6} parent=11 // pred_check_branch
        %325 = sbr.rel (%p323) target = $region20
      $region19: #{transformer_adapter2_forward.6} parent=11 // pred_region
        _
      $region20: #{transformer_adapter2_forward.6} parent=11 // pred_fallthru
        _
      // Predicated region
      $region21: #{transformer_adapter2_forward.6} parent=11 // pred_check
        %p326 = pneg %p172
      $region22: #{transformer_adapter2_forward.6} parent=11 // pred_check_branch
        %328 = sbr.rel (%p326) target = $region24
      $region23: #{transformer_adapter2_forward.6} parent=11 // pred_region
        _
      $region24: #{transformer_adapter2_forward.6} parent=11 // pred_fallthru
        _
      // Predicated region
      $region25: #{transformer_adapter2_forward.6} parent=11 // pred_check
        %p329 = pneg %p193
      $region26: #{transformer_adapter2_forward.6} parent=11 // pred_check_branch
        %331 = sbr.rel (%p329) target = $region28
      $region27: #{transformer_adapter2_forward.6} parent=11 // pred_region
        _
      $region28: #{transformer_adapter2_forward.6} parent=11 // pred_fallthru
        _
      // Predicated region
      $region29: #{transformer_adapter2_forward.6} parent=11 // pred_check
        %p332 = pneg %p214
      $region30: #{transformer_adapter2_forward.6} parent=11 // pred_check_branch
        %334 = sbr.rel (%p332) target = $region32
      $region31: #{transformer_adapter2_forward.6} parent=11 // pred_region
        _
      $region32: #{transformer_adapter2_forward.6} parent=11 // pred_fallthru
        _
      // Predicated region
      $region33: #{transformer_adapter2_forward.6} parent=11 // pred_check
        %p335 = pneg %p235
      $region34: #{transformer_adapter2_forward.6} parent=11 // pred_check_branch
        %337 = sbr.rel (%p335) target = $region36
      $region35: #{transformer_adapter2_forward.6} parent=11 // pred_region
        _
      $region36: #{transformer_adapter2_forward.6} parent=11 // pred_fallthru
        _
      // Predicated region
      $region37: #{transformer_adapter2_forward.6} parent=11 // pred_check
        %p338 = pneg %p256
      $region38: #{transformer_adapter2_forward.6} parent=11 // pred_check_branch
        %340 = sbr.rel (%p338) target = $region40
      $region39: #{transformer_adapter2_forward.6} parent=11 // pred_region
        _
      $region40: #{transformer_adapter2_forward.6} parent=11 // pred_fallthru
        _
      // Predicated region
      $region41: #{transformer_adapter2_forward.6} parent=11 // pred_check
        %p341 = pneg %p277
      $region42: #{transformer_adapter2_forward.6} parent=11 // pred_check_branch
        %343 = sbr.rel (%p341) target = $region44
      $region43: #{transformer_adapter2_forward.6} parent=11 // pred_region
        _
      $region44: #{transformer_adapter2_forward.6} parent=11 // pred_fallthru
        _
    $region12: #{transformer_adapter2_forward.6} parent=5 // pred_fallthru
      _
    %p344 = scmp.lt.s32.totalorder %s17, 2
    // Predicated region
    $region45: #{transformer_adapter2_forward.6} parent=5 // pred_check
      %p345 = pneg %p344
    $region46: #{transformer_adapter2_forward.6} parent=5 // pred_check_branch
      %347 = sbr.rel (%p345) target = $region48
    $region47: #{transformer_adapter2_forward.6} parent=5 // pred_region
      // Predicated region
      $region49: #{transformer_adapter2_forward.6} parent=47 // pred_check
        %p348 = pneg %p51
      $region50: #{transformer_adapter2_forward.6} parent=47 // pred_check_branch
        %350 = sbr.rel (%p348) target = $region52
      $region51: #{transformer_adapter2_forward.6} parent=47 // pred_region
        %p351 = scmp.lt.s32.totalorder %s24, 1
        %s352 = scalar_select %p351, %s24, 1
        %p353 = scmp.lt.s32.totalorder %s25, 0
        %s354 = scalar_select %p353, %s25, 0
        %s355 = sadd.s32 %s354, %s352
        %s356 = smul.addr %s355, 8
        %s357 = scalar_lea.vmem %s0, %s356
      $region52: #{transformer_adapter2_forward.6} parent=47 // pred_fallthru
        _
      // Predicated region
      $region53: #{transformer_adapter2_forward.6} parent=47 // pred_check
        %p358 = pneg %p77
      $region54: #{transformer_adapter2_forward.6} parent=47 // pred_check_branch
        %360 = sbr.rel (%p358) target = $region56
      $region55: #{transformer_adapter2_forward.6} parent=47 // pred_region
        %p361 = scmp.lt.s32.totalorder %s24, 1
        %s362 = scalar_select %p361, %s24, 1
        %s363 = smul.addr %s362, 8
        %s364 = scalar_lea.vmem %s1, %s363
      $region56: #{transformer_adapter2_forward.6} parent=47 // pred_fallthru
        _
      // Predicated region
      $region57: #{transformer_adapter2_forward.6} parent=47 // pred_check
        %p365 = pneg %p103
      $region58: #{transformer_adapter2_forward.6} parent=47 // pred_check_branch
        %367 = sbr.rel (%p365) target = $region60
      $region59: #{transformer_adapter2_forward.6} parent=47 // pred_region
        %p368 = scmp.lt.s32.totalorder %s24, 1
        %s369 = scalar_select %p368, %s24, 1
        %s370 = scalar_lea.vmem %s2, %s369
      $region60: #{transformer_adapter2_forward.6} parent=47 // pred_fallthru
        _
    $region48: #{transformer_adapter2_forward.6} parent=5 // pred_fallthru
      _
    %p371 = scmp.le.s32.totalorder 1, %s17
    %p372 = scmp.lt.s32.totalorder %s17, 3
    %p373 = pnand %p371, %p372
    %p374 = pneg %p373
    // Predicated region
    $region61: #{transformer_adapter2_forward.6} parent=5 // pred_check
      _
    $region62: #{transformer_adapter2_forward.6} parent=5 // pred_check_branch
      %376 = sbr.rel (%p373) target = $region64
    $region63: #{transformer_adapter2_forward.6} parent=5 // pred_region
      %s377 = ssub.s32 %s17, 1
      %p378 = scmp.lt.s32.totalorder %s26, 1
      %s379 = scalar_select %p378, %s26, 1
      %p380 = scmp.lt.s32.totalorder %s27, 0
      %s381 = scalar_select %p380, %s27, 0
      %s382 = sadd.s32 %s381, %s379
      %s383 = smul.addr %s382, 8
      %s384 = scalar_lea.vmem %s0, %s383
      %p385 = pneg %p57
      %p386 = pneg %p54
      %p387 = scmp.lt.s32.totalorder %s26, 1
      %s388 = scalar_select %p387, %s26, 1
      %s389 = smul.addr %s388, 8
      %s390 = scalar_lea.vmem %s1, %s389
      %p391 = pneg %p83
      %p392 = pneg %p80
      %p393 = scmp.lt.s32.totalorder %s26, 1
      %s394 = scalar_select %p393, %s26, 1
      %s395 = scalar_lea.vmem %s2, %s394
      %p396 = pneg %p109
      %p397 = pneg %p106
      %p398 = pneg %p130
      %p399 = pneg %p127
      %p400 = pneg %p151
      %p401 = pneg %p148
      %p402 = pneg %p172
      %p403 = pneg %p169
      %p404 = pneg %p193
      %p405 = pneg %p190
      %p406 = pneg %p214
      %p407 = pneg %p211
      %p408 = pneg %p235
      %p409 = pneg %p232
      %p410 = pneg %p256
      %p411 = pneg %p253
      %p412 = pneg %p277
      %p413 = pneg %p274
      %p414 = pneg %p305
      %p415 = pneg %p302
      %p416 = scmp.lt.s32.totalorder %s26, 1
      %s417 = scalar_select %p416, %s26, 1
      %p418 = scmp.lt.s32.totalorder %s27, 0
      %s419 = scalar_select %p418, %s27, 0
      %s420 = sadd.s32 %s419, %s417
      %s421 = smul.addr %s420, 8
      %s422 = scalar_lea.vmem %s11, %s421
      %p423 = scmp.lt.s32.totalorder %s26, 1
      %s424 = scalar_select %p423, %s26, 1
      %p425 = scmp.lt.s32.totalorder %s27, 0
      %s426 = scalar_select %p425, %s27, 0
      %s427 = sadd.s32 %s426, %s424
      %s428 = smul.addr %s427, 8
      %s429 = scalar_lea.vmem %s0, %s428
      %p430 = scmp.lt.s32.totalorder %s26, 1
      %s431 = scalar_select %p430, %s26, 1
      %s432 = smul.addr %s431, 8
      %s433 = scalar_lea.vmem %s1, %s432
      %p434 = scmp.lt.s32.totalorder %s26, 1
      %s435 = scalar_select %p434, %s26, 1
      %s436 = scalar_lea.vmem %s2, %s435
      %p437 = scmp.lt.s32.totalorder %s26, 1
      %s438 = scalar_select %p437, %s26, 1
      %p439 = scmp.lt.s32.totalorder %s27, 0
      %s440 = scalar_select %p439, %s27, 0
      %s441 = sadd.s32 %s440, %s438
      %s442 = smul.addr %s441, 8
      %s443 = scalar_lea.vmem %s11, %s442
      %v445 = vld [vmem:[%s429] sm:$0xff]
      %v446 = vld [vmem:[%s433] sm:$0xff]
      %v447 = vpack.c.bf16 %v445, %v445
      %v448 = vld [vmem:[%s3] sm:$0xf]
      %v449 = vld [vmem:[%s3 + $0x4] sm:$0xf]
      %v450 = vld [vmem:[%s3 + $0x8] sm:$0xf]
      %v451 = vld [vmem:[%s3 + $0xc] sm:$0xf]
      %v452 = vld [vmem:[%s4] sm:$0x1]
      %v454 = vlaneseq
      %v455 = vshrl.u32 %v454, 7
      %v456 = vsub.s32 0, %v455
      %v457 = vrot.slane %v452, %v456
      %v463 = vunpack.c.l.b16 %v448
      %v464 = vunpack.c.l.b16 %v449
      %v465 = vunpack.c.l.b16 %v450
      %v466 = vunpack.c.l.b16 %v451
      %v467 = vpack.c.b16 %v464, %v463
      %v468 = vpack.c.b16 %v466, %v465
      %vm471 = vcmask 261120
      %v473 = vsel %vm471, %v447, 0
      %475 = vmatprep.subr.bf16.mxu0 0
      %476 = vmatpush1.bf16.msra.mxu0 %v467
      %477 = vmatprep.subr.bf16.mxu0 0
      %478 = vmatpush1.bf16.msra.mxu0 %v468
      %479 = vmatprep.subr.bf16.mxu0 0
      %480 = vmatpush1.bf16.msra.mxu0 0
      %481 = vmatprep.subr.bf16.mxu0 0
      %482 = vmatpush1.bf16.msra.mxu0 0
      %483 = vmatprep.subr.bf16.mxu0 0
      %484 = vmatpush1.bf16.msra.mxu0 0
      %485 = vmatprep.subr.bf16.mxu0 0
      %486 = vmatpush1.bf16.msra.mxu0 0
      %487 = vmatprep.subr.bf16.mxu0 0
      %488 = vmatpush1.bf16.msra.mxu0 0
      %489 = vmatprep.subr.bf16.mxu0 0
      %490 = vmatpush1.bf16.msra.mxu0 0
      %491 = vmatprep.subr.bf16.mxu0 0
      %492 = vmatpush1.bf16.msra.mxu0 0
      %493 = vmatprep.subr.bf16.mxu0 0
      %494 = vmatpush1.bf16.msra.mxu0 0
      %495 = vmatprep.subr.bf16.mxu0 0
      %496 = vmatpush1.bf16.msra.mxu0 0
      %497 = vmatprep.subr.bf16.mxu0 0
      %498 = vmatpush1.bf16.msra.mxu0 0
      %499 = vmatprep.subr.bf16.mxu0 0
      %500 = vmatpush1.bf16.msra.mxu0 0
      %501 = vmatprep.subr.bf16.mxu0 0
      %502 = vmatpush1.bf16.msra.mxu0 0
      %503 = vmatprep.subr.bf16.mxu0 0
      %504 = vmatpush1.bf16.msra.mxu0 0
      %505 = vmatprep.subr.bf16.mxu0 0
      %506 = vmatpush1.bf16.msra.mxu0 0
      %507 = vmatprep.mubr.bf16.mxu0 0
      %508 = vmatmul.mubr.bf16.gmra.mrb[0].mxu0 %v473
      %v509 = vpop.f32.mrb[0].mxu0
      %v510 = vadd.f32 %v457, %v509
      %v511 = vpop.f32.mrb[0].mxu0
      %v512 = vpop.f32.mrb[0].mxu0
      %v513 = vpop.f32.mrb[0].mxu0
      %514 = vdwg.mxu0
      %v515 = vpack.c.bf16 %v510, %v510
      %v516 = vpack.c.bf16 %v446, %v446
      %v517 = vld [vmem:[%s5] sm:$0xf]
      %v518 = vld [vmem:[%s5 + $0x4] sm:$0xf]
      %v519 = vld [vmem:[%s5 + $0x8] sm:$0xf]
      %v520 = vld [vmem:[%s5 + $0xc] sm:$0xf]
      %v521 = vld [vmem:[%s6] sm:$0x1]
      %v523 = vlaneseq
      %v524 = vshrl.u32 %v523, 7
      %v525 = vsub.s32 0, %v524
      %v526 = vrot.slane %v521, %v525
      %v532 = vunpack.c.l.b16 %v517
      %v533 = vunpack.c.l.b16 %v518
      %v534 = vunpack.c.l.b16 %v519
      %v535 = vunpack.c.l.b16 %v520
      %v536 = vpack.c.b16 %v533, %v532
      %v537 = vpack.c.b16 %v535, %v534
      %v541 = vsel %vm471, %v516, 0
      %543 = vmatprep.subr.bf16.mxu0 0
      %544 = vmatpush1.bf16.msra.mxu0 %v536
      %545 = vmatprep.subr.bf16.mxu0 0
      %546 = vmatpush1.bf16.msra.mxu0 %v537
      %547 = vmatprep.subr.bf16.mxu0 0
      %548 = vmatpush1.bf16.msra.mxu0 0
      %549 = vmatprep.subr.bf16.mxu0 0
      %550 = vmatpush1.bf16.msra.mxu0 0
      %551 = vmatprep.subr.bf16.mxu0 0
      %552 = vmatpush1.bf16.msra.mxu0 0
      %553 = vmatprep.subr.bf16.mxu0 0
      %554 = vmatpush1.bf16.msra.mxu0 0
      %555 = vmatprep.subr.bf16.mxu0 0
      %556 = vmatpush1.bf16.msra.mxu0 0
      %557 = vmatprep.subr.bf16.mxu0 0
      %558 = vmatpush1.bf16.msra.mxu0 0
      %559 = vmatprep.subr.bf16.mxu0 0
      %560 = vmatpush1.bf16.msra.mxu0 0
      %561 = vmatprep.subr.bf16.mxu0 0
      %562 = vmatpush1.bf16.msra.mxu0 0
      %563 = vmatprep.subr.bf16.mxu0 0
      %564 = vmatpush1.bf16.msra.mxu0 0
      %565 = vmatprep.subr.bf16.mxu0 0
      %566 = vmatpush1.bf16.msra.mxu0 0
      %567 = vmatprep.subr.bf16.mxu0 0
      %568 = vmatpush1.bf16.msra.mxu0 0
      %569 = vmatprep.subr.bf16.mxu0 0
      %570 = vmatpush1.bf16.msra.mxu0 0
      %571 = vmatprep.subr.bf16.mxu0 0
      %572 = vmatpush1.bf16.msra.mxu0 0
      %573 = vmatprep.subr.bf16.mxu0 0
      %574 = vmatpush1.bf16.msra.mxu0 0
      %575 = vmatprep.mubr.bf16.mxu0 0
      %576 = vmatmul.mubr.bf16.gmra.mrb[0].mxu0 %v541
      %v577 = vpop.f32.mrb[0].mxu0
      %v578 = vadd.f32 %v526, %v577
      %v579 = vpop.f32.mrb[0].mxu0
      %v580 = vpop.f32.mrb[0].mxu0
      %v581 = vpop.f32.mrb[0].mxu0
      %582 = vdwg.mxu0
      %v583 = vpack.c.bf16 %v578, %v578
      %585 = vrot.lane.b32.xlu0 %v515, 120
      %v586 = vpop.permute.xlu0 %585
      %587 = vrot.lane.b32.xlu0 %v515, 112
      %v588 = vpop.permute.xlu0 %587
      %589 = vrot.lane.b32.xlu0 %v515, 104
      %v590 = vpop.permute.xlu0 %589
      %592 = vrot.lane.b32.xlu0 %v583, 120
      %v593 = vpop.permute.xlu0 %592
      %595 = vrot.lane.b32.xlu0 %v583, 112
      %v596 = vpop.permute.xlu0 %595
      %598 = vrot.lane.b32.xlu0 %v583, 104
      %v599 = vpop.permute.xlu0 %598
      %v601 = vld [vmem:[%s436] sm:$0x1]
      %vm602 = vcmp.ne.s32.totalorder %v601, 0
      %v603 = vsel %vm602, -1e+09, 0.0
      %v605 = vlaneseq
      %v606 = vshrl.u32 %v605, 7
      %v607 = vsub.s32 0, %v606
      %v608 = vrot.slane %v603, %v607
      %610 = vxpose.xlu0.c.b16.start [1/8] %v583, 128
      %611 = vxpose.xlu0.c.b16.cont [2/8] 0, 128
      %612 = vxpose.xlu0.c.b16.cont [3/8] 0, 128
      %613 = vxpose.xlu0.c.b16.cont [4/8] 0, 128
      %614 = vxpose.xlu0.c.b16.cont [5/8] 0, 128
      %615 = vxpose.xlu0.c.b16.cont [6/8] 0, 128
      %616 = vxpose.xlu0.c.b16.cont [7/8] 0, 128
      %617 = vxpose.xlu0.c.b16.end [8/8] 0, 128
      %v618 = vpop.trf.xlu0
      %v619 = vpop.trf.xlu0
      %v620 = vpop.trf.xlu0
      %v621 = vpop.trf.xlu0
      %v622 = vpop.trf.xlu0
      %v623 = vpop.trf.xlu0
      %v624 = vpop.trf.xlu0
      %v625 = vpop.trf.xlu0
      %626 = vxpose.xlu0.c.b16.start [1/8] %v593, 128
      %627 = vxpose.xlu0.c.b16.cont [2/8] 0, 128
      %628 = vxpose.xlu0.c.b16.cont [3/8] 0, 128
      %629 = vxpose.xlu0.c.b16.cont [4/8] 0, 128
      %630 = vxpose.xlu0.c.b16.cont [5/8] 0, 128
      %631 = vxpose.xlu0.c.b16.cont [6/8] 0, 128
      %632 = vxpose.xlu0.c.b16.cont [7/8] 0, 128
      %633 = vxpose.xlu0.c.b16.end [8/8] 0, 128
      %v634 = vpop.trf.xlu0
      %v635 = vpop.trf.xlu0
      %v636 = vpop.trf.xlu0
      %v637 = vpop.trf.xlu0
      %v638 = vpop.trf.xlu0
      %v639 = vpop.trf.xlu0
      %v640 = vpop.trf.xlu0
      %v641 = vpop.trf.xlu0
      %642 = vxpose.xlu0.c.b16.start [1/8] %v596, 128
      %643 = vxpose.xlu0.c.b16.cont [2/8] 0, 128
      %644 = vxpose.xlu0.c.b16.cont [3/8] 0, 128
      %645 = vxpose.xlu0.c.b16.cont [4/8] 0, 128
      %646 = vxpose.xlu0.c.b16.cont [5/8] 0, 128
      %647 = vxpose.xlu0.c.b16.cont [6/8] 0, 128
      %648 = vxpose.xlu0.c.b16.cont [7/8] 0, 128
      %649 = vxpose.xlu0.c.b16.end [8/8] 0, 128
      %v650 = vpop.trf.xlu0
      %v651 = vpop.trf.xlu0
      %v652 = vpop.trf.xlu0
      %v653 = vpop.trf.xlu0
      %v654 = vpop.trf.xlu0
      %v655 = vpop.trf.xlu0
      %v656 = vpop.trf.xlu0
      %v657 = vpop.trf.xlu0
      %658 = vxpose.xlu0.c.b16.start [1/8] %v599, 128
      %659 = vxpose.xlu0.c.b16.cont [2/8] 0, 128
      %660 = vxpose.xlu0.c.b16.cont [3/8] 0, 128
      %661 = vxpose.xlu0.c.b16.cont [4/8] 0, 128
      %662 = vxpose.xlu0.c.b16.cont [5/8] 0, 128
      %663 = vxpose.xlu0.c.b16.cont [6/8] 0, 128
      %664 = vxpose.xlu0.c.b16.cont [7/8] 0, 128
      %665 = vxpose.xlu0.c.b16.end [8/8] 0, 128
      %v666 = vpop.trf.xlu0
      %v667 = vpop.trf.xlu0
      %v668 = vpop.trf.xlu0
      %v669 = vpop.trf.xlu0
      %v670 = vpop.trf.xlu0
      %v671 = vpop.trf.xlu0
      %v672 = vpop.trf.xlu0
      %v673 = vpop.trf.xlu0
      %vm674 = vcmask 64512
      %v676 = vsel %vm674, %v515, 0
      %vm678 = vcmask 1043456
      %v680 = vsel %vm678, %v618, 0
      %682 = vmatprep.subr.bf16.mxu0 0
      %683 = vmatpush1.bf16.msra.mxu0 %v680
      %684 = vmatprep.subr.bf16.mxu0 0
      %685 = vmatpush1.bf16.msra.mxu0 0
      %686 = vmatprep.subr.bf16.mxu0 0
      %687 = vmatpush1.bf16.msra.mxu0 0
      %688 = vmatprep.subr.bf16.mxu0 0
      %689 = vmatpush1.bf16.msra.mxu0 0
      %690 = vmatprep.subr.bf16.mxu0 0
      %691 = vmatpush1.bf16.msra.mxu0 0
      %692 = vmatprep.subr.bf16.mxu0 0
      %693 = vmatpush1.bf16.msra.mxu0 0
      %694 = vmatprep.subr.bf16.mxu0 0
      %695 = vmatpush1.bf16.msra.mxu0 0
      %696 = vmatprep.subr.bf16.mxu0 0
      %697 = vmatpush1.bf16.msra.mxu0 0
      %698 = vmatprep.subr.bf16.mxu0 0
      %699 = vmatpush1.bf16.msra.mxu0 0
      %700 = vmatprep.subr.bf16.mxu0 0
      %701 = vmatpush1.bf16.msra.mxu0 0
      %702 = vmatprep.subr.bf16.mxu0 0
      %703 = vmatpush1.bf16.msra.mxu0 0
      %704 = vmatprep.subr.bf16.mxu0 0
      %705 = vmatpush1.bf16.msra.mxu0 0
      %706 = vmatprep.subr.bf16.mxu0 0
      %707 = vmatpush1.bf16.msra.mxu0 0
      %708 = vmatprep.subr.bf16.mxu0 0
      %709 = vmatpush1.bf16.msra.mxu0 0
      %710 = vmatprep.subr.bf16.mxu0 0
      %711 = vmatpush1.bf16.msra.mxu0 0
      %712 = vmatprep.subr.bf16.mxu0 0
      %713 = vmatpush1.bf16.msra.mxu0 0
      %714 = vmatprep.mubr.bf16.mxu0 0
      %715 = vmatmul.mubr.bf16.gmra.mrb[0].mxu0 %v676
      %v716 = vpop.f32.mrb[0].mxu0
      %v717 = vadd.f32 %v608, %v716
      %v718 = vpop.f32.mrb[0].mxu0
      %v719 = vpop.f32.mrb[0].mxu0
      %v720 = vpop.f32.mrb[0].mxu0
      %721 = vdwg.mxu0
      %v723 = vsel %vm674, %v586, 0
      %v726 = vsel %vm678, %v634, 0
      %728 = vmatprep.subr.bf16.mxu0 0
      %729 = vmatpush1.bf16.msra.mxu0 %v726
      %730 = vmatprep.subr.bf16.mxu0 0
      %731 = vmatpush1.bf16.msra.mxu0 0
      %732 = vmatprep.subr.bf16.mxu0 0
      %733 = vmatpush1.bf16.msra.mxu0 0
      %734 = vmatprep.subr.bf16.mxu0 0
      %735 = vmatpush1.bf16.msra.mxu0 0
      %736 = vmatprep.subr.bf16.mxu0 0
      %737 = vmatpush1.bf16.msra.mxu0 0
      %738 = vmatprep.subr.bf16.mxu0 0
      %739 = vmatpush1.bf16.msra.mxu0 0
      %740 = vmatprep.subr.bf16.mxu0 0
      %741 = vmatpush1.bf16.msra.mxu0 0
      %742 = vmatprep.subr.bf16.mxu0 0
      %743 = vmatpush1.bf16.msra.mxu0 0
      %744 = vmatprep.subr.bf16.mxu0 0
      %745 = vmatpush1.bf16.msra.mxu0 0
      %746 = vmatprep.subr.bf16.mxu0 0
      %747 = vmatpush1.bf16.msra.mxu0 0
      %748 = vmatprep.subr.bf16.mxu0 0
      %749 = vmatpush1.bf16.msra.mxu0 0
      %750 = vmatprep.subr.bf16.mxu0 0
      %751 = vmatpush1.bf16.msra.mxu0 0
      %752 = vmatprep.subr.bf16.mxu0 0
      %753 = vmatpush1.bf16.msra.mxu0 0
      %754 = vmatprep.subr.bf16.mxu0 0
      %755 = vmatpush1.bf16.msra.mxu0 0
      %756 = vmatprep.subr.bf16.mxu0 0
      %757 = vmatpush1.bf16.msra.mxu0 0
      %758 = vmatprep.subr.bf16.mxu0 0
      %759 = vmatpush1.bf16.msra.mxu0 0
      %760 = vmatprep.mubr.bf16.mxu0 0
      %761 = vmatmul.mubr.bf16.gmra.mrb[0].mxu0 %v723
      %v762 = vpop.f32.mrb[0].mxu0
      %v763 = vadd.f32 %v608, %v762
      %v764 = vpop.f32.mrb[0].mxu0
      %v765 = vpop.f32.mrb[0].mxu0
      %v766 = vpop.f32.mrb[0].mxu0
      %767 = vdwg.mxu0
      %v769 = vsel %vm674, %v588, 0
      %v772 = vsel %vm678, %v650, 0
      %774 = vmatprep.subr.bf16.mxu0 0
      %775 = vmatpush1.bf16.msra.mxu0 %v772
      %776 = vmatprep.subr.bf16.mxu0 0
      %777 = vmatpush1.bf16.msra.mxu0 0
      %778 = vmatprep.subr.bf16.mxu0 0
      %779 = vmatpush1.bf16.msra.mxu0 0
      %780 = vmatprep.subr.bf16.mxu0 0
      %781 = vmatpush1.bf16.msra.mxu0 0
      %782 = vmatprep.subr.bf16.mxu0 0
      %783 = vmatpush1.bf16.msra.mxu0 0
      %784 = vmatprep.subr.bf16.mxu0 0
      %785 = vmatpush1.bf16.msra.mxu0 0
      %786 = vmatprep.subr.bf16.mxu0 0
      %787 = vmatpush1.bf16.msra.mxu0 0
      %788 = vmatprep.subr.bf16.mxu0 0
      %789 = vmatpush1.bf16.msra.mxu0 0
      %790 = vmatprep.subr.bf16.mxu0 0
      %791 = vmatpush1.bf16.msra.mxu0 0
      %792 = vmatprep.subr.bf16.mxu0 0
      %793 = vmatpush1.bf16.msra.mxu0 0
      %794 = vmatprep.subr.bf16.mxu0 0
      %795 = vmatpush1.bf16.msra.mxu0 0
      %796 = vmatprep.subr.bf16.mxu0 0
      %797 = vmatpush1.bf16.msra.mxu0 0
      %798 = vmatprep.subr.bf16.mxu0 0
      %799 = vmatpush1.bf16.msra.mxu0 0
      %800 = vmatprep.subr.bf16.mxu0 0
      %801 = vmatpush1.bf16.msra.mxu0 0
      %802 = vmatprep.subr.bf16.mxu0 0
      %803 = vmatpush1.bf16.msra.mxu0 0
      %804 = vmatprep.subr.bf16.mxu0 0
      %805 = vmatpush1.bf16.msra.mxu0 0
      %806 = vmatprep.mubr.bf16.mxu0 0
      %807 = vmatmul.mubr.bf16.gmra.mrb[0].mxu0 %v769
      %v808 = vpop.f32.mrb[0].mxu0
      %v809 = vadd.f32 %v608, %v808
      %v810 = vpop.f32.mrb[0].mxu0
      %v811 = vpop.f32.mrb[0].mxu0
      %v812 = vpop.f32.mrb[0].mxu0
      %813 = vdwg.mxu0
      %v815 = vsel %vm674, %v590, 0
      %v818 = vsel %vm678, %v666, 0
      %820 = vmatprep.subr.bf16.mxu0 0
      %821 = vmatpush1.bf16.msra.mxu0 %v818
      %822 = vmatprep.subr.bf16.mxu0 0
      %823 = vmatpush1.bf16.msra.mxu0 0
      %824 = vmatprep.subr.bf16.mxu0 0
      %825 = vmatpush1.bf16.msra.mxu0 0
      %826 = vmatprep.subr.bf16.mxu0 0
      %827 = vmatpush1.bf16.msra.mxu0 0
      %828 = vmatprep.subr.bf16.mxu0 0
      %829 = vmatpush1.bf16.msra.mxu0 0
      %830 = vmatprep.subr.bf16.mxu0 0
      %831 = vmatpush1.bf16.msra.mxu0 0
      %832 = vmatprep.subr.bf16.mxu0 0
      %833 = vmatpush1.bf16.msra.mxu0 0
      %834 = vmatprep.subr.bf16.mxu0 0
      %835 = vmatpush1.bf16.msra.mxu0 0
      %836 = vmatprep.subr.bf16.mxu0 0
      %837 = vmatpush1.bf16.msra.mxu0 0
      %838 = vmatprep.subr.bf16.mxu0 0
      %839 = vmatpush1.bf16.msra.mxu0 0
      %840 = vmatprep.subr.bf16.mxu0 0
      %841 = vmatpush1.bf16.msra.mxu0 0
      %842 = vmatprep.subr.bf16.mxu0 0
      %843 = vmatpush1.bf16.msra.mxu0 0
      %844 = vmatprep.subr.bf16.mxu0 0
      %845 = vmatpush1.bf16.msra.mxu0 0
      %846 = vmatprep.subr.bf16.mxu0 0
      %847 = vmatpush1.bf16.msra.mxu0 0
      %848 = vmatprep.subr.bf16.mxu0 0
      %849 = vmatpush1.bf16.msra.mxu0 0
      %850 = vmatprep.subr.bf16.mxu0 0
      %851 = vmatpush1.bf16.msra.mxu0 0
      %852 = vmatprep.mubr.bf16.mxu0 0
      %853 = vmatmul.mubr.bf16.gmra.mrb[0].mxu0 %v815
      %v854 = vpop.f32.mrb[0].mxu0
      %v855 = vadd.f32 %v608, %v854
      %v856 = vpop.f32.mrb[0].mxu0
      %v857 = vpop.f32.mrb[0].mxu0
      %v858 = vpop.f32.mrb[0].mxu0
      %859 = vdwg.mxu0
      %v860 = vsel %vm674, %v717, -inf
      %861 = vmax.xlane.f32.xlu0 %v860
      %v862 = vpop.xlane.xlu0 %861
      %v863 = vsel %vm674, %v763, -inf
      %864 = vmax.xlane.f32.xlu0 %v863
      %v865 = vpop.xlane.xlu0 %864
      %v866 = vsel %vm674, %v809, -inf
      %867 = vmax.xlane.f32.xlu0 %v866
      %v868 = vpop.xlane.xlu0 %867
      %v869 = vsel %vm674, %v855, -inf
      %870 = vmax.xlane.f32.xlu0 %v869
      %v871 = vpop.xlane.xlu0 %870
      %v872 = vsub.f32 %v717, %v862
      %v873 = vsub.f32 %v763, %v865
      %v874 = vsub.f32 %v809, %v868
      %v875 = vsub.f32 %v855, %v871
      %v876 = vmul.f32 %v872, 1.442695
      %v877 = vpow.pop %v876
      %v878 = vmul.f32 %v873, 1.442695
      %v879 = vpow.pop %v878
      %v880 = vmul.f32 %v874, 1.442695
      %v881 = vpow.pop %v880
      %v882 = vmul.f32 %v875, 1.442695
      %v883 = vpow.pop %v882
      %v884 = vsel %vm674, %v877, 0.0
      %885 = vadd.xlane.f32.xlu0 %v884
      %v886 = vpop.xlane.xlu0 %885
      %v887 = vsel %vm674, %v879, 0.0
      %888 = vadd.xlane.f32.xlu0 %v887
      %v889 = vpop.xlane.xlu0 %888
      %v890 = vsel %vm674, %v881, 0.0
      %891 = vadd.xlane.f32.xlu0 %v890
      %v892 = vpop.xlane.xlu0 %891
      %v893 = vsel %vm674, %v883, 0.0
      %894 = vadd.xlane.f32.xlu0 %v893
      %v895 = vpop.xlane.xlu0 %894
      %v896 = vrcp.pop %v886
      %v897 = vmul.f32 %v877, %v896
      %v898 = vrcp.pop %v889
      %v899 = vmul.f32 %v879, %v898
      %v900 = vrcp.pop %v892
      %v901 = vmul.f32 %v881, %v900
      %v902 = vrcp.pop %v895
      %v903 = vmul.f32 %v883, %v902
      %v904 = vpack.c.bf16 %v897, %v897
      %v905 = vpack.c.bf16 %v899, %v899
      %v906 = vpack.c.bf16 %v901, %v901
      %v907 = vpack.c.bf16 %v903, %v903
      %908 = vrot.lane.b32.xlu0 %v583, 96
      %v909 = vpop.permute.xlu0 %908
      %910 = vrot.lane.b32.xlu0 %v593, 96
      %v911 = vpop.permute.xlu0 %910
      %912 = vrot.lane.b32.xlu0 %v596, 96
      %v913 = vpop.permute.xlu0 %912
      %914 = vrot.lane.b32.xlu0 %v599, 96
      %v915 = vpop.permute.xlu0 %914
      %920 = vxpose.xlu0.c.b16.start [1/8] %v909, 128
      %921 = vxpose.xlu0.c.b16.cont [2/8] 0, 128
      %922 = vxpose.xlu0.c.b16.cont [3/8] 0, 128
      %923 = vxpose.xlu0.c.b16.cont [4/8] 0, 128
      %924 = vxpose.xlu0.c.b16.cont [5/8] 0, 128
      %925 = vxpose.xlu0.c.b16.cont [6/8] 0, 128
      %926 = vxpose.xlu0.c.b16.cont [7/8] 0, 128
      %927 = vxpose.xlu0.c.b16.end [8/8] 0, 128
      %v928 = vpop.trf.xlu0
      %v929 = vpop.trf.xlu0
      %v930 = vpop.trf.xlu0
      %v931 = vpop.trf.xlu0
      %v932 = vpop.trf.xlu0
      %v933 = vpop.trf.xlu0
      %v934 = vpop.trf.xlu0
      %v935 = vpop.trf.xlu0
      %936 = vxpose.xlu0.c.b16.start [1/8] %v911, 128
      %937 = vxpose.xlu0.c.b16.cont [2/8] 0, 128
      %938 = vxpose.xlu0.c.b16.cont [3/8] 0, 128
      %939 = vxpose.xlu0.c.b16.cont [4/8] 0, 128
      %940 = vxpose.xlu0.c.b16.cont [5/8] 0, 128
      %941 = vxpose.xlu0.c.b16.cont [6/8] 0, 128
      %942 = vxpose.xlu0.c.b16.cont [7/8] 0, 128
      %943 = vxpose.xlu0.c.b16.end [8/8] 0, 128
      %v944 = vpop.trf.xlu0
      %v945 = vpop.trf.xlu0
      %v946 = vpop.trf.xlu0
      %v947 = vpop.trf.xlu0
      %v948 = vpop.trf.xlu0
      %v949 = vpop.trf.xlu0
      %v950 = vpop.trf.xlu0
      %v951 = vpop.trf.xlu0
      %952 = vxpose.xlu0.c.b16.start [1/8] %v913, 128
      %953 = vxpose.xlu0.c.b16.cont [2/8] 0, 128
      %954 = vxpose.xlu0.c.b16.cont [3/8] 0, 128
      %955 = vxpose.xlu0.c.b16.cont [4/8] 0, 128
      %956 = vxpose.xlu0.c.b16.cont [5/8] 0, 128
      %957 = vxpose.xlu0.c.b16.cont [6/8] 0, 128
      %958 = vxpose.xlu0.c.b16.cont [7/8] 0, 128
      %959 = vxpose.xlu0.c.b16.end [8/8] 0, 128
      %v960 = vpop.trf.xlu0
      %v961 = vpop.trf.xlu0
      %v962 = vpop.trf.xlu0
      %v963 = vpop.trf.xlu0
      %v964 = vpop.trf.xlu0
      %v965 = vpop.trf.xlu0
      %v966 = vpop.trf.xlu0
      %v967 = vpop.trf.xlu0
      %968 = vxpose.xlu0.c.b16.start [1/8] %v915, 128
      %969 = vxpose.xlu0.c.b16.cont [2/8] 0, 128
      %970 = vxpose.xlu0.c.b16.cont [3/8] 0, 128
      %971 = vxpose.xlu0.c.b16.cont [4/8] 0, 128
      %972 = vxpose.xlu0.c.b16.cont [5/8] 0, 128
      %973 = vxpose.xlu0.c.b16.cont [6/8] 0, 128
      %974 = vxpose.xlu0.c.b16.cont [7/8] 0, 128
      %975 = vxpose.xlu0.c.b16.end [8/8] 0, 128
      %v976 = vpop.trf.xlu0
      %v977 = vpop.trf.xlu0
      %v978 = vpop.trf.xlu0
      %v979 = vpop.trf.xlu0
      %v980 = vpop.trf.xlu0
      %v981 = vpop.trf.xlu0
      %v982 = vpop.trf.xlu0
      %v983 = vpop.trf.xlu0
      %v985 = vsel %vm674, %v928, 0
      %v988 = vsel %vm674, %v904, 0
      %990 = vmatprep.subr.bf16.mxu0 0
      %991 = vmatpush1.bf16.xpose.msra.mxu0 %v988
      %992 = vmatprep.subr.bf16.mxu0 0
      %993 = vmatpush1.bf16.xpose.msra.mxu0 0
      %994 = vmatprep.subr.bf16.mxu0 0
      %995 = vmatpush1.bf16.xpose.msra.mxu0 0
      %996 = vmatprep.subr.bf16.mxu0 0
      %997 = vmatpush1.bf16.xpose.msra.mxu0 0
      %998 = vmatprep.subr.bf16.mxu0 0
      %999 = vmatpush1.bf16.xpose.msra.mxu0 0
      %1000 = vmatprep.subr.bf16.mxu0 0
      %1001 = vmatpush1.bf16.xpose.msra.mxu0 0
      %1002 = vmatprep.subr.bf16.mxu0 0
      %1003 = vmatpush1.bf16.xpose.msra.mxu0 0
      %1004 = vmatprep.subr.bf16.mxu0 0
      %1005 = vmatpush1.bf16.xpose.msra.mxu0 0
      %1006 = vmatprep.subr.bf16.mxu0 0
      %1007 = vmatpush1.bf16.xpose.msra.mxu0 0
      %1008 = vmatprep.subr.bf16.mxu0 0
      %1009 = vmatpush1.bf16.xpose.msra.mxu0 0
      %1010 = vmatprep.subr.bf16.mxu0 0
      %1011 = vmatpush1.bf16.xpose.msra.mxu0 0
      %1012 = vmatprep.subr.bf16.mxu0 0
      %1013 = vmatpush1.bf16.xpose.msra.mxu0 0
      %1014 = vmatprep.subr.bf16.mxu0 0
      %1015 = vmatpush1.bf16.xpose.msra.mxu0 0
      %1016 = vmatprep.subr.bf16.mxu0 0
      %1017 = vmatpush1.bf16.xpose.msra.mxu0 0
      %1018 = vmatprep.subr.bf16.mxu0 0
      %1019 = vmatpush1.bf16.xpose.msra.mxu0 0
      %1020 = vmatprep.subr.bf16.mxu0 0
      %1021 = vmatpush1.bf16.xpose.msra.mxu0 0
      %1022 = vmatprep.mubr.bf16.mxu0 0
      %1023 = vmatmul.mubr.bf16.gmra.mrb[0].mxu0 %v985
      %v1024 = vpop.f32.mrb[0].mxu0
      %v1025 = vadd.f32 0.0, %v1024
      %v1026 = vpop.f32.mrb[0].mxu0
      %v1027 = vpop.f32.mrb[0].mxu0
      %v1028 = vpop.f32.mrb[0].mxu0
      %1029 = vdwg.mxu0
      %v1031 = vsel %vm674, %v944, 0
      %v1034 = vsel %vm674, %v905, 0
      %1036 = vmatprep.subr.bf16.mxu0 0
      %1037 = vmatpush1.bf16.xpose.msra.mxu0 %v1034
      %1038 = vmatprep.subr.bf16.mxu0 0
      %1039 = vmatpush1.bf16.xpose.msra.mxu0 0
      %1040 = vmatprep.subr.bf16.mxu0 0
      %1041 = vmatpush1.bf16.xpose.msra.mxu0 0
      %1042 = vmatprep.subr.bf16.mxu0 0
      %1043 = vmatpush1.bf16.xpose.msra.mxu0 0
      %1044 = vmatprep.subr.bf16.mxu0 0
      %1045 = vmatpush1.bf16.xpose.msra.mxu0 0
      %1046 = vmatprep.subr.bf16.mxu0 0
      %1047 = vmatpush1.bf16.xpose.msra.mxu0 0
      %1048 = vmatprep.subr.bf16.mxu0 0
      %1049 = vmatpush1.bf16.xpose.msra.mxu0 0
      %1050 = vmatprep.subr.bf16.mxu0 0
      %1051 = vmatpush1.bf16.xpose.msra.mxu0 0
      %1052 = vmatprep.subr.bf16.mxu0 0
      %1053 = vmatpush1.bf16.xpose.msra.mxu0 0
      %1054 = vmatprep.subr.bf16.mxu0 0
      %1055 = vmatpush1.bf16.xpose.msra.mxu0 0
      %1056 = vmatprep.subr.bf16.mxu0 0
      %1057 = vmatpush1.bf16.xpose.msra.mxu0 0
      %1058 = vmatprep.subr.bf16.mxu0 0
      %1059 = vmatpush1.bf16.xpose.msra.mxu0 0
      %1060 = vmatprep.subr.bf16.mxu0 0
      %1061 = vmatpush1.bf16.xpose.msra.mxu0 0
      %1062 = vmatprep.subr.bf16.mxu0 0
      %1063 = vmatpush1.bf16.xpose.msra.mxu0 0
      %1064 = vmatprep.subr.bf16.mxu0 0
      %1065 = vmatpush1.bf16.xpose.msra.mxu0 0
      %1066 = vmatprep.subr.bf16.mxu0 0
      %1067 = vmatpush1.bf16.xpose.msra.mxu0 0
      %1068 = vmatprep.mubr.bf16.mxu0 0
      %1069 = vmatmul.mubr.bf16.gmra.mrb[0].mxu0 %v1031
      %v1070 = vpop.f32.mrb[0].mxu0
      %v1071 = vadd.f32 0.0, %v1070
      %v1072 = vpop.f32.mrb[0].mxu0
      %v1073 = vpop.f32.mrb[0].mxu0
      %v1074 = vpop.f32.mrb[0].mxu0
      %1075 = vdwg.mxu0
      %v1077 = vsel %vm674, %v960, 0
      %v1080 = vsel %vm674, %v906, 0
      %1082 = vmatprep.subr.bf16.mxu0 0
      %1083 = vmatpush1.bf16.xpose.msra.mxu0 %v1080
      %1084 = vmatprep.subr.bf16.mxu0 0
      %1085 = vmatpush1.bf16.xpose.msra.mxu0 0
      %1086 = vmatprep.subr.bf16.mxu0 0
      %1087 = vmatpush1.bf16.xpose.msra.mxu0 0
      %1088 = vmatprep.subr.bf16.mxu0 0
      %1089 = vmatpush1.bf16.xpose.msra.mxu0 0
      %1090 = vmatprep.subr.bf16.mxu0 0
      %1091 = vmatpush1.bf16.xpose.msra.mxu0 0
      %1092 = vmatprep.subr.bf16.mxu0 0
      %1093 = vmatpush1.bf16.xpose.msra.mxu0 0
      %1094 = vmatprep.subr.bf16.mxu0 0
      %1095 = vmatpush1.bf16.xpose.msra.mxu0 0
      %1096 = vmatprep.subr.bf16.mxu0 0
      %1097 = vmatpush1.bf16.xpose.msra.mxu0 0
      %1098 = vmatprep.subr.bf16.mxu0 0
      %1099 = vmatpush1.bf16.xpose.msra.mxu0 0
      %1100 = vmatprep.subr.bf16.mxu0 0
      %1101 = vmatpush1.bf16.xpose.msra.mxu0 0
      %1102 = vmatprep.subr.bf16.mxu0 0
      %1103 = vmatpush1.bf16.xpose.msra.mxu0 0
      %1104 = vmatprep.subr.bf16.mxu0 0
      %1105 = vmatpush1.bf16.xpose.msra.mxu0 0
      %1106 = vmatprep.subr.bf16.mxu0 0
      %1107 = vmatpush1.bf16.xpose.msra.mxu0 0
      %1108 = vmatprep.subr.bf16.mxu0 0
      %1109 = vmatpush1.bf16.xpose.msra.mxu0 0
      %1110 = vmatprep.subr.bf16.mxu0 0
      %1111 = vmatpush1.bf16.xpose.msra.mxu0 0
      %1112 = vmatprep.subr.bf16.mxu0 0
      %1113 = vmatpush1.bf16.xpose.msra.mxu0 0
      %1114 = vmatprep.mubr.bf16.mxu0 0
      %1115 = vmatmul.mubr.bf16.gmra.mrb[0].mxu0 %v1077
      %v1116 = vpop.f32.mrb[0].mxu0
      %v1117 = vadd.f32 0.0, %v1116
      %v1118 = vpop.f32.mrb[0].mxu0
      %v1119 = vpop.f32.mrb[0].mxu0
      %v1120 = vpop.f32.mrb[0].mxu0
      %1121 = vdwg.mxu0
      %v1123 = vsel %vm674, %v976, 0
      %v1126 = vsel %vm674, %v907, 0
      %1128 = vmatprep.subr.bf16.mxu0 0
      %1129 = vmatpush1.bf16.xpose.msra.mxu0 %v1126
      %1130 = vmatprep.subr.bf16.mxu0 0
      %1131 = vmatpush1.bf16.xpose.msra.mxu0 0
      %1132 = vmatprep.subr.bf16.mxu0 0
      %1133 = vmatpush1.bf16.xpose.msra.mxu0 0
      %1134 = vmatprep.subr.bf16.mxu0 0
      %1135 = vmatpush1.bf16.xpose.msra.mxu0 0
      %1136 = vmatprep.subr.bf16.mxu0 0
      %1137 = vmatpush1.bf16.xpose.msra.mxu0 0
      %1138 = vmatprep.subr.bf16.mxu0 0
      %1139 = vmatpush1.bf16.xpose.msra.mxu0 0
      %1140 = vmatprep.subr.bf16.mxu0 0
      %1141 = vmatpush1.bf16.xpose.msra.mxu0 0
      %1142 = vmatprep.subr.bf16.mxu0 0
      %1143 = vmatpush1.bf16.xpose.msra.mxu0 0
      %1144 = vmatprep.subr.bf16.mxu0 0
      %1145 = vmatpush1.bf16.xpose.msra.mxu0 0
      %1146 = vmatprep.subr.bf16.mxu0 0
      %1147 = vmatpush1.bf16.xpose.msra.mxu0 0
      %1148 = vmatprep.subr.bf16.mxu0 0
      %1149 = vmatpush1.bf16.xpose.msra.mxu0 0
      %1150 = vmatprep.subr.bf16.mxu0 0
      %1151 = vmatpush1.bf16.xpose.msra.mxu0 0
      %1152 = vmatprep.subr.bf16.mxu0 0
      %1153 = vmatpush1.bf16.xpose.msra.mxu0 0
      %1154 = vmatprep.subr.bf16.mxu0 0
      %1155 = vmatpush1.bf16.xpose.msra.mxu0 0
      %1156 = vmatprep.subr.bf16.mxu0 0
      %1157 = vmatpush1.bf16.xpose.msra.mxu0 0
      %1158 = vmatprep.subr.bf16.mxu0 0
      %1159 = vmatpush1.bf16.xpose.msra.mxu0 0
      %1160 = vmatprep.mubr.bf16.mxu0 0
      %1161 = vmatmul.mubr.bf16.gmra.mrb[0].mxu0 %v1123
      %v1162 = vpop.f32.mrb[0].mxu0
      %v1163 = vadd.f32 0.0, %v1162
      %v1164 = vpop.f32.mrb[0].mxu0
      %v1165 = vpop.f32.mrb[0].mxu0
      %v1166 = vpop.f32.mrb[0].mxu0
      %1167 = vdwg.mxu0
      %1168 = vxpose.xlu0.b32.start [1/16] %v1025, 128
      %1169 = vxpose.xlu0.b32.cont [2/16] 0.0, 128
      %1170 = vxpose.xlu0.b32.cont [3/16] 0.0, 128
      %1171 = vxpose.xlu0.b32.cont [4/16] 0.0, 128
      %1172 = vxpose.xlu0.b32.cont [5/16] 0.0, 128
      %1173 = vxpose.xlu0.b32.cont [6/16] 0.0, 128
      %1174 = vxpose.xlu0.b32.cont [7/16] 0.0, 128
      %1175 = vxpose.xlu0.b32.cont [8/16] 0.0, 128
      %1176 = vxpose.xlu0.b32.cont [9/16] 0.0, 128
      %1177 = vxpose.xlu0.b32.cont [10/16] 0.0, 128
      %1178 = vxpose.xlu0.b32.cont [11/16] 0.0, 128
      %1179 = vxpose.xlu0.b32.cont [12/16] 0.0, 128
      %1180 = vxpose.xlu0.b32.cont [13/16] 0.0, 128
      %1181 = vxpose.xlu0.b32.cont [14/16] 0.0, 128
      %1182 = vxpose.xlu0.b32.cont [15/16] 0.0, 128
      %1183 = vxpose.xlu0.b32.end [16/16] 0.0, 128
      %v1184 = vpop.trf.xlu0
      %v1185 = vpop.trf.xlu0
      %v1186 = vpop.trf.xlu0
      %v1187 = vpop.trf.xlu0
      %v1188 = vpop.trf.xlu0
      %v1189 = vpop.trf.xlu0
      %v1190 = vpop.trf.xlu0
      %v1191 = vpop.trf.xlu0
      %v1192 = vpop.trf.xlu0
      %v1193 = vpop.trf.xlu0
      %v1194 = vpop.trf.xlu0
      %v1195 = vpop.trf.xlu0
      %v1196 = vpop.trf.xlu0
      %v1197 = vpop.trf.xlu0
      %v1198 = vpop.trf.xlu0
      %v1199 = vpop.trf.xlu0
      %1200 = vxpose.xlu0.b32.start [1/16] %v1071, 128
      %1201 = vxpose.xlu0.b32.cont [2/16] 0.0, 128
      %1202 = vxpose.xlu0.b32.cont [3/16] 0.0, 128
      %1203 = vxpose.xlu0.b32.cont [4/16] 0.0, 128
      %1204 = vxpose.xlu0.b32.cont [5/16] 0.0, 128
      %1205 = vxpose.xlu0.b32.cont [6/16] 0.0, 128
      %1206 = vxpose.xlu0.b32.cont [7/16] 0.0, 128
      %1207 = vxpose.xlu0.b32.cont [8/16] 0.0, 128
      %1208 = vxpose.xlu0.b32.cont [9/16] 0.0, 128
      %1209 = vxpose.xlu0.b32.cont [10/16] 0.0, 128
      %1210 = vxpose.xlu0.b32.cont [11/16] 0.0, 128
      %1211 = vxpose.xlu0.b32.cont [12/16] 0.0, 128
      %1212 = vxpose.xlu0.b32.cont [13/16] 0.0, 128
      %1213 = vxpose.xlu0.b32.cont [14/16] 0.0, 128
      %1214 = vxpose.xlu0.b32.cont [15/16] 0.0, 128
      %1215 = vxpose.xlu0.b32.end [16/16] 0.0, 128
      %v1216 = vpop.trf.xlu0
      %v1217 = vpop.trf.xlu0
      %v1218 = vpop.trf.xlu0
      %v1219 = vpop.trf.xlu0
      %v1220 = vpop.trf.xlu0
      %v1221 = vpop.trf.xlu0
      %v1222 = vpop.trf.xlu0
      %v1223 = vpop.trf.xlu0
      %v1224 = vpop.trf.xlu0
      %v1225 = vpop.trf.xlu0
      %v1226 = vpop.trf.xlu0
      %v1227 = vpop.trf.xlu0
      %v1228 = vpop.trf.xlu0
      %v1229 = vpop.trf.xlu0
      %v1230 = vpop.trf.xlu0
      %v1231 = vpop.trf.xlu0
      %1232 = vxpose.xlu0.b32.start [1/16] %v1117, 128
      %1233 = vxpose.xlu0.b32.cont [2/16] 0.0, 128
      %1234 = vxpose.xlu0.b32.cont [3/16] 0.0, 128
      %1235 = vxpose.xlu0.b32.cont [4/16] 0.0, 128
      %1236 = vxpose.xlu0.b32.cont [5/16] 0.0, 128
      %1237 = vxpose.xlu0.b32.cont [6/16] 0.0, 128
      %1238 = vxpose.xlu0.b32.cont [7/16] 0.0, 128
      %1239 = vxpose.xlu0.b32.cont [8/16] 0.0, 128
      %1240 = vxpose.xlu0.b32.cont [9/16] 0.0, 128
      %1241 = vxpose.xlu0.b32.cont [10/16] 0.0, 128
      %1242 = vxpose.xlu0.b32.cont [11/16] 0.0, 128
      %1243 = vxpose.xlu0.b32.cont [12/16] 0.0, 128
      %1244 = vxpose.xlu0.b32.cont [13/16] 0.0, 128
      %1245 = vxpose.xlu0.b32.cont [14/16] 0.0, 128
      %1246 = vxpose.xlu0.b32.cont [15/16] 0.0, 128
      %1247 = vxpose.xlu0.b32.end [16/16] 0.0, 128
      %v1248 = vpop.trf.xlu0
      %v1249 = vpop.trf.xlu0
      %v1250 = vpop.trf.xlu0
      %v1251 = vpop.trf.xlu0
      %v1252 = vpop.trf.xlu0
      %v1253 = vpop.trf.xlu0
      %v1254 = vpop.trf.xlu0
      %v1255 = vpop.trf.xlu0
      %v1256 = vpop.trf.xlu0
      %v1257 = vpop.trf.xlu0
      %v1258 = vpop.trf.xlu0
      %v1259 = vpop.trf.xlu0
      %v1260 = vpop.trf.xlu0
      %v1261 = vpop.trf.xlu0
      %v1262 = vpop.trf.xlu0
      %v1263 = vpop.trf.xlu0
      %1264 = vxpose.xlu0.b32.start [1/16] %v1163, 128
      %1265 = vxpose.xlu0.b32.cont [2/16] 0.0, 128
      %1266 = vxpose.xlu0.b32.cont [3/16] 0.0, 128
      %1267 = vxpose.xlu0.b32.cont [4/16] 0.0, 128
      %1268 = vxpose.xlu0.b32.cont [5/16] 0.0, 128
      %1269 = vxpose.xlu0.b32.cont [6/16] 0.0, 128
      %1270 = vxpose.xlu0.b32.cont [7/16] 0.0, 128
      %1271 = vxpose.xlu0.b32.cont [8/16] 0.0, 128
      %1272 = vxpose.xlu0.b32.cont [9/16] 0.0, 128
      %1273 = vxpose.xlu0.b32.cont [10/16] 0.0, 128
      %1274 = vxpose.xlu0.b32.cont [11/16] 0.0, 128
      %1275 = vxpose.xlu0.b32.cont [12/16] 0.0, 128
      %1276 = vxpose.xlu0.b32.cont [13/16] 0.0, 128
      %1277 = vxpose.xlu0.b32.cont [14/16] 0.0, 128
      %1278 = vxpose.xlu0.b32.cont [15/16] 0.0, 128
      %1279 = vxpose.xlu0.b32.end [16/16] 0.0, 128
      %v1280 = vpop.trf.xlu0
      %v1281 = vpop.trf.xlu0
      %v1282 = vpop.trf.xlu0
      %v1283 = vpop.trf.xlu0
      %v1284 = vpop.trf.xlu0
      %v1285 = vpop.trf.xlu0
      %v1286 = vpop.trf.xlu0
      %v1287 = vpop.trf.xlu0
      %v1288 = vpop.trf.xlu0
      %v1289 = vpop.trf.xlu0
      %v1290 = vpop.trf.xlu0
      %v1291 = vpop.trf.xlu0
      %v1292 = vpop.trf.xlu0
      %v1293 = vpop.trf.xlu0
      %v1294 = vpop.trf.xlu0
      %v1295 = vpop.trf.xlu0
      %v1296 = vcombine.low %v1184, %v1248
      %v1297 = vcombine.high %v1184, %v1248
      %v1299 = vunpack.c.l.s4 1983009808
      %v1300 = vunpack.c.0.s8 %v1299
      %v1301 = vlaneseq
      %v1302 = vshrl.u32 %v1301, 7
      %v1303 = vsub.s32 %v1300, %v1302
      %v1304 = vrot.slane %v1296, %v1303
      %v1306 = vunpack.c.l.s4 1983009808
      %v1307 = vunpack.c.0.s8 %v1306
      %v1308 = vlaneseq
      %v1309 = vshrl.u32 %v1308, 7
      %v1310 = vsub.s32 %v1307, %v1309
      %v1311 = vrot.slane %v1297, %v1310
      %v1312 = vcombine.low %v1216, %v1280
      %v1313 = vcombine.high %v1216, %v1280
      %v1315 = vunpack.c.l.s4 1983009808
      %v1316 = vunpack.c.0.s8 %v1315
      %v1317 = vlaneseq
      %v1318 = vshrl.u32 %v1317, 7
      %v1319 = vsub.s32 %v1316, %v1318
      %v1320 = vrot.slane %v1312, %v1319
      %v1322 = vunpack.c.l.s4 1983009808
      %v1323 = vunpack.c.0.s8 %v1322
      %v1324 = vlaneseq
      %v1325 = vshrl.u32 %v1324, 7
      %v1326 = vsub.s32 %v1323, %v1325
      %v1327 = vrot.slane %v1313, %v1326
      %v1328 = vcombine.low %v1304, %v1320
      %v1329 = vcombine.high %v1304, %v1320
      %v1331 = vunpack.c.l.s4 1934713408
      %v1332 = vunpack.c.0.s8 %v1331
      %v1333 = vlaneseq
      %v1334 = vshrl.u32 %v1333, 7
      %v1335 = vsub.s32 %v1332, %v1334
      %v1336 = vrot.slane %v1328, %v1335
      %v1338 = vunpack.c.l.s4 1934713408
      %v1339 = vunpack.c.0.s8 %v1338
      %v1340 = vlaneseq
      %v1341 = vshrl.u32 %v1340, 7
      %v1342 = vsub.s32 %v1339, %v1341
      %v1343 = vrot.slane %v1329, %v1342
      %v1344 = vcombine.low %v1311, %v1327
      %v1345 = vcombine.high %v1311, %v1327
      %v1347 = vunpack.c.l.s4 1934713408
      %v1348 = vunpack.c.0.s8 %v1347
      %v1349 = vlaneseq
      %v1350 = vshrl.u32 %v1349, 7
      %v1351 = vsub.s32 %v1348, %v1350
      %v1352 = vrot.slane %v1344, %v1351
      %v1354 = vunpack.c.l.s4 1934713408
      %v1355 = vunpack.c.0.s8 %v1354
      %v1356 = vlaneseq
      %v1357 = vshrl.u32 %v1356, 7
      %v1358 = vsub.s32 %v1355, %v1357
      %v1359 = vrot.slane %v1345, %v1358
      %v1360 = vcombine.high %v1336, 0.0
      %v1361 = vcombine.high %v1343, 0.0
      %v1362 = vcombine.high %v1352, 0.0
      %v1363 = vcombine.high %v1359, 0.0
      %v1364 = vcombine.low %v1336, %v1343
      %v1366 = vunpack.c.l.s4 1983009808
      %v1367 = vunpack.c.0.s8 %v1366
      %v1368 = vlaneseq
      %v1369 = vshrl.u32 %v1368, 7
      %v1370 = vsub.s32 %v1367, %v1369
      %v1371 = vrot.slane %v1364, %v1370
      %v1372 = vcombine.low %v1360, %v1361
      %v1374 = vunpack.c.l.s4 1983009808
      %v1375 = vunpack.c.0.s8 %v1374
      %v1376 = vlaneseq
      %v1377 = vshrl.u32 %v1376, 7
      %v1378 = vsub.s32 %v1375, %v1377
      %v1379 = vrot.slane %v1372, %v1378
      %v1380 = vcombine.low %v1352, %v1359
      %v1382 = vunpack.c.l.s4 1983009808
      %v1383 = vunpack.c.0.s8 %v1382
      %v1384 = vlaneseq
      %v1385 = vshrl.u32 %v1384, 7
      %v1386 = vsub.s32 %v1383, %v1385
      %v1387 = vrot.slane %v1380, %v1386
      %v1388 = vcombine.low %v1362, %v1363
      %v1390 = vunpack.c.l.s4 1983009808
      %v1391 = vunpack.c.0.s8 %v1390
      %v1392 = vlaneseq
      %v1393 = vshrl.u32 %v1392, 7
      %v1394 = vsub.s32 %v1391, %v1393
      %v1395 = vrot.slane %v1388, %v1394
      %v1396 = vcombine.low %v1371, %v1379
      %v1397 = vcombine.high %v1371, %v1379
      %v1399 = vunpack.c.l.s4 1934713408
      %v1400 = vunpack.c.0.s8 %v1399
      %v1401 = vlaneseq
      %v1402 = vshrl.u32 %v1401, 7
      %v1403 = vsub.s32 %v1400, %v1402
      %v1404 = vrot.slane %v1396, %v1403
      %v1406 = vunpack.c.l.s4 1934713408
      %v1407 = vunpack.c.0.s8 %v1406
      %v1408 = vlaneseq
      %v1409 = vshrl.u32 %v1408, 7
      %v1410 = vsub.s32 %v1407, %v1409
      %v1411 = vrot.slane %v1397, %v1410
      %v1412 = vcombine.low %v1387, %v1395
      %v1413 = vcombine.high %v1387, %v1395
      %v1415 = vunpack.c.l.s4 1934713408
      %v1416 = vunpack.c.0.s8 %v1415
      %v1417 = vlaneseq
      %v1418 = vshrl.u32 %v1417, 7
      %v1419 = vsub.s32 %v1416, %v1418
      %v1420 = vrot.slane %v1412, %v1419
      %v1422 = vunpack.c.l.s4 1934713408
      %v1423 = vunpack.c.0.s8 %v1422
      %v1424 = vlaneseq
      %v1425 = vshrl.u32 %v1424, 7
      %v1426 = vsub.s32 %v1423, %v1425
      %v1427 = vrot.slane %v1413, %v1426
      %v1428 = vcombine.low %v1404, %v1420
      %v1429 = vcombine.high %v1404, %v1420
      %v1430 = vcombine.low %v1411, %v1427
      %v1431 = vcombine.high %v1411, %v1427
      %1433 = vrot.lane.b32.xlu0 %v1429, 8
      %v1434 = vpop.permute.xlu0 %1433
      %1437 = vrot.lane.b32.xlu0 %v1430, 16
      %v1438 = vpop.permute.xlu0 %1437
      %1441 = vrot.lane.b32.xlu0 %v1431, 24
      %v1442 = vpop.permute.xlu0 %1441
      %v1444 = vsel %vm674, %v1428, %v1434
      %vm1445 = vcmask 130048
      %v1446 = vsel %vm1445, %v1444, %v1438
      %vm1447 = vcmask 195584
      %v1448 = vsel %vm1447, %v1446, %v1442
      %v1449 = vpack.c.bf16 %v1448, %v1448
      %v1450 = vld [vmem:[%s7] sm:$0xf]
      %v1451 = vld [vmem:[%s7 + $0x4] sm:$0xf]
      %v1452 = vld [vmem:[%s7 + $0x8] sm:$0xf]
      %v1453 = vld [vmem:[%s7 + $0xc] sm:$0xf]
      %v1458 = vunpack.c.l.b16 %v1450
      %v1459 = vunpack.c.l.b16 %v1451
      %v1460 = vunpack.c.l.b16 %v1452
      %v1461 = vunpack.c.l.b16 %v1453
      %v1462 = vpack.c.b16 %v1459, %v1458
      %v1463 = vpack.c.b16 %v1461, %v1460
      %v1467 = vsel %vm471, %v1449, 0
      %1469 = vmatprep.subr.bf16.mxu0 0
      %1470 = vmatpush1.bf16.msra.mxu0 %v1462
      %1471 = vmatprep.subr.bf16.mxu0 0
      %1472 = vmatpush1.bf16.msra.mxu0 %v1463
      %1473 = vmatprep.subr.bf16.mxu0 0
      %1474 = vmatpush1.bf16.msra.mxu0 0
      %1475 = vmatprep.subr.bf16.mxu0 0
      %1476 = vmatpush1.bf16.msra.mxu0 0
      %1477 = vmatprep.subr.bf16.mxu0 0
      %1478 = vmatpush1.bf16.msra.mxu0 0
      %1479 = vmatprep.subr.bf16.mxu0 0
      %1480 = vmatpush1.bf16.msra.mxu0 0
      %1481 = vmatprep.subr.bf16.mxu0 0
      %1482 = vmatpush1.bf16.msra.mxu0 0
      %1483 = vmatprep.subr.bf16.mxu0 0
      %1484 = vmatpush1.bf16.msra.mxu0 0
      %1485 = vmatprep.subr.bf16.mxu0 0
      %1486 = vmatpush1.bf16.msra.mxu0 0
      %1487 = vmatprep.subr.bf16.mxu0 0
      %1488 = vmatpush1.bf16.msra.mxu0 0
      %1489 = vmatprep.subr.bf16.mxu0 0
      %1490 = vmatpush1.bf16.msra.mxu0 0
      %1491 = vmatprep.subr.bf16.mxu0 0
      %1492 = vmatpush1.bf16.msra.mxu0 0
      %1493 = vmatprep.subr.bf16.mxu0 0
      %1494 = vmatpush1.bf16.msra.mxu0 0
      %1495 = vmatprep.subr.bf16.mxu0 0
      %1496 = vmatpush1.bf16.msra.mxu0 0
      %1497 = vmatprep.subr.bf16.mxu0 0
      %1498 = vmatpush1.bf16.msra.mxu0 0
      %1499 = vmatprep.subr.bf16.mxu0 0
      %1500 = vmatpush1.bf16.msra.mxu0 0
      %1501 = vmatprep.mubr.bf16.mxu0 0
      %1502 = vmatmul.mubr.bf16.gmra.mrb[0].mxu0 %v1467
      %v1503 = vpop.f32.mrb[0].mxu0
      %v1504 = vadd.f32 0.0, %v1503
      %v1505 = vpop.f32.mrb[0].mxu0
      %v1506 = vpop.f32.mrb[0].mxu0
      %v1507 = vpop.f32.mrb[0].mxu0
      %1508 = vdwg.mxu0
      %v1509 = vadd.f32 %v445, %v1504
      %v1510 = vld [vmem:[%s8] sm:$0x1]
      %v1512 = vlaneseq
      %v1513 = vshrl.u32 %v1512, 7
      %v1514 = vsub.s32 0, %v1513
      %v1515 = vrot.slane %v1510, %v1514
      %v1517 = vadd.f32 %v1509, %v1515
      %v1518 = vld [vmem:[%s9] sm:$0x1]
      %v1519 = vld [vmem:[%s10] sm:$0x1]
      %v1520 = vsel %vm471, %v1517, 0.0
      %1521 = vadd.xlane.f32.xlu0 %v1520
      %v1522 = vpop.xlane.xlu0 %1521
      %v1523 = vrcp.pop 32.0
      %v1524 = vmul.f32 %v1522, %v1523
      %v1525 = vsub.f32 %v1517, %v1524
      %v1526 = vmul.f32 %v1525, %v1525
      %v1527 = vsel %vm471, %v1526, 0.0
      %1528 = vadd.xlane.f32.xlu0 %v1527
      %v1529 = vpop.xlane.xlu0 %1528
      %v1530 = vmul.f32 %v1529, %v1523
      %v1531 = vadd.f32 %v1530, 1e-05
      %v1532 = vrsqrt.pop %v1531
      %v1533 = vmul.f32 %v1525, %v1532
      %v1535 = vlaneseq
      %v1536 = vshrl.u32 %v1535, 7
      %v1537 = vsub.s32 0, %v1536
      %v1538 = vrot.slane %v1518, %v1537
      %v1540 = vmul.f32 %v1533, %v1538
      %v1542 = vlaneseq
      %v1543 = vshrl.u32 %v1542, 7
      %v1544 = vsub.s32 0, %v1543
      %v1545 = vrot.slane %v1519, %v1544
      %v1547 = vadd.f32 %v1540, %v1545
      %1548 = vst.msk [vmem:[%s443] sm:$0xff] %vm471, %v1547
      %p1549 = scmp.lt.s32.totalorder %s26, 1
      %s1550 = scalar_select %p1549, %s26, 1
      %p1551 = scmp.lt.s32.totalorder %s27, 0
      %s1552 = scalar_select %p1551, %s27, 0
      %s1553 = sadd.s32 %s1552, %s1550
      %s1554 = smul.addr %s1553, 8
      %s1555 = scalar_lea.vmem %s11, %s1554
      // Predicated region
      $region65: #{transformer_adapter2_forward.6} parent=63 // pred_check
        %p1556 = pneg %p302
      $region66: #{transformer_adapter2_forward.6} parent=63 // pred_check_branch
        %1558 = sbr.rel (%p1556) target = $region68
      $region67: #{transformer_adapter2_forward.6} parent=63 // pred_region
        _
      $region68: #{transformer_adapter2_forward.6} parent=63 // pred_fallthru
        _
    $region64: #{transformer_adapter2_forward.6} parent=5 // pred_fallthru
      _
    %p1559 = scmp.le.s32.totalorder 2, %s17
    // Predicated region
    $region69: #{transformer_adapter2_forward.6} parent=5 // pred_check
      %p1560 = pneg %p1559
    $region70: #{transformer_adapter2_forward.6} parent=5 // pred_check_branch
      %1562 = sbr.rel (%p1560) target = $region72
    $region71: #{transformer_adapter2_forward.6} parent=5 // pred_region
      %s1563 = ssub.s32 %s17, 2
      // Predicated region
      $region73: #{transformer_adapter2_forward.6} parent=71 // pred_check
        %p1564 = pneg %p308
      $region74: #{transformer_adapter2_forward.6} parent=71 // pred_check_branch
        %1566 = sbr.rel (%p1564) target = $region76
      $region75: #{transformer_adapter2_forward.6} parent=71 // pred_region
        %p1567 = scmp.lt.s32.totalorder %s28, 1
        %s1568 = scalar_select %p1567, %s28, 1
        %p1569 = scmp.lt.s32.totalorder %s29, 0
        %s1570 = scalar_select %p1569, %s29, 0
        %s1571 = sadd.s32 %s1570, %s1568
        %s1572 = smul.addr %s1571, 8
        %s1573 = scalar_lea.vmem %s11, %s1572
      $region76: #{transformer_adapter2_forward.6} parent=71 // pred_fallthru
        _
    $region72: #{transformer_adapter2_forward.6} parent=5 // pred_fallthru
      _
  $region6: #{transformer_adapter2_forward.6} parent=0 // loop_footer
    %s21 = sadd.s32 1, %s17
  $region7: #{transformer_adapter2_forward.6} parent=0 // loop_footer_branch
    %16 = sbr.rel target = $region3
  $region8: #{transformer_adapter2_forward.6} parent=0 // loop_exit
    _

// kernel: transformer_adapter2_forward.8
$region0: #{transformer_adapter2_forward.8}
  #allocation0 [shape = 'u32[]', space=smem, size = 0x4, offset = 0x4, fixed_abs, tag = 'smem constant byte address 0x4 - core index']
  #allocation1 [shape = 'u32[144,128]{1,0:T(1,128)}', space=vmem, size = 0x12000, scoped, tag = 'internal scratch']
  %s0 = inlined_call_operand.vmem [shape: f32[2,8,32], index: 0, kind: input, shape index: {}, may-alias: {0,1}]
  %s1 = inlined_call_operand.vmem [shape: f32[2,8,32], index: 1, kind: input, shape index: {}, may-alias: {0,1}]
  %s2 = inlined_call_operand.vmem [shape: s32[2,1,8], index: 2, kind: input, shape index: {}]
  %s3 = inlined_call_operand.vmem [shape: bf16[32,32], index: 3, kind: input, shape index: {}]
  %s4 = inlined_call_operand.vmem [shape: f32[1,32], index: 4, kind: input, shape index: {}]
  %s5 = inlined_call_operand.vmem [shape: bf16[32,64], index: 5, kind: input, shape index: {}]
  %s6 = inlined_call_operand.vmem [shape: f32[1,64], index: 6, kind: input, shape index: {}]
  %s7 = inlined_call_operand.vmem [shape: bf16[32,32], index: 7, kind: input, shape index: {}]
  %s8 = inlined_call_operand.vmem [shape: f32[1,32], index: 8, kind: input, shape index: {}]
  %s9 = inlined_call_operand.vmem [shape: f32[1,32], index: 9, kind: input, shape index: {}]
  %s10 = inlined_call_operand.vmem [shape: f32[1,32], index: 10, kind: input, shape index: {}]
  %s11 = inlined_call_operand.vmem [shape: f32[2,8,32], index: 11, kind: output, shape index: {}]
  %s12 = sld [smem:[#allocation0]]
  $region77: #{transformer_adapter2_forward.8} parent=0
    _
  %s14 = ssub.s32 1, %s12
  %s15 = scalar_select 0, %s14, %s12
  loop: start=0, step=1, limit=4
  $region2: #{transformer_adapter2_forward.8} parent=0 // loop_pre_header
    _
  $region3: #{transformer_adapter2_forward.8} parent=0 // loop_header
    %s17 = sphi 0, %s21
    %p18 = scmp.ge.s32.totalorder %s17, 4
    %s24 = sphi 0, %s36
    %s25 = sphi 0, %s32
    %s26 = sphi 0, %s24
    %s27 = sphi 0, %s25
    %s28 = sphi 0, %s26
    %s29 = sphi 0, %s27
    %s41 = sphi 0, %s43
    %s44 = sphi 0, %s41
    %s45 = sphi 0, %s44
    %s61 = sphi 0, %s45
    %s67 = sphi 0, %s69
    %s70 = sphi 0, %s67
    %s71 = sphi 0, %s70
    %s87 = sphi 0, %s71
    %s93 = sphi 0, %s95
    %s96 = sphi 0, %s93
    %s97 = sphi 0, %s96
    %s113 = sphi 0, %s97
    %s117 = sphi 0, %s117
    %s119 = sphi 0, %s117
    %s120 = sphi 0, %s119
    %s134 = sphi 0, %s120
    %s138 = sphi 0, %s138
    %s140 = sphi 0, %s138
    %s141 = sphi 0, %s140
    %s155 = sphi 0, %s141
    %s159 = sphi 0, %s159
    %s161 = sphi 0, %s159
    %s162 = sphi 0, %s161
    %s176 = sphi 0, %s162
    %s180 = sphi 0, %s180
    %s182 = sphi 0, %s180
    %s183 = sphi 0, %s182
    %s197 = sphi 0, %s183
    %s201 = sphi 0, %s201
    %s203 = sphi 0, %s201
    %s204 = sphi 0, %s203
    %s218 = sphi 0, %s204
    %s222 = sphi 0, %s222
    %s224 = sphi 0, %s222
    %s225 = sphi 0, %s224
    %s239 = sphi 0, %s225
    %s243 = sphi 0, %s243
    %s245 = sphi 0, %s243
    %s246 = sphi 0, %s245
    %s260 = sphi 0, %s246
    %s264 = sphi 0, %s264
    %s266 = sphi 0, %s264
    %s267 = sphi 0, %s266
    %s281 = sphi 0, %s267
    %s289 = sphi 0, %s291
    %s292 = sphi 0, %s289
    %s293 = sphi 0, %s292
    %s309 = sphi 0, %s293
  $region4: #{transformer_adapter2_forward.8} parent=0 // loop_header_branch
    %20 = sbr.rel (%p18) target = $region8
  $region5: #{transformer_adapter2_forward.8} parent=0 // loop_body
    %s22 = ssub.s32 %s17, 1
    %s23 = ssub.s32 %s17, 2
    %s30 = sadd.s32 1, %s25
    %p31 = scmp.ge.s32.totalorder %s30, 1
    %s32 = scalar_select %p31, 0, %s30
    %s33 = sadd.s32 1, %s24
    %s34 = scalar_select %p31, %s33, %s24
    %p35 = scmp.ge.s32.totalorder %s34, 2
    %s36 = scalar_select %p35, 0, %s34
    %s37 = ssub.s32 %s24, %s36
    %s38 = ssub.s32 %s25, %s32
    %s39 = sor.u32 %s37, %s38
    %p40 = scmp.eq.s32.totalorder %s39, 0
    %s42 = sadd.s32 %s41, 1
    %s43 = scalar_select %p40, %s41, %s42
    %p46 = pneg %p40
    %p47 = scmp.eq.s32.totalorder %s17, 1
    %p48 = por %p46, %p47
    %p49 = scmp.ne.s32.totalorder %s41, %s44
    %p50 = scmp.eq.s32.totalorder %s17, 0
    %p51 = por %p49, %p50
    %p52 = scmp.ne.s32.totalorder %s41, %s44
    %p53 = scmp.eq.s32.totalorder %s22, 1
    %p54 = por %p52, %p53
    %p55 = scmp.ne.s32.totalorder %s44, %s45
    %p56 = scmp.eq.s32.totalorder %s22, 0
    %p57 = por %p55, %p56
    %p58 = scmp.ne.s32.totalorder %s44, %s45
    %p59 = scmp.eq.s32.totalorder %s23, 1
    %p60 = por %p58, %p59
    %p62 = scmp.ne.s32.totalorder %s45, %s61
    %p63 = scmp.eq.s32.totalorder %s23, 0
    %p64 = por %p62, %p63
    %s65 = ssub.s32 %s24, %s36
    %p66 = scmp.eq.s32.totalorder %s65, 0
    %s68 = sadd.s32 %s67, 1
    %s69 = scalar_select %p66, %s67, %s68
    %p72 = pneg %p66
    %p73 = scmp.eq.s32.totalorder %s17, 1
    %p74 = por %p72, %p73
    %p75 = scmp.ne.s32.totalorder %s67, %s70
    %p76 = scmp.eq.s32.totalorder %s17, 0
    %p77 = por %p75, %p76
    %p78 = scmp.ne.s32.totalorder %s67, %s70
    %p79 = scmp.eq.s32.totalorder %s22, 1
    %p80 = por %p78, %p79
    %p81 = scmp.ne.s32.totalorder %s70, %s71
    %p82 = scmp.eq.s32.totalorder %s22, 0
    %p83 = por %p81, %p82
    %p84 = scmp.ne.s32.totalorder %s70, %s71
    %p85 = scmp.eq.s32.totalorder %s23, 1
    %p86 = por %p84, %p85
    %p88 = scmp.ne.s32.totalorder %s71, %s87
    %p89 = scmp.eq.s32.totalorder %s23, 0
    %p90 = por %p88, %p89
    %s91 = ssub.s32 %s24, %s36
    %p92 = scmp.eq.s32.totalorder %s91, 0
    %s94 = sadd.s32 %s93, 1
    %s95 = scalar_select %p92, %s93, %s94
    %p98 = pneg %p92
    %p99 = scmp.eq.s32.totalorder %s17, 1
    %p100 = por %p98, %p99
    %p101 = scmp.ne.s32.totalorder %s93, %s96
    %p102 = scmp.eq.s32.totalorder %s17, 0
    %p103 = por %p101, %p102
    %p104 = scmp.ne.s32.totalorder %s93, %s96
    %p105 = scmp.eq.s32.totalorder %s22, 1
    %p106 = por %p104, %p105
    %p107 = scmp.ne.s32.totalorder %s96, %s97
    %p108 = scmp.eq.s32.totalorder %s22, 0
    %p109 = por %p107, %p108
    %p110 = scmp.ne.s32.totalorder %s96, %s97
    %p111 = scmp.eq.s32.totalorder %s23, 1
    %p112 = por %p110, %p111
    %p114 = scmp.ne.s32.totalorder %s97, %s113
    %p115 = scmp.eq.s32.totalorder %s23, 0
    %p116 = por %p114, %p115
    %s118 = sadd.s32 %s117, 1
    %p121 = scmp.eq.s32.totalorder %s17, 1
    %p122 = scmp.ne.s32.totalorder %s117, %s119
    %p123 = scmp.eq.s32.totalorder %s17, 0
    %p124 = por %p122, %p123
    %p125 = scmp.ne.s32.totalorder %s117, %s119
    %p126 = scmp.eq.s32.totalorder %s22, 1
    %p127 = por %p125, %p126
    %p128 = scmp.ne.s32.totalorder %s119, %s120
    %p129 = scmp.eq.s32.totalorder %s22, 0
    %p130 = por %p128, %p129
    %p131 = scmp.ne.s32.totalorder %s119, %s120
    %p132 = scmp.eq.s32.totalorder %s23, 1
    %p133 = por %p131, %p132
    %p135 = scmp.ne.s32.totalorder %s120, %s134
    %p136 = scmp.eq.s32.totalorder %s23, 0
    %p137 = por %p135, %p136
    %s139 = sadd.s32 %s138, 1
    %p142 = scmp.eq.s32.totalorder %s17, 1
    %p143 = scmp.ne.s32.totalorder %s138, %s140
    %p144 = scmp.eq.s32.totalorder %s17, 0
    %p145 = por %p143, %p144
    %p146 = scmp.ne.s32.totalorder %s138, %s140
    %p147 = scmp.eq.s32.totalorder %s22, 1
    %p148 = por %p146, %p147
    %p149 = scmp.ne.s32.totalorder %s140, %s141
    %p150 = scmp.eq.s32.totalorder %s22, 0
    %p151 = por %p149, %p150
    %p152 = scmp.ne.s32.totalorder %s140, %s141
    %p153 = scmp.eq.s32.totalorder %s23, 1
    %p154 = por %p152, %p153
    %p156 = scmp.ne.s32.totalorder %s141, %s155
    %p157 = scmp.eq.s32.totalorder %s23, 0
    %p158 = por %p156, %p157
    %s160 = sadd.s32 %s159, 1
    %p163 = scmp.eq.s32.totalorder %s17, 1
    %p164 = scmp.ne.s32.totalorder %s159, %s161
    %p165 = scmp.eq.s32.totalorder %s17, 0
    %p166 = por %p164, %p165
    %p167 = scmp.ne.s32.totalorder %s159, %s161
    %p168 = scmp.eq.s32.totalorder %s22, 1
    %p169 = por %p167, %p168
    %p170 = scmp.ne.s32.totalorder %s161, %s162
    %p171 = scmp.eq.s32.totalorder %s22, 0
    %p172 = por %p170, %p171
    %p173 = scmp.ne.s32.totalorder %s161, %s162
    %p174 = scmp.eq.s32.totalorder %s23, 1
    %p175 = por %p173, %p174
    %p177 = scmp.ne.s32.totalorder %s162, %s176
    %p178 = scmp.eq.s32.totalorder %s23, 0
    %p179 = por %p177, %p178
    %s181 = sadd.s32 %s180, 1
    %p184 = scmp.eq.s32.totalorder %s17, 1
    %p185 = scmp.ne.s32.totalorder %s180, %s182
    %p186 = scmp.eq.s32.totalorder %s17, 0
    %p187 = por %p185, %p186
    %p188 = scmp.ne.s32.totalorder %s180, %s182
    %p189 = scmp.eq.s32.totalorder %s22, 1
    %p190 = por %p188, %p189
    %p191 = scmp.ne.s32.totalorder %s182, %s183
    %p192 = scmp.eq.s32.totalorder %s22, 0
    %p193 = por %p191, %p192
    %p194 = scmp.ne.s32.totalorder %s182, %s183
    %p195 = scmp.eq.s32.totalorder %s23, 1
    %p196 = por %p194, %p195
    %p198 = scmp.ne.s32.totalorder %s183, %s197
    %p199 = scmp.eq.s32.totalorder %s23, 0
    %p200 = por %p198, %p199
    %s202 = sadd.s32 %s201, 1
    %p205 = scmp.eq.s32.totalorder %s17, 1
    %p206 = scmp.ne.s32.totalorder %s201, %s203
    %p207 = scmp.eq.s32.totalorder %s17, 0
    %p208 = por %p206, %p207
    %p209 = scmp.ne.s32.totalorder %s201, %s203
    %p210 = scmp.eq.s32.totalorder %s22, 1
    %p211 = por %p209, %p210
    %p212 = scmp.ne.s32.totalorder %s203, %s204
    %p213 = scmp.eq.s32.totalorder %s22, 0
    %p214 = por %p212, %p213
    %p215 = scmp.ne.s32.totalorder %s203, %s204
    %p216 = scmp.eq.s32.totalorder %s23, 1
    %p217 = por %p215, %p216
    %p219 = scmp.ne.s32.totalorder %s204, %s218
    %p220 = scmp.eq.s32.totalorder %s23, 0
    %p221 = por %p219, %p220
    %s223 = sadd.s32 %s222, 1
    %p226 = scmp.eq.s32.totalorder %s17, 1
    %p227 = scmp.ne.s32.totalorder %s222, %s224
    %p228 = scmp.eq.s32.totalorder %s17, 0
    %p229 = por %p227, %p228
    %p230 = scmp.ne.s32.totalorder %s222, %s224
    %p231 = scmp.eq.s32.totalorder %s22, 1
    %p232 = por %p230, %p231
    %p233 = scmp.ne.s32.totalorder %s224, %s225
    %p234 = scmp.eq.s32.totalorder %s22, 0
    %p235 = por %p233, %p234
    %p236 = scmp.ne.s32.totalorder %s224, %s225
    %p237 = scmp.eq.s32.totalorder %s23, 1
    %p238 = por %p236, %p237
    %p240 = scmp.ne.s32.totalorder %s225, %s239
    %p241 = scmp.eq.s32.totalorder %s23, 0
    %p242 = por %p240, %p241
    %s244 = sadd.s32 %s243, 1
    %p247 = scmp.eq.s32.totalorder %s17, 1
    %p248 = scmp.ne.s32.totalorder %s243, %s245
    %p249 = scmp.eq.s32.totalorder %s17, 0
    %p250 = por %p248, %p249
    %p251 = scmp.ne.s32.totalorder %s243, %s245
    %p252 = scmp.eq.s32.totalorder %s22, 1
    %p253 = por %p251, %p252
    %p254 = scmp.ne.s32.totalorder %s245, %s246
    %p255 = scmp.eq.s32.totalorder %s22, 0
    %p256 = por %p254, %p255
    %p257 = scmp.ne.s32.totalorder %s245, %s246
    %p258 = scmp.eq.s32.totalorder %s23, 1
    %p259 = por %p257, %p258
    %p261 = scmp.ne.s32.totalorder %s246, %s260
    %p262 = scmp.eq.s32.totalorder %s23, 0
    %p263 = por %p261, %p262
    %s265 = sadd.s32 %s264, 1
    %p268 = scmp.eq.s32.totalorder %s17, 1
    %p269 = scmp.ne.s32.totalorder %s264, %s266
    %p270 = scmp.eq.s32.totalorder %s17, 0
    %p271 = por %p269, %p270
    %p272 = scmp.ne.s32.totalorder %s264, %s266
    %p273 = scmp.eq.s32.totalorder %s22, 1
    %p274 = por %p272, %p273
    %p275 = scmp.ne.s32.totalorder %s266, %s267
    %p276 = scmp.eq.s32.totalorder %s22, 0
    %p277 = por %p275, %p276
    %p278 = scmp.ne.s32.totalorder %s266, %s267
    %p279 = scmp.eq.s32.totalorder %s23, 1
    %p280 = por %p278, %p279
    %p282 = scmp.ne.s32.totalorder %s267, %s281
    %p283 = scmp.eq.s32.totalorder %s23, 0
    %p284 = por %p282, %p283
    %s285 = ssub.s32 %s24, %s36
    %s286 = ssub.s32 %s25, %s32
    %s287 = sor.u32 %s285, %s286
    %p288 = scmp.eq.s32.totalorder %s287, 0
    %s290 = sadd.s32 %s289, 1
    %s291 = scalar_select %p288, %s289, %s290
    %p294 = pneg %p288
    %p295 = scmp.eq.s32.totalorder %s17, 1
    %p296 = por %p294, %p295
    %p297 = scmp.ne.s32.totalorder %s289, %s292
    %p298 = scmp.eq.s32.totalorder %s17, 0
    %p299 = por %p297, %p298
    %p300 = scmp.ne.s32.totalorder %s289, %s292
    %p301 = scmp.eq.s32.totalorder %s22, 1
    %p302 = por %p300, %p301
    %p303 = scmp.ne.s32.totalorder %s292, %s293
    %p304 = scmp.eq.s32.totalorder %s22, 0
    %p305 = por %p303, %p304
    %p306 = scmp.ne.s32.totalorder %s292, %s293
    %p307 = scmp.eq.s32.totalorder %s23, 1
    %p308 = por %p306, %p307
    %p310 = scmp.ne.s32.totalorder %s293, %s309
    %p311 = scmp.eq.s32.totalorder %s23, 0
    %p312 = por %p310, %p311
    %p313 = scmp.le.s32.totalorder 1, %s17
    %p314 = scmp.lt.s32.totalorder %s17, 3
    %p315 = pnand %p313, %p314
    %p316 = pneg %p315
    // Predicated region
    $region9: #{transformer_adapter2_forward.8} parent=5 // pred_check
      _
    $region10: #{transformer_adapter2_forward.8} parent=5 // pred_check_branch
      %318 = sbr.rel (%p315) target = $region12
    $region11: #{transformer_adapter2_forward.8} parent=5 // pred_region
      %s319 = ssub.s32 %s17, 1
      // Predicated region
      $region13: #{transformer_adapter2_forward.8} parent=11 // pred_check
        %p320 = pneg %p130
      $region14: #{transformer_adapter2_forward.8} parent=11 // pred_check_branch
        %322 = sbr.rel (%p320) target = $region16
      $region15: #{transformer_adapter2_forward.8} parent=11 // pred_region
        _
      $region16: #{transformer_adapter2_forward.8} parent=11 // pred_fallthru
        _
      // Predicated region
      $region17: #{transformer_adapter2_forward.8} parent=11 // pred_check
        %p323 = pneg %p151
      $region18: #{transformer_adapter2_forward.8} parent=11 // pred_check_branch
        %325 = sbr.rel (%p323) target = $region20
      $region19: #{transformer_adapter2_forward.8} parent=11 // pred_region
        _
      $region20: #{transformer_adapter2_forward.8} parent=11 // pred_fallthru
        _
      // Predicated region
      $region21: #{transformer_adapter2_forward.8} parent=11 // pred_check
        %p326 = pneg %p172
      $region22: #{transformer_adapter2_forward.8} parent=11 // pred_check_branch
        %328 = sbr.rel (%p326) target = $region24
      $region23: #{transformer_adapter2_forward.8} parent=11 // pred_region
        _
      $region24: #{transformer_adapter2_forward.8} parent=11 // pred_fallthru
        _
      // Predicated region
      $region25: #{transformer_adapter2_forward.8} parent=11 // pred_check
        %p329 = pneg %p193
      $region26: #{transformer_adapter2_forward.8} parent=11 // pred_check_branch
        %331 = sbr.rel (%p329) target = $region28
      $region27: #{transformer_adapter2_forward.8} parent=11 // pred_region
        _
      $region28: #{transformer_adapter2_forward.8} parent=11 // pred_fallthru
        _
      // Predicated region
      $region29: #{transformer_adapter2_forward.8} parent=11 // pred_check
        %p332 = pneg %p214
      $region30: #{transformer_adapter2_forward.8} parent=11 // pred_check_branch
        %334 = sbr.rel (%p332) target = $region32
      $region31: #{transformer_adapter2_forward.8} parent=11 // pred_region
        _
      $region32: #{transformer_adapter2_forward.8} parent=11 // pred_fallthru
        _
      // Predicated region
      $region33: #{transformer_adapter2_forward.8} parent=11 // pred_check
        %p335 = pneg %p235
      $region34: #{transformer_adapter2_forward.8} parent=11 // pred_check_branch
        %337 = sbr.rel (%p335) target = $region36
      $region35: #{transformer_adapter2_forward.8} parent=11 // pred_region
        _
      $region36: #{transformer_adapter2_forward.8} parent=11 // pred_fallthru
        _
      // Predicated region
      $region37: #{transformer_adapter2_forward.8} parent=11 // pred_check
        %p338 = pneg %p256
      $region38: #{transformer_adapter2_forward.8} parent=11 // pred_check_branch
        %340 = sbr.rel (%p338) target = $region40
      $region39: #{transformer_adapter2_forward.8} parent=11 // pred_region
        _
      $region40: #{transformer_adapter2_forward.8} parent=11 // pred_fallthru
        _
      // Predicated region
      $region41: #{transformer_adapter2_forward.8} parent=11 // pred_check
        %p341 = pneg %p277
      $region42: #{transformer_adapter2_forward.8} parent=11 // pred_check_branch
        %343 = sbr.rel (%p341) target = $region44
      $region43: #{transformer_adapter2_forward.8} parent=11 // pred_region
        _
      $region44: #{transformer_adapter2_forward.8} parent=11 // pred_fallthru
        _
    $region12: #{transformer_adapter2_forward.8} parent=5 // pred_fallthru
      _
    %p344 = scmp.lt.s32.totalorder %s17, 2
    // Predicated region
    $region45: #{transformer_adapter2_forward.8} parent=5 // pred_check
      %p345 = pneg %p344
    $region46: #{transformer_adapter2_forward.8} parent=5 // pred_check_branch
      %347 = sbr.rel (%p345) target = $region48
    $region47: #{transformer_adapter2_forward.8} parent=5 // pred_region
      // Predicated region
      $region49: #{transformer_adapter2_forward.8} parent=47 // pred_check
        %p348 = pneg %p51
      $region50: #{transformer_adapter2_forward.8} parent=47 // pred_check_branch
        %350 = sbr.rel (%p348) target = $region52
      $region51: #{transformer_adapter2_forward.8} parent=47 // pred_region
        %p351 = scmp.lt.s32.totalorder %s24, 1
        %s352 = scalar_select %p351, %s24, 1
        %p353 = scmp.lt.s32.totalorder %s25, 0
        %s354 = scalar_select %p353, %s25, 0
        %s355 = sadd.s32 %s354, %s352
        %s356 = smul.addr %s355, 8
        %s357 = scalar_lea.vmem %s0, %s356
      $region52: #{transformer_adapter2_forward.8} parent=47 // pred_fallthru
        _
      // Predicated region
      $region53: #{transformer_adapter2_forward.8} parent=47 // pred_check
        %p358 = pneg %p77
      $region54: #{transformer_adapter2_forward.8} parent=47 // pred_check_branch
        %360 = sbr.rel (%p358) target = $region56
      $region55: #{transformer_adapter2_forward.8} parent=47 // pred_region
        %p361 = scmp.lt.s32.totalorder %s24, 1
        %s362 = scalar_select %p361, %s24, 1
        %s363 = smul.addr %s362, 8
        %s364 = scalar_lea.vmem %s1, %s363
      $region56: #{transformer_adapter2_forward.8} parent=47 // pred_fallthru
        _
      // Predicated region
      $region57: #{transformer_adapter2_forward.8} parent=47 // pred_check
        %p365 = pneg %p103
      $region58: #{transformer_adapter2_forward.8} parent=47 // pred_check_branch
        %367 = sbr.rel (%p365) target = $region60
      $region59: #{transformer_adapter2_forward.8} parent=47 // pred_region
        %p368 = scmp.lt.s32.totalorder %s24, 1
        %s369 = scalar_select %p368, %s24, 1
        %s370 = scalar_lea.vmem %s2, %s369
      $region60: #{transformer_adapter2_forward.8} parent=47 // pred_fallthru
        _
    $region48: #{transformer_adapter2_forward.8} parent=5 // pred_fallthru
      _
    %p371 = scmp.le.s32.totalorder 1, %s17
    %p372 = scmp.lt.s32.totalorder %s17, 3
    %p373 = pnand %p371, %p372
    %p374 = pneg %p373
    // Predicated region
    $region61: #{transformer_adapter2_forward.8} parent=5 // pred_check
      _
    $region62: #{transformer_adapter2_forward.8} parent=5 // pred_check_branch
      %376 = sbr.rel (%p373) target = $region64
    $region63: #{transformer_adapter2_forward.8} parent=5 // pred_region
      %s377 = ssub.s32 %s17, 1
      %p378 = scmp.lt.s32.totalorder %s26, 1
      %s379 = scalar_select %p378, %s26, 1
      %p380 = scmp.lt.s32.totalorder %s27, 0
      %s381 = scalar_select %p380, %s27, 0
      %s382 = sadd.s32 %s381, %s379
      %s383 = smul.addr %s382, 8
      %s384 = scalar_lea.vmem %s0, %s383
      %p385 = pneg %p57
      %p386 = pneg %p54
      %p387 = scmp.lt.s32.totalorder %s26, 1
      %s388 = scalar_select %p387, %s26, 1
      %s389 = smul.addr %s388, 8
      %s390 = scalar_lea.vmem %s1, %s389
      %p391 = pneg %p83
      %p392 = pneg %p80
      %p393 = scmp.lt.s32.totalorder %s26, 1
      %s394 = scalar_select %p393, %s26, 1
      %s395 = scalar_lea.vmem %s2, %s394
      %p396 = pneg %p109
      %p397 = pneg %p106
      %p398 = pneg %p130
      %p399 = pneg %p127
      %p400 = pneg %p151
      %p401 = pneg %p148
      %p402 = pneg %p172
      %p403 = pneg %p169
      %p404 = pneg %p193
      %p405 = pneg %p190
      %p406 = pneg %p214
      %p407 = pneg %p211
      %p408 = pneg %p235
      %p409 = pneg %p232
      %p410 = pneg %p256
      %p411 = pneg %p253
      %p412 = pneg %p277
      %p413 = pneg %p274
      %p414 = pneg %p305
      %p415 = pneg %p302
      %p416 = scmp.lt.s32.totalorder %s26, 1
      %s417 = scalar_select %p416, %s26, 1
      %p418 = scmp.lt.s32.totalorder %s27, 0
      %s419 = scalar_select %p418, %s27, 0
      %s420 = sadd.s32 %s419, %s417
      %s421 = smul.addr %s420, 8
      %s422 = scalar_lea.vmem %s11, %s421
      %p423 = scmp.lt.s32.totalorder %s26, 1
      %s424 = scalar_select %p423, %s26, 1
      %p425 = scmp.lt.s32.totalorder %s27, 0
      %s426 = scalar_select %p425, %s27, 0
      %s427 = sadd.s32 %s426, %s424
      %s428 = smul.addr %s427, 8
      %s429 = scalar_lea.vmem %s0, %s428
      %p430 = scmp.lt.s32.totalorder %s26, 1
      %s431 = scalar_select %p430, %s26, 1
      %s432 = smul.addr %s431, 8
      %s433 = scalar_lea.vmem %s1, %s432
      %p434 = scmp.lt.s32.totalorder %s26, 1
      %s435 = scalar_select %p434, %s26, 1
      %s436 = scalar_lea.vmem %s2, %s435
      %p437 = scmp.lt.s32.totalorder %s26, 1
      %s438 = scalar_select %p437, %s26, 1
      %p439 = scmp.lt.s32.totalorder %s27, 0
      %s440 = scalar_select %p439, %s27, 0
      %s441 = sadd.s32 %s440, %s438
      %s442 = smul.addr %s441, 8
      %s443 = scalar_lea.vmem %s11, %s442
      %v445 = vld [vmem:[%s429] sm:$0xff]
      %v446 = vld [vmem:[%s433] sm:$0xff]
      %v447 = vpack.c.bf16 %v445, %v445
      %v448 = vld [vmem:[%s3] sm:$0xf]
      %v449 = vld [vmem:[%s3 + $0x4] sm:$0xf]
      %v450 = vld [vmem:[%s3 + $0x8] sm:$0xf]
      %v451 = vld [vmem:[%s3 + $0xc] sm:$0xf]
      %v452 = vld [vmem:[%s4] sm:$0x1]
      %v454 = vlaneseq
      %v455 = vshrl.u32 %v454, 7
      %v456 = vsub.s32 0, %v455
      %v457 = vrot.slane %v452, %v456
      %v463 = vunpack.c.l.b16 %v448
      %v464 = vunpack.c.l.b16 %v449
      %v465 = vunpack.c.l.b16 %v450
      %v466 = vunpack.c.l.b16 %v451
      %v467 = vpack.c.b16 %v464, %v463
      %v468 = vpack.c.b16 %v466, %v465
      %vm471 = vcmask 261120
      %v473 = vsel %vm471, %v447, 0
      %475 = vmatprep.subr.bf16.mxu0 0
      %476 = vmatpush1.bf16.msra.mxu0 %v467
      %477 = vmatprep.subr.bf16.mxu0 0
      %478 = vmatpush1.bf16.msra.mxu0 %v468
      %479 = vmatprep.subr.bf16.mxu0 0
      %480 = vmatpush1.bf16.msra.mxu0 0
      %481 = vmatprep.subr.bf16.mxu0 0
      %482 = vmatpush1.bf16.msra.mxu0 0
      %483 = vmatprep.subr.bf16.mxu0 0
      %484 = vmatpush1.bf16.msra.mxu0 0
      %485 = vmatprep.subr.bf16.mxu0 0
      %486 = vmatpush1.bf16.msra.mxu0 0
      %487 = vmatprep.subr.bf16.mxu0 0
      %488 = vmatpush1.bf16.msra.mxu0 0
      %489 = vmatprep.subr.bf16.mxu0 0
      %490 = vmatpush1.bf16.msra.mxu0 0
      %491 = vmatprep.subr.bf16.mxu0 0
      %492 = vmatpush1.bf16.msra.mxu0 0
      %493 = vmatprep.subr.bf16.mxu0 0
      %494 = vmatpush1.bf16.msra.mxu0 0
      %495 = vmatprep.subr.bf16.mxu0 0
      %496 = vmatpush1.bf16.msra.mxu0 0
      %497 = vmatprep.subr.bf16.mxu0 0
      %498 = vmatpush1.bf16.msra.mxu0 0
      %499 = vmatprep.subr.bf16.mxu0 0
      %500 = vmatpush1.bf16.msra.mxu0 0
      %501 = vmatprep.subr.bf16.mxu0 0
      %502 = vmatpush1.bf16.msra.mxu0 0
      %503 = vmatprep.subr.bf16.mxu0 0
      %504 = vmatpush1.bf16.msra.mxu0 0
      %505 = vmatprep.subr.bf16.mxu0 0
      %506 = vmatpush1.bf16.msra.mxu0 0
      %507 = vmatprep.mubr.bf16.mxu0 0
      %508 = vmatmul.mubr.bf16.gmra.mrb[0].mxu0 %v473
      %v509 = vpop.f32.mrb[0].mxu0
      %v510 = vadd.f32 %v457, %v509
      %v511 = vpop.f32.mrb[0].mxu0
      %v512 = vpop.f32.mrb[0].mxu0
      %v513 = vpop.f32.mrb[0].mxu0
      %514 = vdwg.mxu0
      %v515 = vpack.c.bf16 %v510, %v510
      %v516 = vpack.c.bf16 %v446, %v446
      %v517 = vld [vmem:[%s5] sm:$0xf]
      %v518 = vld [vmem:[%s5 + $0x4] sm:$0xf]
      %v519 = vld [vmem:[%s5 + $0x8] sm:$0xf]
      %v520 = vld [vmem:[%s5 + $0xc] sm:$0xf]
      %v521 = vld [vmem:[%s6] sm:$0x1]
      %v523 = vlaneseq
      %v524 = vshrl.u32 %v523, 7
      %v525 = vsub.s32 0, %v524
      %v526 = vrot.slane %v521, %v525
      %v532 = vunpack.c.l.b16 %v517
      %v533 = vunpack.c.l.b16 %v518
      %v534 = vunpack.c.l.b16 %v519
      %v535 = vunpack.c.l.b16 %v520
      %v536 = vpack.c.b16 %v533, %v532
      %v537 = vpack.c.b16 %v535, %v534
      %v541 = vsel %vm471, %v516, 0
      %543 = vmatprep.subr.bf16.mxu0 0
      %544 = vmatpush1.bf16.msra.mxu0 %v536
      %545 = vmatprep.subr.bf16.mxu0 0
      %546 = vmatpush1.bf16.msra.mxu0 %v537
      %547 = vmatprep.subr.bf16.mxu0 0
      %548 = vmatpush1.bf16.msra.mxu0 0
      %549 = vmatprep.subr.bf16.mxu0 0
      %550 = vmatpush1.bf16.msra.mxu0 0
      %551 = vmatprep.subr.bf16.mxu0 0
      %552 = vmatpush1.bf16.msra.mxu0 0
      %553 = vmatprep.subr.bf16.mxu0 0
      %554 = vmatpush1.bf16.msra.mxu0 0
      %555 = vmatprep.subr.bf16.mxu0 0
      %556 = vmatpush1.bf16.msra.mxu0 0
      %557 = vmatprep.subr.bf16.mxu0 0
      %558 = vmatpush1.bf16.msra.mxu0 0
      %559 = vmatprep.subr.bf16.mxu0 0
      %560 = vmatpush1.bf16.msra.mxu0 0
      %561 = vmatprep.subr.bf16.mxu0 0
      %562 = vmatpush1.bf16.msra.mxu0 0
      %563 = vmatprep.subr.bf16.mxu0 0
      %564 = vmatpush1.bf16.msra.mxu0 0
      %565 = vmatprep.subr.bf16.mxu0 0
      %566 = vmatpush1.bf16.msra.mxu0 0
      %567 = vmatprep.subr.bf16.mxu0 0
      %568 = vmatpush1.bf16.msra.mxu0 0
      %569 = vmatprep.subr.bf16.mxu0 0
      %570 = vmatpush1.bf16.msra.mxu0 0
      %571 = vmatprep.subr.bf16.mxu0 0
      %572 = vmatpush1.bf16.msra.mxu0 0
      %573 = vmatprep.subr.bf16.mxu0 0
      %574 = vmatpush1.bf16.msra.mxu0 0
      %575 = vmatprep.mubr.bf16.mxu0 0
      %576 = vmatmul.mubr.bf16.gmra.mrb[0].mxu0 %v541
      %v577 = vpop.f32.mrb[0].mxu0
      %v578 = vadd.f32 %v526, %v577
      %v579 = vpop.f32.mrb[0].mxu0
      %v580 = vpop.f32.mrb[0].mxu0
      %v581 = vpop.f32.mrb[0].mxu0
      %582 = vdwg.mxu0
      %v583 = vpack.c.bf16 %v578, %v578
      %585 = vrot.lane.b32.xlu0 %v515, 120
      %v586 = vpop.permute.xlu0 %585
      %587 = vrot.lane.b32.xlu0 %v515, 112
      %v588 = vpop.permute.xlu0 %587
      %589 = vrot.lane.b32.xlu0 %v515, 104
      %v590 = vpop.permute.xlu0 %589
      %592 = vrot.lane.b32.xlu0 %v583, 120
      %v593 = vpop.permute.xlu0 %592
      %595 = vrot.lane.b32.xlu0 %v583, 112
      %v596 = vpop.permute.xlu0 %595
      %598 = vrot.lane.b32.xlu0 %v583, 104
      %v599 = vpop.permute.xlu0 %598
      %v601 = vld [vmem:[%s436] sm:$0x1]
      %vm602 = vcmp.ne.s32.totalorder %v601, 0
      %s603 = smul.u32 %s27, 8
      %v604 = vlaneseq
      %v605 = vshrl.u32 %v604, 7
      %v606 = vstv %s603
      %v607 = vadd.s32 %v606, %v605
      %v608 = vlaneseq
      %v609 = vand.u32 %v608, 127
      %vm610 = vcmp.gt.s32.totalorder %v609, %v607
      %v611 = vsel %vm602, 1, 0
      %v612 = vlaneseq
      %v613 = vshrl.u32 %v612, 7
      %v614 = vsub.s32 0, %v613
      %v615 = vrot.slane %v611, %v614
      %vm616 = vcmp.eq.s32.totalorder %v615, 1
      %vm617 = vmor %vm616, %vm610
      %v618 = vsel %vm617, -1e+09, 0.0
      %619 = vxpose.xlu0.c.b16.start [1/8] %v583, 128
      %620 = vxpose.xlu0.c.b16.cont [2/8] 0, 128
      %621 = vxpose.xlu0.c.b16.cont [3/8] 0, 128
      %622 = vxpose.xlu0.c.b16.cont [4/8] 0, 128
      %623 = vxpose.xlu0.c.b16.cont [5/8] 0, 128
      %624 = vxpose.xlu0.c.b16.cont [6/8] 0, 128
      %625 = vxpose.xlu0.c.b16.cont [7/8] 0, 128
      %626 = vxpose.xlu0.c.b16.end [8/8] 0, 128
      %v627 = vpop.trf.xlu0
      %v628 = vpop.trf.xlu0
      %v629 = vpop.trf.xlu0
      %v630 = vpop.trf.xlu0
      %v631 = vpop.trf.xlu0
      %v632 = vpop.trf.xlu0
      %v633 = vpop.trf.xlu0
      %v634 = vpop.trf.xlu0
      %635 = vxpose.xlu0.c.b16.start [1/8] %v593, 128
      %636 = vxpose.xlu0.c.b16.cont [2/8] 0, 128
      %637 = vxpose.xlu0.c.b16.cont [3/8] 0, 128
      %638 = vxpose.xlu0.c.b16.cont [4/8] 0, 128
      %639 = vxpose.xlu0.c.b16.cont [5/8] 0, 128
      %640 = vxpose.xlu0.c.b16.cont [6/8] 0, 128
      %641 = vxpose.xlu0.c.b16.cont [7/8] 0, 128
      %642 = vxpose.xlu0.c.b16.end [8/8] 0, 128
      %v643 = vpop.trf.xlu0
      %v644 = vpop.trf.xlu0
      %v645 = vpop.trf.xlu0
      %v646 = vpop.trf.xlu0
      %v647 = vpop.trf.xlu0
      %v648 = vpop.trf.xlu0
      %v649 = vpop.trf.xlu0
      %v650 = vpop.trf.xlu0
      %651 = vxpose.xlu0.c.b16.start [1/8] %v596, 128
      %652 = vxpose.xlu0.c.b16.cont [2/8] 0, 128
      %653 = vxpose.xlu0.c.b16.cont [3/8] 0, 128
      %654 = vxpose.xlu0.c.b16.cont [4/8] 0, 128
      %655 = vxpose.xlu0.c.b16.cont [5/8] 0, 128
      %656 = vxpose.xlu0.c.b16.cont [6/8] 0, 128
      %657 = vxpose.xlu0.c.b16.cont [7/8] 0, 128
      %658 = vxpose.xlu0.c.b16.end [8/8] 0, 128
      %v659 = vpop.trf.xlu0
      %v660 = vpop.trf.xlu0
      %v661 = vpop.trf.xlu0
      %v662 = vpop.trf.xlu0
      %v663 = vpop.trf.xlu0
      %v664 = vpop.trf.xlu0
      %v665 = vpop.trf.xlu0
      %v666 = vpop.trf.xlu0
      %667 = vxpose.xlu0.c.b16.start [1/8] %v599, 128
      %668 = vxpose.xlu0.c.b16.cont [2/8] 0, 128
      %669 = vxpose.xlu0.c.b16.cont [3/8] 0, 128
      %670 = vxpose.xlu0.c.b16.cont [4/8] 0, 128
      %671 = vxpose.xlu0.c.b16.cont [5/8] 0, 128
      %672 = vxpose.xlu0.c.b16.cont [6/8] 0, 128
      %673 = vxpose.xlu0.c.b16.cont [7/8] 0, 128
      %674 = vxpose.xlu0.c.b16.end [8/8] 0, 128
      %v675 = vpop.trf.xlu0
      %v676 = vpop.trf.xlu0
      %v677 = vpop.trf.xlu0
      %v678 = vpop.trf.xlu0
      %v679 = vpop.trf.xlu0
      %v680 = vpop.trf.xlu0
      %v681 = vpop.trf.xlu0
      %v682 = vpop.trf.xlu0
      %vm683 = vcmask 64512
      %v685 = vsel %vm683, %v515, 0
      %vm687 = vcmask 1043456
      %v689 = vsel %vm687, %v627, 0
      %691 = vmatprep.subr.bf16.mxu0 0
      %692 = vmatpush1.bf16.msra.mxu0 %v689
      %693 = vmatprep.subr.bf16.mxu0 0
      %694 = vmatpush1.bf16.msra.mxu0 0
      %695 = vmatprep.subr.bf16.mxu0 0
      %696 = vmatpush1.bf16.msra.mxu0 0
      %697 = vmatprep.subr.bf16.mxu0 0
      %698 = vmatpush1.bf16.msra.mxu0 0
      %699 = vmatprep.subr.bf16.mxu0 0
      %700 = vmatpush1.bf16.msra.mxu0 0
      %701 = vmatprep.subr.bf16.mxu0 0
      %702 = vmatpush1.bf16.msra.mxu0 0
      %703 = vmatprep.subr.bf16.mxu0 0
      %704 = vmatpush1.bf16.msra.mxu0 0
      %705 = vmatprep.subr.bf16.mxu0 0
      %706 = vmatpush1.bf16.msra.mxu0 0
      %707 = vmatprep.subr.bf16.mxu0 0
      %708 = vmatpush1.bf16.msra.mxu0 0
      %709 = vmatprep.subr.bf16.mxu0 0
      %710 = vmatpush1.bf16.msra.mxu0 0
      %711 = vmatprep.subr.bf16.mxu0 0
      %712 = vmatpush1.bf16.msra.mxu0 0
      %713 = vmatprep.subr.bf16.mxu0 0
      %714 = vmatpush1.bf16.msra.mxu0 0
      %715 = vmatprep.subr.bf16.mxu0 0
      %716 = vmatpush1.bf16.msra.mxu0 0
      %717 = vmatprep.subr.bf16.mxu0 0
      %718 = vmatpush1.bf16.msra.mxu0 0
      %719 = vmatprep.subr.bf16.mxu0 0
      %720 = vmatpush1.bf16.msra.mxu0 0
      %721 = vmatprep.subr.bf16.mxu0 0
      %722 = vmatpush1.bf16.msra.mxu0 0
      %723 = vmatprep.mubr.bf16.mxu0 0
      %724 = vmatmul.mubr.bf16.gmra.mrb[0].mxu0 %v685
      %v725 = vpop.f32.mrb[0].mxu0
      %v726 = vadd.f32 %v618, %v725
      %v727 = vpop.f32.mrb[0].mxu0
      %v728 = vpop.f32.mrb[0].mxu0
      %v729 = vpop.f32.mrb[0].mxu0
      %730 = vdwg.mxu0
      %v732 = vsel %vm683, %v586, 0
      %v735 = vsel %vm687, %v643, 0
      %737 = vmatprep.subr.bf16.mxu0 0
      %738 = vmatpush1.bf16.msra.mxu0 %v735
      %739 = vmatprep.subr.bf16.mxu0 0
      %740 = vmatpush1.bf16.msra.mxu0 0
      %741 = vmatprep.subr.bf16.mxu0 0
      %742 = vmatpush1.bf16.msra.mxu0 0
      %743 = vmatprep.subr.bf16.mxu0 0
      %744 = vmatpush1.bf16.msra.mxu0 0
      %745 = vmatprep.subr.bf16.mxu0 0
      %746 = vmatpush1.bf16.msra.mxu0 0
      %747 = vmatprep.subr.bf16.mxu0 0
      %748 = vmatpush1.bf16.msra.mxu0 0
      %749 = vmatprep.subr.bf16.mxu0 0
      %750 = vmatpush1.bf16.msra.mxu0 0
      %751 = vmatprep.subr.bf16.mxu0 0
      %752 = vmatpush1.bf16.msra.mxu0 0
      %753 = vmatprep.subr.bf16.mxu0 0
      %754 = vmatpush1.bf16.msra.mxu0 0
      %755 = vmatprep.subr.bf16.mxu0 0
      %756 = vmatpush1.bf16.msra.mxu0 0
      %757 = vmatprep.subr.bf16.mxu0 0
      %758 = vmatpush1.bf16.msra.mxu0 0
      %759 = vmatprep.subr.bf16.mxu0 0
      %760 = vmatpush1.bf16.msra.mxu0 0
      %761 = vmatprep.subr.bf16.mxu0 0
      %762 = vmatpush1.bf16.msra.mxu0 0
      %763 = vmatprep.subr.bf16.mxu0 0
      %764 = vmatpush1.bf16.msra.mxu0 0
      %765 = vmatprep.subr.bf16.mxu0 0
      %766 = vmatpush1.bf16.msra.mxu0 0
      %767 = vmatprep.subr.bf16.mxu0 0
      %768 = vmatpush1.bf16.msra.mxu0 0
      %769 = vmatprep.mubr.bf16.mxu0 0
      %770 = vmatmul.mubr.bf16.gmra.mrb[0].mxu0 %v732
      %v771 = vpop.f32.mrb[0].mxu0
      %v772 = vadd.f32 %v618, %v771
      %v773 = vpop.f32.mrb[0].mxu0
      %v774 = vpop.f32.mrb[0].mxu0
      %v775 = vpop.f32.mrb[0].mxu0
      %776 = vdwg.mxu0
      %v778 = vsel %vm683, %v588, 0
      %v781 = vsel %vm687, %v659, 0
      %783 = vmatprep.subr.bf16.mxu0 0
      %784 = vmatpush1.bf16.msra.mxu0 %v781
      %785 = vmatprep.subr.bf16.mxu0 0
      %786 = vmatpush1.bf16.msra.mxu0 0
      %787 = vmatprep.subr.bf16.mxu0 0
      %788 = vmatpush1.bf16.msra.mxu0 0
      %789 = vmatprep.subr.bf16.mxu0 0
      %790 = vmatpush1.bf16.msra.mxu0 0
      %791 = vmatprep.subr.bf16.mxu0 0
      %792 = vmatpush1.bf16.msra.mxu0 0
      %793 = vmatprep.subr.bf16.mxu0 0
      %794 = vmatpush1.bf16.msra.mxu0 0
      %795 = vmatprep.subr.bf16.mxu0 0
      %796 = vmatpush1.bf16.msra.mxu0 0
      %797 = vmatprep.subr.bf16.mxu0 0
      %798 = vmatpush1.bf16.msra.mxu0 0
      %799 = vmatprep.subr.bf16.mxu0 0
      %800 = vmatpush1.bf16.msra.mxu0 0
      %801 = vmatprep.subr.bf16.mxu0 0
      %802 = vmatpush1.bf16.msra.mxu0 0
      %803 = vmatprep.subr.bf16.mxu0 0
      %804 = vmatpush1.bf16.msra.mxu0 0
      %805 = vmatprep.subr.bf16.mxu0 0
      %806 = vmatpush1.bf16.msra.mxu0 0
      %807 = vmatprep.subr.bf16.mxu0 0
      %808 = vmatpush1.bf16.msra.mxu0 0
      %809 = vmatprep.subr.bf16.mxu0 0
      %810 = vmatpush1.bf16.msra.mxu0 0
      %811 = vmatprep.subr.bf16.mxu0 0
      %812 = vmatpush1.bf16.msra.mxu0 0
      %813 = vmatprep.subr.bf16.mxu0 0
      %814 = vmatpush1.bf16.msra.mxu0 0
      %815 = vmatprep.mubr.bf16.mxu0 0
      %816 = vmatmul.mubr.bf16.gmra.mrb[0].mxu0 %v778
      %v817 = vpop.f32.mrb[0].mxu0
      %v818 = vadd.f32 %v618, %v817
      %v819 = vpop.f32.mrb[0].mxu0
      %v820 = vpop.f32.mrb[0].mxu0
      %v821 = vpop.f32.mrb[0].mxu0
      %822 = vdwg.mxu0
      %v824 = vsel %vm683, %v590, 0
      %v827 = vsel %vm687, %v675, 0
      %829 = vmatprep.subr.bf16.mxu0 0
      %830 = vmatpush1.bf16.msra.mxu0 %v827
      %831 = vmatprep.subr.bf16.mxu0 0
      %832 = vmatpush1.bf16.msra.mxu0 0
      %833 = vmatprep.subr.bf16.mxu0 0
      %834 = vmatpush1.bf16.msra.mxu0 0
      %835 = vmatprep.subr.bf16.mxu0 0
      %836 = vmatpush1.bf16.msra.mxu0 0
      %837 = vmatprep.subr.bf16.mxu0 0
      %838 = vmatpush1.bf16.msra.mxu0 0
      %839 = vmatprep.subr.bf16.mxu0 0
      %840 = vmatpush1.bf16.msra.mxu0 0
      %841 = vmatprep.subr.bf16.mxu0 0
      %842 = vmatpush1.bf16.msra.mxu0 0
      %843 = vmatprep.subr.bf16.mxu0 0
      %844 = vmatpush1.bf16.msra.mxu0 0
      %845 = vmatprep.subr.bf16.mxu0 0
      %846 = vmatpush1.bf16.msra.mxu0 0
      %847 = vmatprep.subr.bf16.mxu0 0
      %848 = vmatpush1.bf16.msra.mxu0 0
      %849 = vmatprep.subr.bf16.mxu0 0
      %850 = vmatpush1.bf16.msra.mxu0 0
      %851 = vmatprep.subr.bf16.mxu0 0
      %852 = vmatpush1.bf16.msra.mxu0 0
      %853 = vmatprep.subr.bf16.mxu0 0
      %854 = vmatpush1.bf16.msra.mxu0 0
      %855 = vmatprep.subr.bf16.mxu0 0
      %856 = vmatpush1.bf16.msra.mxu0 0
      %857 = vmatprep.subr.bf16.mxu0 0
      %858 = vmatpush1.bf16.msra.mxu0 0
      %859 = vmatprep.subr.bf16.mxu0 0
      %860 = vmatpush1.bf16.msra.mxu0 0
      %861 = vmatprep.mubr.bf16.mxu0 0
      %862 = vmatmul.mubr.bf16.gmra.mrb[0].mxu0 %v824
      %v863 = vpop.f32.mrb[0].mxu0
      %v864 = vadd.f32 %v618, %v863
      %v865 = vpop.f32.mrb[0].mxu0
      %v866 = vpop.f32.mrb[0].mxu0
      %v867 = vpop.f32.mrb[0].mxu0
      %868 = vdwg.mxu0
      %v869 = vsel %vm683, %v726, -inf
      %870 = vmax.xlane.f32.xlu0 %v869
      %v871 = vpop.xlane.xlu0 %870
      %v872 = vsel %vm683, %v772, -inf
      %873 = vmax.xlane.f32.xlu0 %v872
      %v874 = vpop.xlane.xlu0 %873
      %v875 = vsel %vm683, %v818, -inf
      %876 = vmax.xlane.f32.xlu0 %v875
      %v877 = vpop.xlane.xlu0 %876
      %v878 = vsel %vm683, %v864, -inf
      %879 = vmax.xlane.f32.xlu0 %v878
      %v880 = vpop.xlane.xlu0 %879
      %v881 = vsub.f32 %v726, %v871
      %v882 = vsub.f32 %v772, %v874
      %v883 = vsub.f32 %v818, %v877
      %v884 = vsub.f32 %v864, %v880
      %v885 = vmul.f32 %v881, 1.442695
      %v886 = vpow.pop %v885
      %v887 = vmul.f32 %v882, 1.442695
      %v888 = vpow.pop %v887
      %v889 = vmul.f32 %v883, 1.442695
      %v890 = vpow.pop %v889
      %v891 = vmul.f32 %v884, 1.442695
      %v892 = vpow.pop %v891
      %v893 = vsel %vm683, %v886, 0.0
      %894 = vadd.xlane.f32.xlu0 %v893
      %v895 = vpop.xlane.xlu0 %894
      %v896 = vsel %vm683, %v888, 0.0
      %897 = vadd.xlane.f32.xlu0 %v896
      %v898 = vpop.xlane.xlu0 %897
      %v899 = vsel %vm683, %v890, 0.0
      %900 = vadd.xlane.f32.xlu0 %v899
      %v901 = vpop.xlane.xlu0 %900
      %v902 = vsel %vm683, %v892, 0.0
      %903 = vadd.xlane.f32.xlu0 %v902
      %v904 = vpop.xlane.xlu0 %903
      %v905 = vrcp.pop %v895
      %v906 = vmul.f32 %v886, %v905
      %v907 = vrcp.pop %v898
      %v908 = vmul.f32 %v888, %v907
      %v909 = vrcp.pop %v901
      %v910 = vmul.f32 %v890, %v909
      %v911 = vrcp.pop %v904
      %v912 = vmul.f32 %v892, %v911
      %v913 = vpack.c.bf16 %v906, %v906
      %v914 = vpack.c.bf16 %v908, %v908
      %v915 = vpack.c.bf16 %v910, %v910
      %v916 = vpack.c.bf16 %v912, %v912
      %917 = vrot.lane.b32.xlu0 %v583, 96
      %v918 = vpop.permute.xlu0 %917
      %919 = vrot.lane.b32.xlu0 %v593, 96
      %v920 = vpop.permute.xlu0 %919
      %921 = vrot.lane.b32.xlu0 %v596, 96
      %v922 = vpop.permute.xlu0 %921
      %923 = vrot.lane.b32.xlu0 %v599, 96
      %v924 = vpop.permute.xlu0 %923
      %929 = vxpose.xlu0.c.b16.start [1/8] %v918, 128
      %930 = vxpose.xlu0.c.b16.cont [2/8] 0, 128
      %931 = vxpose.xlu0.c.b16.cont [3/8] 0, 128
      %932 = vxpose.xlu0.c.b16.cont [4/8] 0, 128
      %933 = vxpose.xlu0.c.b16.cont [5/8] 0, 128
      %934 = vxpose.xlu0.c.b16.cont [6/8] 0, 128
      %935 = vxpose.xlu0.c.b16.cont [7/8] 0, 128
      %936 = vxpose.xlu0.c.b16.end [8/8] 0, 128
      %v937 = vpop.trf.xlu0
      %v938 = vpop.trf.xlu0
      %v939 = vpop.trf.xlu0
      %v940 = vpop.trf.xlu0
      %v941 = vpop.trf.xlu0
      %v942 = vpop.trf.xlu0
      %v943 = vpop.trf.xlu0
      %v944 = vpop.trf.xlu0
      %945 = vxpose.xlu0.c.b16.start [1/8] %v920, 128
      %946 = vxpose.xlu0.c.b16.cont [2/8] 0, 128
      %947 = vxpose.xlu0.c.b16.cont [3/8] 0, 128
      %948 = vxpose.xlu0.c.b16.cont [4/8] 0, 128
      %949 = vxpose.xlu0.c.b16.cont [5/8] 0, 128
      %950 = vxpose.xlu0.c.b16.cont [6/8] 0, 128
      %951 = vxpose.xlu0.c.b16.cont [7/8] 0, 128
      %952 = vxpose.xlu0.c.b16.end [8/8] 0, 128
      %v953 = vpop.trf.xlu0
      %v954 = vpop.trf.xlu0
      %v955 = vpop.trf.xlu0
      %v956 = vpop.trf.xlu0
      %v957 = vpop.trf.xlu0
      %v958 = vpop.trf.xlu0
      %v959 = vpop.trf.xlu0
      %v960 = vpop.trf.xlu0
      %961 = vxpose.xlu0.c.b16.start [1/8] %v922, 128
      %962 = vxpose.xlu0.c.b16.cont [2/8] 0, 128
      %963 = vxpose.xlu0.c.b16.cont [3/8] 0, 128
      %964 = vxpose.xlu0.c.b16.cont [4/8] 0, 128
      %965 = vxpose.xlu0.c.b16.cont [5/8] 0, 128
      %966 = vxpose.xlu0.c.b16.cont [6/8] 0, 128
      %967 = vxpose.xlu0.c.b16.cont [7/8] 0, 128
      %968 = vxpose.xlu0.c.b16.end [8/8] 0, 128
      %v969 = vpop.trf.xlu0
      %v970 = vpop.trf.xlu0
      %v971 = vpop.trf.xlu0
      %v972 = vpop.trf.xlu0
      %v973 = vpop.trf.xlu0
      %v974 = vpop.trf.xlu0
      %v975 = vpop.trf.xlu0
      %v976 = vpop.trf.xlu0
      %977 = vxpose.xlu0.c.b16.start [1/8] %v924, 128
      %978 = vxpose.xlu0.c.b16.cont [2/8] 0, 128
      %979 = vxpose.xlu0.c.b16.cont [3/8] 0, 128
      %980 = vxpose.xlu0.c.b16.cont [4/8] 0, 128
      %981 = vxpose.xlu0.c.b16.cont [5/8] 0, 128
      %982 = vxpose.xlu0.c.b16.cont [6/8] 0, 128
      %983 = vxpose.xlu0.c.b16.cont [7/8] 0, 128
      %984 = vxpose.xlu0.c.b16.end [8/8] 0, 128
      %v985 = vpop.trf.xlu0
      %v986 = vpop.trf.xlu0
      %v987 = vpop.trf.xlu0
      %v988 = vpop.trf.xlu0
      %v989 = vpop.trf.xlu0
      %v990 = vpop.trf.xlu0
      %v991 = vpop.trf.xlu0
      %v992 = vpop.trf.xlu0
      %v994 = vsel %vm683, %v937, 0
      %v997 = vsel %vm683, %v913, 0
      %999 = vmatprep.subr.bf16.mxu0 0
      %1000 = vmatpush1.bf16.xpose.msra.mxu0 %v997
      %1001 = vmatprep.subr.bf16.mxu0 0
      %1002 = vmatpush1.bf16.xpose.msra.mxu0 0
      %1003 = vmatprep.subr.bf16.mxu0 0
      %1004 = vmatpush1.bf16.xpose.msra.mxu0 0
      %1005 = vmatprep.subr.bf16.mxu0 0
      %1006 = vmatpush1.bf16.xpose.msra.mxu0 0
      %1007 = vmatprep.subr.bf16.mxu0 0
      %1008 = vmatpush1.bf16.xpose.msra.mxu0 0
      %1009 = vmatprep.subr.bf16.mxu0 0
      %1010 = vmatpush1.bf16.xpose.msra.mxu0 0
      %1011 = vmatprep.subr.bf16.mxu0 0
      %1012 = vmatpush1.bf16.xpose.msra.mxu0 0
      %1013 = vmatprep.subr.bf16.mxu0 0
      %1014 = vmatpush1.bf16.xpose.msra.mxu0 0
      %1015 = vmatprep.subr.bf16.mxu0 0
      %1016 = vmatpush1.bf16.xpose.msra.mxu0 0
      %1017 = vmatprep.subr.bf16.mxu0 0
      %1018 = vmatpush1.bf16.xpose.msra.mxu0 0
      %1019 = vmatprep.subr.bf16.mxu0 0
      %1020 = vmatpush1.bf16.xpose.msra.mxu0 0
      %1021 = vmatprep.subr.bf16.mxu0 0
      %1022 = vmatpush1.bf16.xpose.msra.mxu0 0
      %1023 = vmatprep.subr.bf16.mxu0 0
      %1024 = vmatpush1.bf16.xpose.msra.mxu0 0
      %1025 = vmatprep.subr.bf16.mxu0 0
      %1026 = vmatpush1.bf16.xpose.msra.mxu0 0
      %1027 = vmatprep.subr.bf16.mxu0 0
      %1028 = vmatpush1.bf16.xpose.msra.mxu0 0
      %1029 = vmatprep.subr.bf16.mxu0 0
      %1030 = vmatpush1.bf16.xpose.msra.mxu0 0
      %1031 = vmatprep.mubr.bf16.mxu0 0
      %1032 = vmatmul.mubr.bf16.gmra.mrb[0].mxu0 %v994
      %v1033 = vpop.f32.mrb[0].mxu0
      %v1034 = vadd.f32 0.0, %v1033
      %v1035 = vpop.f32.mrb[0].mxu0
      %v1036 = vpop.f32.mrb[0].mxu0
      %v1037 = vpop.f32.mrb[0].mxu0
      %1038 = vdwg.mxu0
      %v1040 = vsel %vm683, %v953, 0
      %v1043 = vsel %vm683, %v914, 0
      %1045 = vmatprep.subr.bf16.mxu0 0
      %1046 = vmatpush1.bf16.xpose.msra.mxu0 %v1043
      %1047 = vmatprep.subr.bf16.mxu0 0
      %1048 = vmatpush1.bf16.xpose.msra.mxu0 0
      %1049 = vmatprep.subr.bf16.mxu0 0
      %1050 = vmatpush1.bf16.xpose.msra.mxu0 0
      %1051 = vmatprep.subr.bf16.mxu0 0
      %1052 = vmatpush1.bf16.xpose.msra.mxu0 0
      %1053 = vmatprep.subr.bf16.mxu0 0
      %1054 = vmatpush1.bf16.xpose.msra.mxu0 0
      %1055 = vmatprep.subr.bf16.mxu0 0
      %1056 = vmatpush1.bf16.xpose.msra.mxu0 0
      %1057 = vmatprep.subr.bf16.mxu0 0
      %1058 = vmatpush1.bf16.xpose.msra.mxu0 0
      %1059 = vmatprep.subr.bf16.mxu0 0
      %1060 = vmatpush1.bf16.xpose.msra.mxu0 0
      %1061 = vmatprep.subr.bf16.mxu0 0
      %1062 = vmatpush1.bf16.xpose.msra.mxu0 0
      %1063 = vmatprep.subr.bf16.mxu0 0
      %1064 = vmatpush1.bf16.xpose.msra.mxu0 0
      %1065 = vmatprep.subr.bf16.mxu0 0
      %1066 = vmatpush1.bf16.xpose.msra.mxu0 0
      %1067 = vmatprep.subr.bf16.mxu0 0
      %1068 = vmatpush1.bf16.xpose.msra.mxu0 0
      %1069 = vmatprep.subr.bf16.mxu0 0
      %1070 = vmatpush1.bf16.xpose.msra.mxu0 0
      %1071 = vmatprep.subr.bf16.mxu0 0
      %1072 = vmatpush1.bf16.xpose.msra.mxu0 0
      %1073 = vmatprep.subr.bf16.mxu0 0
      %1074 = vmatpush1.bf16.xpose.msra.mxu0 0
      %1075 = vmatprep.subr.bf16.mxu0 0
      %1076 = vmatpush1.bf16.xpose.msra.mxu0 0
      %1077 = vmatprep.mubr.bf16.mxu0 0
      %1078 = vmatmul.mubr.bf16.gmra.mrb[0].mxu0 %v1040
      %v1079 = vpop.f32.mrb[0].mxu0
      %v1080 = vadd.f32 0.0, %v1079
      %v1081 = vpop.f32.mrb[0].mxu0
      %v1082 = vpop.f32.mrb[0].mxu0
      %v1083 = vpop.f32.mrb[0].mxu0
      %1084 = vdwg.mxu0
      %v1086 = vsel %vm683, %v969, 0
      %v1089 = vsel %vm683, %v915, 0
      %1091 = vmatprep.subr.bf16.mxu0 0
      %1092 = vmatpush1.bf16.xpose.msra.mxu0 %v1089
      %1093 = vmatprep.subr.bf16.mxu0 0
      %1094 = vmatpush1.bf16.xpose.msra.mxu0 0
      %1095 = vmatprep.subr.bf16.mxu0 0
      %1096 = vmatpush1.bf16.xpose.msra.mxu0 0
      %1097 = vmatprep.subr.bf16.mxu0 0
      %1098 = vmatpush1.bf16.xpose.msra.mxu0 0
      %1099 = vmatprep.subr.bf16.mxu0 0
      %1100 = vmatpush1.bf16.xpose.msra.mxu0 0
      %1101 = vmatprep.subr.bf16.mxu0 0
      %1102 = vmatpush1.bf16.xpose.msra.mxu0 0
      %1103 = vmatprep.subr.bf16.mxu0 0
      %1104 = vmatpush1.bf16.xpose.msra.mxu0 0
      %1105 = vmatprep.subr.bf16.mxu0 0
      %1106 = vmatpush1.bf16.xpose.msra.mxu0 0
      %1107 = vmatprep.subr.bf16.mxu0 0
      %1108 = vmatpush1.bf16.xpose.msra.mxu0 0
      %1109 = vmatprep.subr.bf16.mxu0 0
      %1110 = vmatpush1.bf16.xpose.msra.mxu0 0
      %1111 = vmatprep.subr.bf16.mxu0 0
      %1112 = vmatpush1.bf16.xpose.msra.mxu0 0
      %1113 = vmatprep.subr.bf16.mxu0 0
      %1114 = vmatpush1.bf16.xpose.msra.mxu0 0
      %1115 = vmatprep.subr.bf16.mxu0 0
      %1116 = vmatpush1.bf16.xpose.msra.mxu0 0
      %1117 = vmatprep.subr.bf16.mxu0 0
      %1118 = vmatpush1.bf16.xpose.msra.mxu0 0
      %1119 = vmatprep.subr.bf16.mxu0 0
      %1120 = vmatpush1.bf16.xpose.msra.mxu0 0
      %1121 = vmatprep.subr.bf16.mxu0 0
      %1122 = vmatpush1.bf16.xpose.msra.mxu0 0
      %1123 = vmatprep.mubr.bf16.mxu0 0
      %1124 = vmatmul.mubr.bf16.gmra.mrb[0].mxu0 %v1086
      %v1125 = vpop.f32.mrb[0].mxu0
      %v1126 = vadd.f32 0.0, %v1125
      %v1127 = vpop.f32.mrb[0].mxu0
      %v1128 = vpop.f32.mrb[0].mxu0
      %v1129 = vpop.f32.mrb[0].mxu0
      %1130 = vdwg.mxu0
      %v1132 = vsel %vm683, %v985, 0
      %v1135 = vsel %vm683, %v916, 0
      %1137 = vmatprep.subr.bf16.mxu0 0
      %1138 = vmatpush1.bf16.xpose.msra.mxu0 %v1135
      %1139 = vmatprep.subr.bf16.mxu0 0
      %1140 = vmatpush1.bf16.xpose.msra.mxu0 0
      %1141 = vmatprep.subr.bf16.mxu0 0
      %1142 = vmatpush1.bf16.xpose.msra.mxu0 0
      %1143 = vmatprep.subr.bf16.mxu0 0
      %1144 = vmatpush1.bf16.xpose.msra.mxu0 0
      %1145 = vmatprep.subr.bf16.mxu0 0
      %1146 = vmatpush1.bf16.xpose.msra.mxu0 0
      %1147 = vmatprep.subr.bf16.mxu0 0
      %1148 = vmatpush1.bf16.xpose.msra.mxu0 0
      %1149 = vmatprep.subr.bf16.mxu0 0
      %1150 = vmatpush1.bf16.xpose.msra.mxu0 0
      %1151 = vmatprep.subr.bf16.mxu0 0
      %1152 = vmatpush1.bf16.xpose.msra.mxu0 0
      %1153 = vmatprep.subr.bf16.mxu0 0
      %1154 = vmatpush1.bf16.xpose.msra.mxu0 0
      %1155 = vmatprep.subr.bf16.mxu0 0
      %1156 = vmatpush1.bf16.xpose.msra.mxu0 0
      %1157 = vmatprep.subr.bf16.mxu0 0
      %1158 = vmatpush1.bf16.xpose.msra.mxu0 0
      %1159 = vmatprep.subr.bf16.mxu0 0
      %1160 = vmatpush1.bf16.xpose.msra.mxu0 0
      %1161 = vmatprep.subr.bf16.mxu0 0
      %1162 = vmatpush1.bf16.xpose.msra.mxu0 0
      %1163 = vmatprep.subr.bf16.mxu0 0
      %1164 = vmatpush1.bf16.xpose.msra.mxu0 0
      %1165 = vmatprep.subr.bf16.mxu0 0
      %1166 = vmatpush1.bf16.xpose.msra.mxu0 0
      %1167 = vmatprep.subr.bf16.mxu0 0
      %1168 = vmatpush1.bf16.xpose.msra.mxu0 0
      %1169 = vmatprep.mubr.bf16.mxu0 0
      %1170 = vmatmul.mubr.bf16.gmra.mrb[0].mxu0 %v1132
      %v1171 = vpop.f32.mrb[0].mxu0
      %v1172 = vadd.f32 0.0, %v1171
      %v1173 = vpop.f32.mrb[0].mxu0
      %v1174 = vpop.f32.mrb[0].mxu0
      %v1175 = vpop.f32.mrb[0].mxu0
      %1176 = vdwg.mxu0
      %1177 = vxpose.xlu0.b32.start [1/16] %v1034, 128
      %1178 = vxpose.xlu0.b32.cont [2/16] 0.0, 128
      %1179 = vxpose.xlu0.b32.cont [3/16] 0.0, 128
      %1180 = vxpose.xlu0.b32.cont [4/16] 0.0, 128
      %1181 = vxpose.xlu0.b32.cont [5/16] 0.0, 128
      %1182 = vxpose.xlu0.b32.cont [6/16] 0.0, 128
      %1183 = vxpose.xlu0.b32.cont [7/16] 0.0, 128
      %1184 = vxpose.xlu0.b32.cont [8/16] 0.0, 128
      %1185 = vxpose.xlu0.b32.cont [9/16] 0.0, 128
      %1186 = vxpose.xlu0.b32.cont [10/16] 0.0, 128
      %1187 = vxpose.xlu0.b32.cont [11/16] 0.0, 128
      %1188 = vxpose.xlu0.b32.cont [12/16] 0.0, 128
      %1189 = vxpose.xlu0.b32.cont [13/16] 0.0, 128
      %1190 = vxpose.xlu0.b32.cont [14/16] 0.0, 128
      %1191 = vxpose.xlu0.b32.cont [15/16] 0.0, 128
      %1192 = vxpose.xlu0.b32.end [16/16] 0.0, 128
      %v1193 = vpop.trf.xlu0
      %v1194 = vpop.trf.xlu0
      %v1195 = vpop.trf.xlu0
      %v1196 = vpop.trf.xlu0
      %v1197 = vpop.trf.xlu0
      %v1198 = vpop.trf.xlu0
      %v1199 = vpop.trf.xlu0
      %v1200 = vpop.trf.xlu0
      %v1201 = vpop.trf.xlu0
      %v1202 = vpop.trf.xlu0
      %v1203 = vpop.trf.xlu0
      %v1204 = vpop.trf.xlu0
      %v1205 = vpop.trf.xlu0
      %v1206 = vpop.trf.xlu0
      %v1207 = vpop.trf.xlu0
      %v1208 = vpop.trf.xlu0
      %1209 = vxpose.xlu0.b32.start [1/16] %v1080, 128
      %1210 = vxpose.xlu0.b32.cont [2/16] 0.0, 128
      %1211 = vxpose.xlu0.b32.cont [3/16] 0.0, 128
      %1212 = vxpose.xlu0.b32.cont [4/16] 0.0, 128
      %1213 = vxpose.xlu0.b32.cont [5/16] 0.0, 128
      %1214 = vxpose.xlu0.b32.cont [6/16] 0.0, 128
      %1215 = vxpose.xlu0.b32.cont [7/16] 0.0, 128
      %1216 = vxpose.xlu0.b32.cont [8/16] 0.0, 128
      %1217 = vxpose.xlu0.b32.cont [9/16] 0.0, 128
      %1218 = vxpose.xlu0.b32.cont [10/16] 0.0, 128
      %1219 = vxpose.xlu0.b32.cont [11/16] 0.0, 128
      %1220 = vxpose.xlu0.b32.cont [12/16] 0.0, 128
      %1221 = vxpose.xlu0.b32.cont [13/16] 0.0, 128
      %1222 = vxpose.xlu0.b32.cont [14/16] 0.0, 128
      %1223 = vxpose.xlu0.b32.cont [15/16] 0.0, 128
      %1224 = vxpose.xlu0.b32.end [16/16] 0.0, 128
      %v1225 = vpop.trf.xlu0
      %v1226 = vpop.trf.xlu0
      %v1227 = vpop.trf.xlu0
      %v1228 = vpop.trf.xlu0
      %v1229 = vpop.trf.xlu0
      %v1230 = vpop.trf.xlu0
      %v1231 = vpop.trf.xlu0
      %v1232 = vpop.trf.xlu0
      %v1233 = vpop.trf.xlu0
      %v1234 = vpop.trf.xlu0
      %v1235 = vpop.trf.xlu0
      %v1236 = vpop.trf.xlu0
      %v1237 = vpop.trf.xlu0
      %v1238 = vpop.trf.xlu0
      %v1239 = vpop.trf.xlu0
      %v1240 = vpop.trf.xlu0
      %1241 = vxpose.xlu0.b32.start [1/16] %v1126, 128
      %1242 = vxpose.xlu0.b32.cont [2/16] 0.0, 128
      %1243 = vxpose.xlu0.b32.cont [3/16] 0.0, 128
      %1244 = vxpose.xlu0.b32.cont [4/16] 0.0, 128
      %1245 = vxpose.xlu0.b32.cont [5/16] 0.0, 128
      %1246 = vxpose.xlu0.b32.cont [6/16] 0.0, 128
      %1247 = vxpose.xlu0.b32.cont [7/16] 0.0, 128
      %1248 = vxpose.xlu0.b32.cont [8/16] 0.0, 128
      %1249 = vxpose.xlu0.b32.cont [9/16] 0.0, 128
      %1250 = vxpose.xlu0.b32.cont [10/16] 0.0, 128
      %1251 = vxpose.xlu0.b32.cont [11/16] 0.0, 128
      %1252 = vxpose.xlu0.b32.cont [12/16] 0.0, 128
      %1253 = vxpose.xlu0.b32.cont [13/16] 0.0, 128
      %1254 = vxpose.xlu0.b32.cont [14/16] 0.0, 128
      %1255 = vxpose.xlu0.b32.cont [15/16] 0.0, 128
      %1256 = vxpose.xlu0.b32.end [16/16] 0.0, 128
      %v1257 = vpop.trf.xlu0
      %v1258 = vpop.trf.xlu0
      %v1259 = vpop.trf.xlu0
      %v1260 = vpop.trf.xlu0
      %v1261 = vpop.trf.xlu0
      %v1262 = vpop.trf.xlu0
      %v1263 = vpop.trf.xlu0
      %v1264 = vpop.trf.xlu0
      %v1265 = vpop.trf.xlu0
      %v1266 = vpop.trf.xlu0
      %v1267 = vpop.trf.xlu0
      %v1268 = vpop.trf.xlu0
      %v1269 = vpop.trf.xlu0
      %v1270 = vpop.trf.xlu0
      %v1271 = vpop.trf.xlu0
      %v1272 = vpop.trf.xlu0
      %1273 = vxpose.xlu0.b32.start [1/16] %v1172, 128
      %1274 = vxpose.xlu0.b32.cont [2/16] 0.0, 128
      %1275 = vxpose.xlu0.b32.cont [3/16] 0.0, 128
      %1276 = vxpose.xlu0.b32.cont [4/16] 0.0, 128
      %1277 = vxpose.xlu0.b32.cont [5/16] 0.0, 128
      %1278 = vxpose.xlu0.b32.cont [6/16] 0.0, 128
      %1279 = vxpose.xlu0.b32.cont [7/16] 0.0, 128
      %1280 = vxpose.xlu0.b32.cont [8/16] 0.0, 128
      %1281 = vxpose.xlu0.b32.cont [9/16] 0.0, 128
      %1282 = vxpose.xlu0.b32.cont [10/16] 0.0, 128
      %1283 = vxpose.xlu0.b32.cont [11/16] 0.0, 128
      %1284 = vxpose.xlu0.b32.cont [12/16] 0.0, 128
      %1285 = vxpose.xlu0.b32.cont [13/16] 0.0, 128
      %1286 = vxpose.xlu0.b32.cont [14/16] 0.0, 128
      %1287 = vxpose.xlu0.b32.cont [15/16] 0.0, 128
      %1288 = vxpose.xlu0.b32.end [16/16] 0.0, 128
      %v1289 = vpop.trf.xlu0
      %v1290 = vpop.trf.xlu0
      %v1291 = vpop.trf.xlu0
      %v1292 = vpop.trf.xlu0
      %v1293 = vpop.trf.xlu0
      %v1294 = vpop.trf.xlu0
      %v1295 = vpop.trf.xlu0
      %v1296 = vpop.trf.xlu0
      %v1297 = vpop.trf.xlu0
      %v1298 = vpop.trf.xlu0
      %v1299 = vpop.trf.xlu0
      %v1300 = vpop.trf.xlu0
      %v1301 = vpop.trf.xlu0
      %v1302 = vpop.trf.xlu0
      %v1303 = vpop.trf.xlu0
      %v1304 = vpop.trf.xlu0
      %v1305 = vcombine.low %v1193, %v1257
      %v1306 = vcombine.high %v1193, %v1257
      %v1308 = vunpack.c.l.s4 1983009808
      %v1309 = vunpack.c.0.s8 %v1308
      %v1310 = vlaneseq
      %v1311 = vshrl.u32 %v1310, 7
      %v1312 = vsub.s32 %v1309, %v1311
      %v1313 = vrot.slane %v1305, %v1312
      %v1315 = vunpack.c.l.s4 1983009808
      %v1316 = vunpack.c.0.s8 %v1315
      %v1317 = vlaneseq
      %v1318 = vshrl.u32 %v1317, 7
      %v1319 = vsub.s32 %v1316, %v1318
      %v1320 = vrot.slane %v1306, %v1319
      %v1321 = vcombine.low %v1225, %v1289
      %v1322 = vcombine.high %v1225, %v1289
      %v1324 = vunpack.c.l.s4 1983009808
      %v1325 = vunpack.c.0.s8 %v1324
      %v1326 = vlaneseq
      %v1327 = vshrl.u32 %v1326, 7
      %v1328 = vsub.s32 %v1325, %v1327
      %v1329 = vrot.slane %v1321, %v1328
      %v1331 = vunpack.c.l.s4 1983009808
      %v1332 = vunpack.c.0.s8 %v1331
      %v1333 = vlaneseq
      %v1334 = vshrl.u32 %v1333, 7
      %v1335 = vsub.s32 %v1332, %v1334
      %v1336 = vrot.slane %v1322, %v1335
      %v1337 = vcombine.low %v1313, %v1329
      %v1338 = vcombine.high %v1313, %v1329
      %v1340 = vunpack.c.l.s4 1934713408
      %v1341 = vunpack.c.0.s8 %v1340
      %v1342 = vlaneseq
      %v1343 = vshrl.u32 %v1342, 7
      %v1344 = vsub.s32 %v1341, %v1343
      %v1345 = vrot.slane %v1337, %v1344
      %v1347 = vunpack.c.l.s4 1934713408
      %v1348 = vunpack.c.0.s8 %v1347
      %v1349 = vlaneseq
      %v1350 = vshrl.u32 %v1349, 7
      %v1351 = vsub.s32 %v1348, %v1350
      %v1352 = vrot.slane %v1338, %v1351
      %v1353 = vcombine.low %v1320, %v1336
      %v1354 = vcombine.high %v1320, %v1336
      %v1356 = vunpack.c.l.s4 1934713408
      %v1357 = vunpack.c.0.s8 %v1356
      %v1358 = vlaneseq
      %v1359 = vshrl.u32 %v1358, 7
      %v1360 = vsub.s32 %v1357, %v1359
      %v1361 = vrot.slane %v1353, %v1360
      %v1363 = vunpack.c.l.s4 1934713408
      %v1364 = vunpack.c.0.s8 %v1363
      %v1365 = vlaneseq
      %v1366 = vshrl.u32 %v1365, 7
      %v1367 = vsub.s32 %v1364, %v1366
      %v1368 = vrot.slane %v1354, %v1367
      %v1369 = vcombine.high %v1345, 0.0
      %v1370 = vcombine.high %v1352, 0.0
      %v1371 = vcombine.high %v1361, 0.0
      %v1372 = vcombine.high %v1368, 0.0
      %v1373 = vcombine.low %v1345, %v1352
      %v1375 = vunpack.c.l.s4 1983009808
      %v1376 = vunpack.c.0.s8 %v1375
      %v1377 = vlaneseq
      %v1378 = vshrl.u32 %v1377, 7
      %v1379 = vsub.s32 %v1376, %v1378
      %v1380 = vrot.slane %v1373, %v1379
      %v1381 = vcombine.low %v1369, %v1370
      %v1383 = vunpack.c.l.s4 1983009808
      %v1384 = vunpack.c.0.s8 %v1383
      %v1385 = vlaneseq
      %v1386 = vshrl.u32 %v1385, 7
      %v1387 = vsub.s32 %v1384, %v1386
      %v1388 = vrot.slane %v1381, %v1387
      %v1389 = vcombine.low %v1361, %v1368
      %v1391 = vunpack.c.l.s4 1983009808
      %v1392 = vunpack.c.0.s8 %v1391
      %v1393 = vlaneseq
      %v1394 = vshrl.u32 %v1393, 7
      %v1395 = vsub.s32 %v1392, %v1394
      %v1396 = vrot.slane %v1389, %v1395
      %v1397 = vcombine.low %v1371, %v1372
      %v1399 = vunpack.c.l.s4 1983009808
      %v1400 = vunpack.c.0.s8 %v1399
      %v1401 = vlaneseq
      %v1402 = vshrl.u32 %v1401, 7
      %v1403 = vsub.s32 %v1400, %v1402
      %v1404 = vrot.slane %v1397, %v1403
      %v1405 = vcombine.low %v1380, %v1388
      %v1406 = vcombine.high %v1380, %v1388
      %v1408 = vunpack.c.l.s4 1934713408
      %v1409 = vunpack.c.0.s8 %v1408
      %v1410 = vlaneseq
      %v1411 = vshrl.u32 %v1410, 7
      %v1412 = vsub.s32 %v1409, %v1411
      %v1413 = vrot.slane %v1405, %v1412
      %v1415 = vunpack.c.l.s4 1934713408
      %v1416 = vunpack.c.0.s8 %v1415
      %v1417 = vlaneseq
      %v1418 = vshrl.u32 %v1417, 7
      %v1419 = vsub.s32 %v1416, %v1418
      %v1420 = vrot.slane %v1406, %v1419
      %v1421 = vcombine.low %v1396, %v1404
      %v1422 = vcombine.high %v1396, %v1404
      %v1424 = vunpack.c.l.s4 1934713408
      %v1425 = vunpack.c.0.s8 %v1424
      %v1426 = vlaneseq
      %v1427 = vshrl.u32 %v1426, 7
      %v1428 = vsub.s32 %v1425, %v1427
      %v1429 = vrot.slane %v1421, %v1428
      %v1431 = vunpack.c.l.s4 1934713408
      %v1432 = vunpack.c.0.s8 %v1431
      %v1433 = vlaneseq
      %v1434 = vshrl.u32 %v1433, 7
      %v1435 = vsub.s32 %v1432, %v1434
      %v1436 = vrot.slane %v1422, %v1435
      %v1437 = vcombine.low %v1413, %v1429
      %v1438 = vcombine.high %v1413, %v1429
      %v1439 = vcombine.low %v1420, %v1436
      %v1440 = vcombine.high %v1420, %v1436
      %1442 = vrot.lane.b32.xlu0 %v1438, 8
      %v1443 = vpop.permute.xlu0 %1442
      %1446 = vrot.lane.b32.xlu0 %v1439, 16
      %v1447 = vpop.permute.xlu0 %1446
      %1450 = vrot.lane.b32.xlu0 %v1440, 24
      %v1451 = vpop.permute.xlu0 %1450
      %v1453 = vsel %vm683, %v1437, %v1443
      %vm1454 = vcmask 130048
      %v1455 = vsel %vm1454, %v1453, %v1447
      %vm1456 = vcmask 195584
      %v1457 = vsel %vm1456, %v1455, %v1451
      %v1458 = vpack.c.bf16 %v1457, %v1457
      %v1459 = vld [vmem:[%s7] sm:$0xf]
      %v1460 = vld [vmem:[%s7 + $0x4] sm:$0xf]
      %v1461 = vld [vmem:[%s7 + $0x8] sm:$0xf]
      %v1462 = vld [vmem:[%s7 + $0xc] sm:$0xf]
      %v1467 = vunpack.c.l.b16 %v1459
      %v1468 = vunpack.c.l.b16 %v1460
      %v1469 = vunpack.c.l.b16 %v1461
      %v1470 = vunpack.c.l.b16 %v1462
      %v1471 = vpack.c.b16 %v1468, %v1467
      %v1472 = vpack.c.b16 %v1470, %v1469
      %v1476 = vsel %vm471, %v1458, 0
      %1478 = vmatprep.subr.bf16.mxu0 0
      %1479 = vmatpush1.bf16.msra.mxu0 %v1471
      %1480 = vmatprep.subr.bf16.mxu0 0
      %1481 = vmatpush1.bf16.msra.mxu0 %v1472
      %1482 = vmatprep.subr.bf16.mxu0 0
      %1483 = vmatpush1.bf16.msra.mxu0 0
      %1484 = vmatprep.subr.bf16.mxu0 0
      %1485 = vmatpush1.bf16.msra.mxu0 0
      %1486 = vmatprep.subr.bf16.mxu0 0
      %1487 = vmatpush1.bf16.msra.mxu0 0
      %1488 = vmatprep.subr.bf16.mxu0 0
      %1489 = vmatpush1.bf16.msra.mxu0 0
      %1490 = vmatprep.subr.bf16.mxu0 0
      %1491 = vmatpush1.bf16.msra.mxu0 0
      %1492 = vmatprep.subr.bf16.mxu0 0
      %1493 = vmatpush1.bf16.msra.mxu0 0
      %1494 = vmatprep.subr.bf16.mxu0 0
      %1495 = vmatpush1.bf16.msra.mxu0 0
      %1496 = vmatprep.subr.bf16.mxu0 0
      %1497 = vmatpush1.bf16.msra.mxu0 0
      %1498 = vmatprep.subr.bf16.mxu0 0
      %1499 = vmatpush1.bf16.msra.mxu0 0
      %1500 = vmatprep.subr.bf16.mxu0 0
      %1501 = vmatpush1.bf16.msra.mxu0 0
      %1502 = vmatprep.subr.bf16.mxu0 0
      %1503 = vmatpush1.bf16.msra.mxu0 0
      %1504 = vmatprep.subr.bf16.mxu0 0
      %1505 = vmatpush1.bf16.msra.mxu0 0
      %1506 = vmatprep.subr.bf16.mxu0 0
      %1507 = vmatpush1.bf16.msra.mxu0 0
      %1508 = vmatprep.subr.bf16.mxu0 0
      %1509 = vmatpush1.bf16.msra.mxu0 0
      %1510 = vmatprep.mubr.bf16.mxu0 0
      %1511 = vmatmul.mubr.bf16.gmra.mrb[0].mxu0 %v1476
      %v1512 = vpop.f32.mrb[0].mxu0
      %v1513 = vadd.f32 0.0, %v1512
      %v1514 = vpop.f32.mrb[0].mxu0
      %v1515 = vpop.f32.mrb[0].mxu0
      %v1516 = vpop.f32.mrb[0].mxu0
      %1517 = vdwg.mxu0
      %v1518 = vadd.f32 %v445, %v1513
      %v1519 = vld [vmem:[%s8] sm:$0x1]
      %v1521 = vlaneseq
      %v1522 = vshrl.u32 %v1521, 7
      %v1523 = vsub.s32 0, %v1522
      %v1524 = vrot.slane %v1519, %v1523
      %v1526 = vadd.f32 %v1518, %v1524
      %v1527 = vld [vmem:[%s9] sm:$0x1]
      %v1528 = vld [vmem:[%s10] sm:$0x1]
      %v1529 = vsel %vm471, %v1526, 0.0
      %1530 = vadd.xlane.f32.xlu0 %v1529
      %v1531 = vpop.xlane.xlu0 %1530
      %v1532 = vrcp.pop 32.0
      %v1533 = vmul.f32 %v1531, %v1532
      %v1534 = vsub.f32 %v1526, %v1533
      %v1535 = vmul.f32 %v1534, %v1534
      %v1536 = vsel %vm471, %v1535, 0.0
      %1537 = vadd.xlane.f32.xlu0 %v1536
      %v1538 = vpop.xlane.xlu0 %1537
      %v1539 = vmul.f32 %v1538, %v1532
      %v1540 = vadd.f32 %v1539, 1e-05
      %v1541 = vrsqrt.pop %v1540
      %v1542 = vmul.f32 %v1534, %v1541
      %v1544 = vlaneseq
      %v1545 = vshrl.u32 %v1544, 7
      %v1546 = vsub.s32 0, %v1545
      %v1547 = vrot.slane %v1527, %v1546
      %v1549 = vmul.f32 %v1542, %v1547
      %v1551 = vlaneseq
      %v1552 = vshrl.u32 %v1551, 7
      %v1553 = vsub.s32 0, %v1552
      %v1554 = vrot.slane %v1528, %v1553
      %v1556 = vadd.f32 %v1549, %v1554
      %1557 = vst.msk [vmem:[%s443] sm:$0xff] %vm471, %v1556
      %p1558 = scmp.lt.s32.totalorder %s26, 1
      %s1559 = scalar_select %p1558, %s26, 1
      %p1560 = scmp.lt.s32.totalorder %s27, 0
      %s1561 = scalar_select %p1560, %s27, 0
      %s1562 = sadd.s32 %s1561, %s1559
      %s1563 = smul.addr %s1562, 8
      %s1564 = scalar_lea.vmem %s11, %s1563
      // Predicated region
      $region65: #{transformer_adapter2_forward.8} parent=63 // pred_check
        %p1565 = pneg %p302
      $region66: #{transformer_adapter2_forward.8} parent=63 // pred_check_branch
        %1567 = sbr.rel (%p1565) target = $region68
      $region67: #{transformer_adapter2_forward.8} parent=63 // pred_region
        _
      $region68: #{transformer_adapter2_forward.8} parent=63 // pred_fallthru
        _
    $region64: #{transformer_adapter2_forward.8} parent=5 // pred_fallthru
      _
    %p1568 = scmp.le.s32.totalorder 2, %s17
    // Predicated region
    $region69: #{transformer_adapter2_forward.8} parent=5 // pred_check
      %p1569 = pneg %p1568
    $region70: #{transformer_adapter2_forward.8} parent=5 // pred_check_branch
      %1571 = sbr.rel (%p1569) target = $region72
    $region71: #{transformer_adapter2_forward.8} parent=5 // pred_region
      %s1572 = ssub.s32 %s17, 2
      // Predicated region
      $region73: #{transformer_adapter2_forward.8} parent=71 // pred_check
        %p1573 = pneg %p308
      $region74: #{transformer_adapter2_forward.8} parent=71 // pred_check_branch
        %1575 = sbr.rel (%p1573) target = $region76
      $region75: #{transformer_adapter2_forward.8} parent=71 // pred_region
        %p1576 = scmp.lt.s32.totalorder %s28, 1
        %s1577 = scalar_select %p1576, %s28, 1
        %p1578 = scmp.lt.s32.totalorder %s29, 0
        %s1579 = scalar_select %p1578, %s29, 0
        %s1580 = sadd.s32 %s1579, %s1577
        %s1581 = smul.addr %s1580, 8
        %s1582 = scalar_lea.vmem %s11, %s1581
      $region76: #{transformer_adapter2_forward.8} parent=71 // pred_fallthru
        _
    $region72: #{transformer_adapter2_forward.8} parent=5 // pred_fallthru
      _
  $region6: #{transformer_adapter2_forward.8} parent=0 // loop_footer
    %s21 = sadd.s32 1, %s17
  $region7: #{transformer_adapter2_forward.8} parent=0 // loop_footer_branch
    %16 = sbr.rel target = $region3
  $region8: #{transformer_adapter2_forward.8} parent=0 // loop_exit
    _

</llo_original>
